<compile_context>
chip_gen: v6e
topology: v6e:2x2x1
jax: 0.10.0
libtpu: 0.0.40
codegen_flags: <defaults>
</compile_context>

<pallas_src>
import math

import jax
import jax.numpy as jnp
import numpy as np
from jax import lax
from jax.experimental import pallas as pl
from jax.experimental.pallas import tpu as pltpu

# ----------------------------- model config ---------------------------------
D_MODEL = 32
NUM_HEADS = 4
D_FF = 64
D_K = D_MODEL // NUM_HEADS
EPS = 1e-6
SCALE = 1.0 / math.sqrt(D_K)
NEG_INF = -1e9


# ------------------------------ Pallas kernel --------------------------------
def _layer_norm(x, gamma, beta):
    # x: (R, D), gamma/beta: (1, D)
    mean = jnp.mean(x, axis=-1, keepdims=True)
    var = jnp.mean(jnp.square(x - mean), axis=-1, keepdims=True)
    return (x - mean) * lax.rsqrt(var + EPS) * gamma + beta


def decoder_layer_kernel(x_ref, enc_ref, tbias_ref, sbias_ref,
                         wqkv_s_ref, bqkv_s_ref, wo_s_ref, bo_s_ref,
                         wq_c_ref, bq_c_ref, wkv_c_ref, bkv_c_ref,
                         wo_c_ref, bo_c_ref,
                         w1_ref, b1_ref, w2_ref, b2_ref, ln_ref,
                         kmask_s_ref, seg_s_ref, kmask_c_ref, seg_c_ref,
                         out_ref, sprobs_ref, cprobs_ref):
    Bb, Tq, _ = tbias_ref.shape                   # batch elements in this block
    Ts = kmask_c_ref.shape[0] // NUM_HEADS        # padded source length
    D = x_ref.shape[-1]

    x = x_ref[...].astype(jnp.float32)            # (Bb*Tq, D)  row-flattened
    enc = enc_ref[...].astype(jnp.float32)        # (Bb*Ts, D)  row-flattened

    def attention(q_all, k_all, v_all, Tk, bias_ref, kmask, seg,
                  wo_ref, bo_ref, probs_ref):
        # q_all: (Bb*Tq, D); k_all/v_all: (Bb*Tk, D)
        # kmask: (H*Tk, D) 0/1 head-column mask; seg: (H*Tk, H*Tk) block-diag ones.
        ctx_parts = []
        for b in range(Bb):                       # static (Bb is 1 or B, tiny)
            qs = slice(b * Tq, (b + 1) * Tq)
            ks = slice(b * Tk, (b + 1) * Tk)
            q_b = q_all[qs]                                        # (Tq, D)
            k_exp = jnp.tile(k_all[ks], (NUM_HEADS, 1)) * kmask    # (H*Tk, D)
            v_exp = jnp.tile(v_all[ks], (NUM_HEADS, 1)) * kmask    # (H*Tk, D)
            # All-head scores in one MXU dot: s[t, h*Tk+s'] = q_h[t] . k_h[s']
            s = lax.dot_general(q_b, k_exp, (((1,), (1,)), ((), ())),
                                preferred_element_type=jnp.float32)
            s = s * SCALE + bias_ref[b]            # precomputed additive mask bias
            # Global row max is a valid per-segment stabilizer (constant per row).
            s = s - jnp.max(s, axis=-1, keepdims=True)
            e = jnp.exp(s)
            # Per-head denominators, broadcast back across each head's lanes.
            denom = jnp.dot(e, seg, preferred_element_type=jnp.float32)
            p = e * pl.reciprocal(denom, approx=False)
            probs_ref[b] = p                       # one lane-packed store per sublayer
            # Head-concat context in one dot: ctx[:, h*Dk:(h+1)*Dk] = p_h @ v_h
            ctx_parts.append(jnp.dot(p, v_exp, preferred_element_type=jnp.float32))
        ctx = ctx_parts[0] if Bb == 1 else jnp.concatenate(ctx_parts, axis=0)
        return jnp.dot(ctx, wo_ref[...], preferred_element_type=jnp.float32) + bo_ref[...]

    # ---- Sublayer 1: masked self-attention (fused QKV projection) ----
    xn = _layer_norm(x, ln_ref[0], ln_ref[1])
    qkv = jnp.dot(xn, wqkv_s_ref[...], preferred_element_type=jnp.float32) + bqkv_s_ref[...]
    x = x + attention(qkv[:, :D], qkv[:, D:2 * D], qkv[:, 2 * D:], Tq,
                      tbias_ref, kmask_s_ref[...], seg_s_ref[...],
                      wo_s_ref, bo_s_ref, sprobs_ref)

    # ---- Sublayer 2: cross-attention over encoder output (fused KV projection) ----
    xn = _layer_norm(x, ln_ref[2], ln_ref[3])
    q = jnp.dot(xn, wq_c_ref[...], preferred_element_type=jnp.float32) + bq_c_ref[...]
    kv = jnp.dot(enc, wkv_c_ref[...], preferred_element_type=jnp.float32) + bkv_c_ref[...]
    x = x + attention(q, kv[:, :D], kv[:, D:], Ts,
                      sbias_ref, kmask_c_ref[...], seg_c_ref[...],
                      wo_c_ref, bo_c_ref, cprobs_ref)

    # ---- Sublayer 3: position-wise feed-forward ----
    xn = _layer_norm(x, ln_ref[4], ln_ref[5])
    h1 = jnp.maximum(
        jnp.dot(xn, w1_ref[...], preferred_element_type=jnp.float32) + b1_ref[...], 0.0)
    ff = jnp.dot(h1, w2_ref[...], preferred_element_type=jnp.float32) + b2_ref[...]
    out_ref[...] = (x + ff).astype(out_ref.dtype)


# ------------------------------ wrapper helpers -------------------------------
def _head_expand_mask(Tk):
    """(H*Tk, D) 0/1 mask: row block h keeps only head h's D_K columns."""
    rows = np.arange(NUM_HEADS * Tk)[:, None] // Tk
    cols = np.arange(D_MODEL)[None, :] // D_K
    return jnp.asarray((rows == cols).astype(np.float32))


def _segment_sum_matrix(Tk):
    """(H*Tk, H*Tk) block-diagonal ones: e @ M broadcasts each head's sum over its lanes."""
    seg = np.arange(NUM_HEADS * Tk) // Tk
    return jnp.asarray((seg[:, None] == seg[None, :]).astype(np.float32))


def _mask_bias(mask, Tq, Tk_pad):
    """Additive attention bias (B, Tq, H*Tk_pad) from a {0,1} mask (B,1,{Tq|1},Tk)."""
    B = mask.shape[0]
    Tk = mask.shape[-1]
    bias = jnp.where(mask == 0, jnp.float32(NEG_INF), jnp.float32(0.0))
    bias = jnp.broadcast_to(bias.reshape(B, -1, Tk), (B, Tq, Tk))
    if Tk_pad > Tk:
        bias = jnp.pad(bias, ((0, 0), (0, 0), (0, Tk_pad - Tk)),
                       constant_values=NEG_INF)
    return jnp.tile(bias, (1, 1, NUM_HEADS))


def _parallel_batch_grid():
    """True if the chip has multiple TensorCores worth a batch-parallel grid (v7x, v4/v5p)."""
    try:
        kind = jax.devices()[0].device_kind.lower()
    except Exception:
        return False
    return any(tag in kind for tag in ("v7", "7x", "v4", "v5p"))


def _default_batch_block(B):
    # Single-TC chips (v5e / v6e): collapse the whole batch into one grid step.
    # Multi-TC chips (v7x): keep a batch-parallel grid so both cores get work.
    return 1 if (_parallel_batch_grid() and B > 1) else B


def decoder_layer(x, enc, src_mask, tgt_mask, params, *, batch_block=None):
    B, Tq, D = x.shape
    Ts = enc.shape[1]
    H = NUM_HEADS
    Ts_pad = ((Ts + 7) // 8) * 8                  # pad source length to a sublane multiple

    if batch_block is None:
        batch_block = _default_batch_block(B)
    Bb = batch_block
    assert B % Bb == 0
    grid = (B // Bb,)

    # --- fused / repacked parameters (wrapper-side layout plumbing) ---
    wsa, bsa = params["wsa"], params["bsa"]
    wca, bca = params["wca"], params["bca"]
    w_qkv_s = jnp.concatenate([wsa[0], wsa[1], wsa[2]], axis=1)   # (D, 3D)
    b_qkv_s = jnp.concatenate([bsa[0], bsa[1], bsa[2]], axis=1)   # (1, 3D)
    w_kv_c = jnp.concatenate([wca[1], wca[2]], axis=1)            # (D, 2D)
    b_kv_c = jnp.concatenate([bca[1], bca[2]], axis=1)            # (1, 2D)

    # --- constant matrices for the all-heads-in-one-matmul formulation ---
    kmask_s = _head_expand_mask(Tq)
    seg_s = _segment_sum_matrix(Tq)
    kmask_c = _head_expand_mask(Ts_pad)
    seg_c = _segment_sum_matrix(Ts_pad)

    # --- activations / masks: row-flatten, pad, precompute additive biases ---
    x2 = x.reshape(B * Tq, D)
    enc_p = jnp.pad(enc, ((0, 0), (0, Ts_pad - Ts), (0, 0))) if Ts_pad > Ts else enc
    enc2 = enc_p.reshape(B * Ts_pad, D)
    tbias = _mask_bias(tgt_mask, Tq, Tq)          # (B, Tq, H*Tq)
    sbias = _mask_bias(src_mask, Tq, Ts_pad)      # (B, Tq, H*Ts_pad)

    rows = lambda T: pl.BlockSpec((Bb * T, D), lambda b: (b, 0))
    bat3 = lambda T, L: pl.BlockSpec((Bb, T, L), lambda b: (b, 0, 0))
    full = lambda shape: pl.BlockSpec(shape, lambda b: (0,) * len(shape))

    grid_spec = pltpu.PrefetchScalarGridSpec(
        num_scalar_prefetch=0,
        grid=grid,
        in_specs=[
            rows(Tq),                              # x (B*Tq, D)
            rows(Ts_pad),                          # enc (B*Ts_pad, D)
            bat3(Tq, H * Tq),                      # tgt additive bias
            bat3(Tq, H * Ts_pad),                  # src additive bias
            full((D, 3 * D)), full((1, 3 * D)),    # self-attn fused W_qkv, b_qkv
            full((D, D)), full((1, D)),            # self-attn Wo, bo
            full((D, D)), full((1, D)),            # cross-attn Wq, bq
            full((D, 2 * D)), full((1, 2 * D)),    # cross-attn fused W_kv, b_kv
            full((D, D)), full((1, D)),            # cross-attn Wo, bo
            full((D, D_FF)), full((1, D_FF)),      # FFN W1, b1
            full((D_FF, D)), full((1, D)),         # FFN W2, b2
            full((6, 1, D)),                       # LN gammas/betas
            full((H * Tq, D)), full((H * Tq, H * Tq)),              # self head constants
            full((H * Ts_pad, D)), full((H * Ts_pad, H * Ts_pad)),  # cross head constants
        ],
        out_specs=[
            rows(Tq),                              # decoded output (B*Tq, D)
            bat3(Tq, H * Tq),                      # self-attn probs (lane-packed)
            bat3(Tq, H * Ts_pad),                  # cross-attn probs (lane-packed)
        ],
    )

    out_shapes = (
        jax.ShapeDtypeStruct((B * Tq, D), jnp.float32),
        jax.ShapeDtypeStruct((B, Tq, H * Tq), jnp.float32),
        jax.ShapeDtypeStruct((B, Tq, H * Ts_pad), jnp.float32),
    )

    out2, sp2, cp2 = pl.pallas_call(
        decoder_layer_kernel,
        out_shape=out_shapes,
        grid_spec=grid_spec,
        compiler_params=pltpu.CompilerParams(
            dimension_semantics=("parallel",) if Bb == 1 else ("arbitrary",)),
    )(x2, enc2, tbias, sbias,
      w_qkv_s, b_qkv_s, wsa[3], bsa[3],
      wca[0], bca[0], w_kv_c, b_kv_c, wca[3], bca[3],
      params["w1"], params["b1"], params["w2"], params["b2"], params["ln"],
      kmask_s, seg_s, kmask_c, seg_c)

    # Un-flatten / un-pack outside the kernel (layout plumbing only).
    out = out2.reshape(B, Tq, D)
    self_probs = sp2.reshape(B, Tq, H, Tq).transpose(0, 2, 1, 3)
    cross_probs = cp2.reshape(B, Tq, H, Ts_pad).transpose(0, 2, 1, 3)[..., :Ts]
    return out, self_probs, cross_probs


# ------------------------- pure-JAX reference ---------------------------------
def _ref_ln(x, gamma, beta):
    mean = jnp.mean(x, axis=-1, keepdims=True)
    var = jnp.mean(jnp.square(x - mean), axis=-1, keepdims=True)
    return (x - mean) / jnp.sqrt(var + EPS) * gamma + beta


def _ref_mha(q_in, kv_in, mask, W, b):
    B, Tq, D = q_in.shape
    Tk = kv_in.shape[1]
    q = q_in @ W[0] + b[0]
    k = kv_in @ W[1] + b[1]
    v = kv_in @ W[2] + b[2]
    split = lambda t, T: t.reshape(B, T, NUM_HEADS, D_K).transpose(0, 2, 1, 3)
    qh, kh, vh = split(q, Tq), split(k, Tk), split(v, Tk)
    scores = jnp.einsum("bhqd,bhkd->bhqk", qh, kh) * SCALE
    scores = jnp.where(mask == 0, NEG_INF, scores)
    probs = jax.nn.softmax(scores, axis=-1)
    ctx = jnp.einsum("bhqk,bhkd->bhqd", probs, vh)
    ctx = ctx.transpose(0, 2, 1, 3).reshape(B, Tq, D)
    return ctx @ W[3] + b[3], probs


def ref_decoder_layer(x, enc, smask, tmask, p):
    ln = p["ln"]
    xn = _ref_ln(x, ln[0], ln[1])
    y, sp = _ref_mha(xn, xn, tmask, p["wsa"], p["bsa"])
    x = x + y
    xn = _ref_ln(x, ln[2], ln[3])
    y, cp = _ref_mha(xn, enc, smask, p["wca"], p["bca"])
    x = x + y
    xn = _ref_ln(x, ln[4], ln[5])
    ff = jnp.maximum(xn @ p["w1"] + p["b1"], 0.0) @ p["w2"] + p["b2"]
    return x + ff, sp, cp


# ---------------------------------- main --------------------------------------
if __name__ == "__main__":
    B, Tq, Ts = 2, 8, 12
    key = jax.random.PRNGKey(0)
    keys = jax.random.split(key, 12)

    # Deterministic synthetic parameters (d_model=32, num_heads=4, d_ff=64, dropout=0.0).
    params = {
        "wsa": 0.05 * jax.random.normal(keys[0], (4, D_MODEL, D_MODEL), jnp.float32),
        "bsa": 0.02 * jax.random.normal(keys[1], (4, 1, D_MODEL), jnp.float32),
        "wca": 0.05 * jax.random.normal(keys[2], (4, D_MODEL, D_MODEL), jnp.float32),
        "bca": 0.02 * jax.random.normal(keys[3], (4, 1, D_MODEL), jnp.float32),
        "w1": 0.05 * jax.random.normal(keys[4], (D_MODEL, D_FF), jnp.float32),
        "b1": 0.02 * jax.random.normal(keys[5], (1, D_FF), jnp.float32),
        "w2": 0.05 * jax.random.normal(keys[6], (D_FF, D_MODEL), jnp.float32),
        "b2": 0.02 * jax.random.normal(keys[7], (1, D_MODEL), jnp.float32),
        # [gamma1, beta1, gamma2, beta2, gamma3, beta3]
        "ln": jnp.stack([
            1.0 + 0.1 * jax.random.normal(keys[8], (1, D_MODEL), jnp.float32),
            0.1 * jax.random.normal(keys[9], (1, D_MODEL), jnp.float32),
            1.0 + 0.1 * jax.random.normal(keys[10], (1, D_MODEL), jnp.float32),
            0.1 * jax.random.normal(keys[11], (1, D_MODEL), jnp.float32),
            jnp.ones((1, D_MODEL), jnp.float32),
            jnp.zeros((1, D_MODEL), jnp.float32),
        ], axis=0),
    }

    kx, ke = jax.random.split(jax.random.PRNGKey(42))
    x = jax.random.normal(kx, (B, Tq, D_MODEL), jnp.float32)
    enc_output = jax.random.normal(ke, (B, Ts, D_MODEL), jnp.float32)

    # Causal target mask and padded source mask (1 = attend, 0 = masked).
    tgt_mask = jnp.tile(
        jnp.tril(jnp.ones((Tq, Tq), jnp.float32)).reshape(1, 1, Tq, Tq), (B, 1, 1, 1))
    src_lens = jnp.array([Ts, Ts - 3])
    src_mask = (jnp.arange(Ts)[None, :] < src_lens[:, None]
                ).astype(jnp.float32).reshape(B, 1, 1, Ts)

    ref_out, ref_sp, ref_cp = ref_decoder_layer(x, enc_output, src_mask, tgt_mask, params)

    # Run with the chip-appropriate grid strategy, then cross-check the alternate one
    # (collapsed batch for single-TC v5e/v6e vs batch-parallel grid for v7x-class chips).
    bb_auto = _default_batch_block(B)
    bb_alt = 1 if bb_auto != 1 else B
    for bb in ([bb_auto] if bb_alt == bb_auto else [bb_auto, bb_alt]):
        out, self_probs, cross_probs = jax.block_until_ready(
            decoder_layer(x, enc_output, src_mask, tgt_mask, params, batch_block=bb))
        np.testing.assert_allclose(np.asarray(out), np.asarray(ref_out),
                                   rtol=1e-4, atol=1e-4)
        np.testing.assert_allclose(np.asarray(self_probs), np.asarray(ref_sp),
                                   rtol=1e-4, atol=1e-4)
        np.testing.assert_allclose(np.asarray(cross_probs), np.asarray(ref_cp),
                                   rtol=1e-4, atol=1e-4)

    print("KERNEL_OK")
</pallas_src>

<mosaic_0001>
module attributes {stable_mosaic.version = 11 : i64} {
  func.func @decoder_layer_kernel(%arg0: i32, %arg1: memref<16x32xf32, #tpu.memory_space<vmem>>, %arg2: memref<32x32xf32, #tpu.memory_space<vmem>>, %arg3: memref<2x8x32xf32, #tpu.memory_space<vmem>>, %arg4: memref<2x8x64xf32, #tpu.memory_space<vmem>>, %arg5: memref<32x96xf32, #tpu.memory_space<vmem>>, %arg6: memref<1x96xf32, #tpu.memory_space<vmem>>, %arg7: memref<32x32xf32, #tpu.memory_space<vmem>>, %arg8: memref<1x32xf32, #tpu.memory_space<vmem>>, %arg9: memref<32x32xf32, #tpu.memory_space<vmem>>, %arg10: memref<1x32xf32, #tpu.memory_space<vmem>>, %arg11: memref<32x64xf32, #tpu.memory_space<vmem>>, %arg12: memref<1x64xf32, #tpu.memory_space<vmem>>, %arg13: memref<32x32xf32, #tpu.memory_space<vmem>>, %arg14: memref<1x32xf32, #tpu.memory_space<vmem>>, %arg15: memref<32x64xf32, #tpu.memory_space<vmem>>, %arg16: memref<1x64xf32, #tpu.memory_space<vmem>>, %arg17: memref<64x32xf32, #tpu.memory_space<vmem>>, %arg18: memref<1x32xf32, #tpu.memory_space<vmem>>, %arg19: memref<6x1x32xf32, #tpu.memory_space<vmem>>, %arg20: memref<32x32xf32, #tpu.memory_space<vmem>>, %arg21: memref<32x32xf32, #tpu.memory_space<vmem>>, %arg22: memref<64x32xf32, #tpu.memory_space<vmem>>, %arg23: memref<64x64xf32, #tpu.memory_space<vmem>>, %arg24: memref<16x32xf32, #tpu.memory_space<vmem>>, %arg25: memref<2x8x32xf32, #tpu.memory_space<vmem>>, %arg26: memref<2x8x64xf32, #tpu.memory_space<vmem>>) attributes {dimension_semantics = [#tpu.dimension_semantics<arbitrary>], iteration_bounds = array<i64: 1>, scalar_prefetch = 0 : i64, scratch_operands = 0 : i64, tpu.core_type = #tpu.core_type<tc>, window_params = [{transform_indices = @transform_0, window_bounds = array<i64: 16, 32>}, {transform_indices = @transform_1, window_bounds = array<i64: 32, 32>}, {transform_indices = @transform_2, window_bounds = array<i64: 2, 8, 32>}, {transform_indices = @transform_3, window_bounds = array<i64: 2, 8, 64>}, {pipeline_mode = #tpu.pipeline_mode<synchronous>, transform_indices = @transform_4, window_bounds = array<i64: 32, 96>}, {pipeline_mode = #tpu.pipeline_mode<synchronous>, transform_indices = @transform_5, window_bounds = array<i64: 1, 96>}, {pipeline_mode = #tpu.pipeline_mode<synchronous>, transform_indices = @transform_6, window_bounds = array<i64: 32, 32>}, {pipeline_mode = #tpu.pipeline_mode<synchronous>, transform_indices = @transform_7, window_bounds = array<i64: 1, 32>}, {pipeline_mode = #tpu.pipeline_mode<synchronous>, transform_indices = @transform_8, window_bounds = array<i64: 32, 32>}, {pipeline_mode = #tpu.pipeline_mode<synchronous>, transform_indices = @transform_9, window_bounds = array<i64: 1, 32>}, {pipeline_mode = #tpu.pipeline_mode<synchronous>, transform_indices = @transform_10, window_bounds = array<i64: 32, 64>}, {pipeline_mode = #tpu.pipeline_mode<synchronous>, transform_indices = @transform_11, window_bounds = array<i64: 1, 64>}, {pipeline_mode = #tpu.pipeline_mode<synchronous>, transform_indices = @transform_12, window_bounds = array<i64: 32, 32>}, {pipeline_mode = #tpu.pipeline_mode<synchronous>, transform_indices = @transform_13, window_bounds = array<i64: 1, 32>}, {pipeline_mode = #tpu.pipeline_mode<synchronous>, transform_indices = @transform_14, window_bounds = array<i64: 32, 64>}, {pipeline_mode = #tpu.pipeline_mode<synchronous>, transform_indices = @transform_15, window_bounds = array<i64: 1, 64>}, {pipeline_mode = #tpu.pipeline_mode<synchronous>, transform_indices = @transform_16, window_bounds = array<i64: 64, 32>}, {pipeline_mode = #tpu.pipeline_mode<synchronous>, transform_indices = @transform_17, window_bounds = array<i64: 1, 32>}, {pipeline_mode = #tpu.pipeline_mode<synchronous>, transform_indices = @transform_18, window_bounds = array<i64: 6, 1, 32>}, {pipeline_mode = #tpu.pipeline_mode<synchronous>, transform_indices = @transform_19, window_bounds = array<i64: 32, 32>}, {pipeline_mode = #tpu.pipeline_mode<synchronous>, transform_indices = @transform_20, window_bounds = array<i64: 32, 32>}, {pipeline_mode = #tpu.pipeline_mode<synchronous>, transform_indices = @transform_21, window_bounds = array<i64: 64, 32>}, {pipeline_mode = #tpu.pipeline_mode<synchronous>, transform_indices = @transform_22, window_bounds = array<i64: 64, 64>}, {transform_indices = @transform_23, window_bounds = array<i64: 16, 32>}, {transform_indices = @transform_24, window_bounds = array<i64: 2, 8, 32>}, {transform_indices = @transform_25, window_bounds = array<i64: 2, 8, 64>}]} {
    %c0 = arith.constant 0 : index
    %c0_0 = arith.constant 0 : index
    %0 = vector.load %arg1[%c0, %c0_0] : memref<16x32xf32, #tpu.memory_space<vmem>>, vector<16x32xf32>
    %c0_1 = arith.constant 0 : index
    %c0_2 = arith.constant 0 : index
    %1 = vector.load %arg2[%c0_1, %c0_2] : memref<32x32xf32, #tpu.memory_space<vmem>>, vector<32x32xf32>
    %c0_3 = arith.constant 0 : index
    %c0_4 = arith.constant 0 : index
    %c0_5 = arith.constant 0 : index
    %2 = vector.load %arg19[%c0_3, %c0_4, %c0_5] : memref<6x1x32xf32, #tpu.memory_space<vmem>>, vector<1x1x32xf32>
    %3 = vector.shape_cast %2 : vector<1x1x32xf32> to vector<1x32xf32>
    %c1 = arith.constant 1 : index
    %c0_6 = arith.constant 0 : index
    %c0_7 = arith.constant 0 : index
    %4 = vector.load %arg19[%c1, %c0_6, %c0_7] : memref<6x1x32xf32, #tpu.memory_space<vmem>>, vector<1x1x32xf32>
    %5 = vector.shape_cast %4 : vector<1x1x32xf32> to vector<1x32xf32>
    %cst = arith.constant dense<0.000000e+00> : vector<16xf32>
    %6 = vector.multi_reduction <add>, %0, %cst [1] : vector<16x32xf32> to vector<16xf32>
    %7 = vector.shape_cast %6 : vector<16xf32> to vector<16x1xf32>
    %cst_8 = arith.constant 3.200000e+01 : f32
    %8 = vector.broadcast %cst_8 : f32 to vector<16x1xf32>
    %9 = arith.divf %7, %8 : vector<16x1xf32>
    %10 = vector.broadcast %9 : vector<16x1xf32> to vector<16x32xf32>
    %11 = arith.subf %0, %10 : vector<16x32xf32>
    %12 = arith.mulf %11, %11 : vector<16x32xf32>
    %cst_9 = arith.constant dense<0.000000e+00> : vector<16xf32>
    %13 = vector.multi_reduction <add>, %12, %cst_9 [1] : vector<16x32xf32> to vector<16xf32>
    %14 = vector.shape_cast %13 : vector<16xf32> to vector<16x1xf32>
    %cst_10 = arith.constant 3.200000e+01 : f32
    %15 = vector.broadcast %cst_10 : f32 to vector<16x1xf32>
    %16 = arith.divf %14, %15 : vector<16x1xf32>
    %17 = vector.broadcast %9 : vector<16x1xf32> to vector<16x32xf32>
    %18 = arith.subf %0, %17 : vector<16x32xf32>
    %cst_11 = arith.constant 9.99999997E-7 : f32
    %19 = vector.broadcast %cst_11 : f32 to vector<16x1xf32>
    %20 = arith.addf %16, %19 : vector<16x1xf32>
    %21 = math.rsqrt %20 : vector<16x1xf32>
    %22 = vector.broadcast %21 : vector<16x1xf32> to vector<16x32xf32>
    %23 = arith.mulf %18, %22 : vector<16x32xf32>
    %24 = vector.broadcast %3 : vector<1x32xf32> to vector<16x32xf32>
    %25 = arith.mulf %23, %24 : vector<16x32xf32>
    %26 = vector.broadcast %5 : vector<1x32xf32> to vector<16x32xf32>
    %27 = arith.addf %25, %26 : vector<16x32xf32>
    %c0_12 = arith.constant 0 : index
    %c0_13 = arith.constant 0 : index
    %28 = vector.load %arg5[%c0_12, %c0_13] : memref<32x96xf32, #tpu.memory_space<vmem>>, vector<32x96xf32>
    %cst_14 = arith.constant dense<0.000000e+00> : vector<16x96xf32>
    %29 = tpu.matmul %27, %28, %cst_14 {dimension_numbers = #tpu.dot_dimension_numbers<[1], [0], [0], [1], [0, 0, 1, 1], [], []>} : vector<16x32xf32>, vector<32x96xf32>, vector<16x96xf32> -> vector<16x96xf32>
    %c0_15 = arith.constant 0 : index
    %c0_16 = arith.constant 0 : index
    %30 = vector.load %arg6[%c0_15, %c0_16] : memref<1x96xf32, #tpu.memory_space<vmem>>, vector<1x96xf32>
    %31 = vector.broadcast %30 : vector<1x96xf32> to vector<16x96xf32>
    %32 = arith.addf %29, %31 : vector<16x96xf32>
    %33 = vector.extract_strided_slice %32 {offsets = [0, 0], sizes = [16, 32], strides = [1, 1]} : vector<16x96xf32> to vector<16x32xf32>
    %34 = vector.extract_strided_slice %32 {offsets = [0, 32], sizes = [16, 32], strides = [1, 1]} : vector<16x96xf32> to vector<16x32xf32>
    %35 = vector.extract_strided_slice %32 {offsets = [0, 64], sizes = [16, 32], strides = [1, 1]} : vector<16x96xf32> to vector<16x32xf32>
    %c0_17 = arith.constant 0 : index
    %c0_18 = arith.constant 0 : index
    %36 = vector.load %arg20[%c0_17, %c0_18] : memref<32x32xf32, #tpu.memory_space<vmem>>, vector<32x32xf32>
    %c0_19 = arith.constant 0 : index
    %c0_20 = arith.constant 0 : index
    %37 = vector.load %arg21[%c0_19, %c0_20] : memref<32x32xf32, #tpu.memory_space<vmem>>, vector<32x32xf32>
    %38 = vector.extract_strided_slice %33 {offsets = [0, 0], sizes = [8, 32], strides = [1, 1]} : vector<16x32xf32> to vector<8x32xf32>
    %39 = vector.extract_strided_slice %34 {offsets = [0, 0], sizes = [8, 32], strides = [1, 1]} : vector<16x32xf32> to vector<8x32xf32>
    %40 = tpu.concatenate %39, %39, %39, %39 in 0 : vector<8x32xf32>, vector<8x32xf32>, vector<8x32xf32>, vector<8x32xf32> -> vector<32x32xf32>
    %41 = arith.mulf %40, %36 : vector<32x32xf32>
    %42 = vector.extract_strided_slice %35 {offsets = [0, 0], sizes = [8, 32], strides = [1, 1]} : vector<16x32xf32> to vector<8x32xf32>
    %43 = tpu.concatenate %42, %42, %42, %42 in 0 : vector<8x32xf32>, vector<8x32xf32>, vector<8x32xf32>, vector<8x32xf32> -> vector<32x32xf32>
    %44 = arith.mulf %43, %36 : vector<32x32xf32>
    %cst_21 = arith.constant dense<0.000000e+00> : vector<8x32xf32>
    %45 = tpu.matmul %38, %41, %cst_21 {dimension_numbers = #tpu.dot_dimension_numbers<[1], [1], [0], [0], [0, 0, 1, 0], [], []>} : vector<8x32xf32>, vector<32x32xf32>, vector<8x32xf32> -> vector<8x32xf32>
    %cst_22 = arith.constant 0.353553385 : f32
    %46 = vector.broadcast %cst_22 : f32 to vector<8x32xf32>
    %47 = arith.mulf %45, %46 : vector<8x32xf32>
    %c0_23 = arith.constant 0 : index
    %c0_24 = arith.constant 0 : index
    %c0_25 = arith.constant 0 : index
    %48 = vector.load %arg3[%c0_23, %c0_24, %c0_25] : memref<2x8x32xf32, #tpu.memory_space<vmem>>, vector<1x8x32xf32>
    %49 = vector.shape_cast %48 : vector<1x8x32xf32> to vector<8x32xf32>
    %50 = arith.addf %47, %49 : vector<8x32xf32>
    %cst_26 = arith.constant dense<0xFF800000> : vector<8xf32>
    %51 = vector.multi_reduction <maximumf>, %50, %cst_26 [1] : vector<8x32xf32> to vector<8xf32>
    %52 = vector.shape_cast %51 : vector<8xf32> to vector<8x1xf32>
    %53 = vector.broadcast %52 : vector<8x1xf32> to vector<8x32xf32>
    %54 = arith.subf %50, %53 : vector<8x32xf32>
    %55 = math.exp %54 : vector<8x32xf32>
    %cst_27 = arith.constant dense<0.000000e+00> : vector<8x32xf32>
    %56 = tpu.matmul %55, %37, %cst_27 {dimension_numbers = #tpu.dot_dimension_numbers<[1], [0], [0], [1], [0, 0, 1, 1], [], []>} : vector<8x32xf32>, vector<32x32xf32>, vector<8x32xf32> -> vector<8x32xf32>
    %57 = tpu.reciprocal %56 : vector<8x32xf32> -> vector<8x32xf32>
    %58 = arith.mulf %55, %57 : vector<8x32xf32>
    %c0_28 = arith.constant 0 : index
    %c0_29 = arith.constant 0 : index
    %c0_30 = arith.constant 0 : index
    %59 = vector.load %arg25[%c0_28, %c0_29, %c0_30] : memref<2x8x32xf32, #tpu.memory_space<vmem>>, vector<1x8x32xf32>
    %60 = vector.shape_cast %59 : vector<1x8x32xf32> to vector<8x32xf32>
    %61 = vector.shape_cast %58 : vector<8x32xf32> to vector<1x8x32xf32>
    tpu.vector_store %arg25[%c0_28, %c0_29, %c0_30], %61 {strides = array<i32>} : memref<2x8x32xf32, #tpu.memory_space<vmem>>, vector<1x8x32xf32>,
    %cst_31 = arith.constant dense<0.000000e+00> : vector<8x32xf32>
    %62 = tpu.matmul %58, %44, %cst_31 {dimension_numbers = #tpu.dot_dimension_numbers<[1], [0], [0], [1], [0, 0, 1, 1], [], []>} : vector<8x32xf32>, vector<32x32xf32>, vector<8x32xf32> -> vector<8x32xf32>
    %63 = vector.extract_strided_slice %33 {offsets = [8, 0], sizes = [8, 32], strides = [1, 1]} : vector<16x32xf32> to vector<8x32xf32>
    %64 = vector.extract_strided_slice %34 {offsets = [8, 0], sizes = [8, 32], strides = [1, 1]} : vector<16x32xf32> to vector<8x32xf32>
    %65 = tpu.concatenate %64, %64, %64, %64 in 0 : vector<8x32xf32>, vector<8x32xf32>, vector<8x32xf32>, vector<8x32xf32> -> vector<32x32xf32>
    %66 = arith.mulf %65, %36 : vector<32x32xf32>
    %67 = vector.extract_strided_slice %35 {offsets = [8, 0], sizes = [8, 32], strides = [1, 1]} : vector<16x32xf32> to vector<8x32xf32>
    %68 = tpu.concatenate %67, %67, %67, %67 in 0 : vector<8x32xf32>, vector<8x32xf32>, vector<8x32xf32>, vector<8x32xf32> -> vector<32x32xf32>
    %69 = arith.mulf %68, %36 : vector<32x32xf32>
    %cst_32 = arith.constant dense<0.000000e+00> : vector<8x32xf32>
    %70 = tpu.matmul %63, %66, %cst_32 {dimension_numbers = #tpu.dot_dimension_numbers<[1], [1], [0], [0], [0, 0, 1, 0], [], []>} : vector<8x32xf32>, vector<32x32xf32>, vector<8x32xf32> -> vector<8x32xf32>
    %cst_33 = arith.constant 0.353553385 : f32
    %71 = vector.broadcast %cst_33 : f32 to vector<8x32xf32>
    %72 = arith.mulf %70, %71 : vector<8x32xf32>
    %c1_34 = arith.constant 1 : index
    %c0_35 = arith.constant 0 : index
    %c0_36 = arith.constant 0 : index
    %73 = vector.load %arg3[%c1_34, %c0_35, %c0_36] : memref<2x8x32xf32, #tpu.memory_space<vmem>>, vector<1x8x32xf32>
    %74 = vector.shape_cast %73 : vector<1x8x32xf32> to vector<8x32xf32>
    %75 = arith.addf %72, %74 : vector<8x32xf32>
    %cst_37 = arith.constant dense<0xFF800000> : vector<8xf32>
    %76 = vector.multi_reduction <maximumf>, %75, %cst_37 [1] : vector<8x32xf32> to vector<8xf32>
    %77 = vector.shape_cast %76 : vector<8xf32> to vector<8x1xf32>
    %78 = vector.broadcast %77 : vector<8x1xf32> to vector<8x32xf32>
    %79 = arith.subf %75, %78 : vector<8x32xf32>
    %80 = math.exp %79 : vector<8x32xf32>
    %cst_38 = arith.constant dense<0.000000e+00> : vector<8x32xf32>
    %81 = tpu.matmul %80, %37, %cst_38 {dimension_numbers = #tpu.dot_dimension_numbers<[1], [0], [0], [1], [0, 0, 1, 1], [], []>} : vector<8x32xf32>, vector<32x32xf32>, vector<8x32xf32> -> vector<8x32xf32>
    %82 = tpu.reciprocal %81 : vector<8x32xf32> -> vector<8x32xf32>
    %83 = arith.mulf %80, %82 : vector<8x32xf32>
    %c1_39 = arith.constant 1 : index
    %c0_40 = arith.constant 0 : index
    %c0_41 = arith.constant 0 : index
    %84 = vector.load %arg25[%c1_39, %c0_40, %c0_41] : memref<2x8x32xf32, #tpu.memory_space<vmem>>, vector<1x8x32xf32>
    %85 = vector.shape_cast %84 : vector<1x8x32xf32> to vector<8x32xf32>
    %86 = vector.shape_cast %83 : vector<8x32xf32> to vector<1x8x32xf32>
    tpu.vector_store %arg25[%c1_39, %c0_40, %c0_41], %86 {strides = array<i32>} : memref<2x8x32xf32, #tpu.memory_space<vmem>>, vector<1x8x32xf32>,
    %cst_42 = arith.constant dense<0.000000e+00> : vector<8x32xf32>
    %87 = tpu.matmul %83, %69, %cst_42 {dimension_numbers = #tpu.dot_dimension_numbers<[1], [0], [0], [1], [0, 0, 1, 1], [], []>} : vector<8x32xf32>, vector<32x32xf32>, vector<8x32xf32> -> vector<8x32xf32>
    %88 = tpu.concatenate %62, %87 in 0 : vector<8x32xf32>, vector<8x32xf32> -> vector<16x32xf32>
    %c0_43 = arith.constant 0 : index
    %c0_44 = arith.constant 0 : index
    %89 = vector.load %arg7[%c0_43, %c0_44] : memref<32x32xf32, #tpu.memory_space<vmem>>, vector<32x32xf32>
    %cst_45 = arith.constant dense<0.000000e+00> : vector<16x32xf32>
    %90 = tpu.matmul %88, %89, %cst_45 {dimension_numbers = #tpu.dot_dimension_numbers<[1], [0], [0], [1], [0, 0, 1, 1], [], []>} : vector<16x32xf32>, vector<32x32xf32>, vector<16x32xf32> -> vector<16x32xf32>
    %c0_46 = arith.constant 0 : index
    %c0_47 = arith.constant 0 : index
    %91 = vector.load %arg8[%c0_46, %c0_47] : memref<1x32xf32, #tpu.memory_space<vmem>>, vector<1x32xf32>
    %92 = vector.broadcast %91 : vector<1x32xf32> to vector<16x32xf32>
    %93 = arith.addf %90, %92 : vector<16x32xf32>
    %94 = arith.addf %0, %93 : vector<16x32xf32>
    %c2 = arith.constant 2 : index
    %c0_48 = arith.constant 0 : index
    %c0_49 = arith.constant 0 : index
    %95 = vector.load %arg19[%c2, %c0_48, %c0_49] : memref<6x1x32xf32, #tpu.memory_space<vmem>>, vector<1x1x32xf32>
    %96 = vector.shape_cast %95 : vector<1x1x32xf32> to vector<1x32xf32>
    %c3 = arith.constant 3 : index
    %c0_50 = arith.constant 0 : index
    %c0_51 = arith.constant 0 : index
    %97 = vector.load %arg19[%c3, %c0_50, %c0_51] : memref<6x1x32xf32, #tpu.memory_space<vmem>>, vector<1x1x32xf32>
    %98 = vector.shape_cast %97 : vector<1x1x32xf32> to vector<1x32xf32>
    %cst_52 = arith.constant dense<0.000000e+00> : vector<16xf32>
    %99 = vector.multi_reduction <add>, %94, %cst_52 [1] : vector<16x32xf32> to vector<16xf32>
    %100 = vector.shape_cast %99 : vector<16xf32> to vector<16x1xf32>
    %cst_53 = arith.constant 3.200000e+01 : f32
    %101 = vector.broadcast %cst_53 : f32 to vector<16x1xf32>
    %102 = arith.divf %100, %101 : vector<16x1xf32>
    %103 = vector.broadcast %102 : vector<16x1xf32> to vector<16x32xf32>
    %104 = arith.subf %94, %103 : vector<16x32xf32>
    %105 = arith.mulf %104, %104 : vector<16x32xf32>
    %cst_54 = arith.constant dense<0.000000e+00> : vector<16xf32>
    %106 = vector.multi_reduction <add>, %105, %cst_54 [1] : vector<16x32xf32> to vector<16xf32>
    %107 = vector.shape_cast %106 : vector<16xf32> to vector<16x1xf32>
    %cst_55 = arith.constant 3.200000e+01 : f32
    %108 = vector.broadcast %cst_55 : f32 to vector<16x1xf32>
    %109 = arith.divf %107, %108 : vector<16x1xf32>
    %110 = vector.broadcast %102 : vector<16x1xf32> to vector<16x32xf32>
    %111 = arith.subf %94, %110 : vector<16x32xf32>
    %cst_56 = arith.constant 9.99999997E-7 : f32
    %112 = vector.broadcast %cst_56 : f32 to vector<16x1xf32>
    %113 = arith.addf %109, %112 : vector<16x1xf32>
    %114 = math.rsqrt %113 : vector<16x1xf32>
    %115 = vector.broadcast %114 : vector<16x1xf32> to vector<16x32xf32>
    %116 = arith.mulf %111, %115 : vector<16x32xf32>
    %117 = vector.broadcast %96 : vector<1x32xf32> to vector<16x32xf32>
    %118 = arith.mulf %116, %117 : vector<16x32xf32>
    %119 = vector.broadcast %98 : vector<1x32xf32> to vector<16x32xf32>
    %120 = arith.addf %118, %119 : vector<16x32xf32>
    %c0_57 = arith.constant 0 : index
    %c0_58 = arith.constant 0 : index
    %121 = vector.load %arg9[%c0_57, %c0_58] : memref<32x32xf32, #tpu.memory_space<vmem>>, vector<32x32xf32>
    %cst_59 = arith.constant dense<0.000000e+00> : vector<16x32xf32>
    %122 = tpu.matmul %120, %121, %cst_59 {dimension_numbers = #tpu.dot_dimension_numbers<[1], [0], [0], [1], [0, 0, 1, 1], [], []>} : vector<16x32xf32>, vector<32x32xf32>, vector<16x32xf32> -> vector<16x32xf32>
    %c0_60 = arith.constant 0 : index
    %c0_61 = arith.constant 0 : index
    %123 = vector.load %arg10[%c0_60, %c0_61] : memref<1x32xf32, #tpu.memory_space<vmem>>, vector<1x32xf32>
    %124 = vector.broadcast %123 : vector<1x32xf32> to vector<16x32xf32>
    %125 = arith.addf %122, %124 : vector<16x32xf32>
    %c0_62 = arith.constant 0 : index
    %c0_63 = arith.constant 0 : index
    %126 = vector.load %arg11[%c0_62, %c0_63] : memref<32x64xf32, #tpu.memory_space<vmem>>, vector<32x64xf32>
    %cst_64 = arith.constant dense<0.000000e+00> : vector<32x64xf32>
    %127 = tpu.matmul %1, %126, %cst_64 {dimension_numbers = #tpu.dot_dimension_numbers<[1], [0], [0], [1], [0, 0, 1, 1], [], []>} : vector<32x32xf32>, vector<32x64xf32>, vector<32x64xf32> -> vector<32x64xf32>
    %c0_65 = arith.constant 0 : index
    %c0_66 = arith.constant 0 : index
    %128 = vector.load %arg12[%c0_65, %c0_66] : memref<1x64xf32, #tpu.memory_space<vmem>>, vector<1x64xf32>
    %129 = vector.broadcast %128 : vector<1x64xf32> to vector<32x64xf32>
    %130 = arith.addf %127, %129 : vector<32x64xf32>
    %131 = vector.extract_strided_slice %130 {offsets = [0, 0], sizes = [32, 32], strides = [1, 1]} : vector<32x64xf32> to vector<32x32xf32>
    %132 = vector.extract_strided_slice %130 {offsets = [0, 32], sizes = [32, 32], strides = [1, 1]} : vector<32x64xf32> to vector<32x32xf32>
    %c0_67 = arith.constant 0 : index
    %c0_68 = arith.constant 0 : index
    %133 = vector.load %arg22[%c0_67, %c0_68] : memref<64x32xf32, #tpu.memory_space<vmem>>, vector<64x32xf32>
    %c0_69 = arith.constant 0 : index
    %c0_70 = arith.constant 0 : index
    %134 = vector.load %arg23[%c0_69, %c0_70] : memref<64x64xf32, #tpu.memory_space<vmem>>, vector<64x64xf32>
    %135 = vector.extract_strided_slice %125 {offsets = [0, 0], sizes = [8, 32], strides = [1, 1]} : vector<16x32xf32> to vector<8x32xf32>
    %136 = vector.extract_strided_slice %131 {offsets = [0, 0], sizes = [16, 32], strides = [1, 1]} : vector<32x32xf32> to vector<16x32xf32>
    %137 = tpu.concatenate %136, %136, %136, %136 in 0 : vector<16x32xf32>, vector<16x32xf32>, vector<16x32xf32>, vector<16x32xf32> -> vector<64x32xf32>
    %138 = arith.mulf %137, %133 : vector<64x32xf32>
    %139 = vector.extract_strided_slice %132 {offsets = [0, 0], sizes = [16, 32], strides = [1, 1]} : vector<32x32xf32> to vector<16x32xf32>
    %140 = tpu.concatenate %139, %139, %139, %139 in 0 : vector<16x32xf32>, vector<16x32xf32>, vector<16x32xf32>, vector<16x32xf32> -> vector<64x32xf32>
    %141 = arith.mulf %140, %133 : vector<64x32xf32>
    %cst_71 = arith.constant dense<0.000000e+00> : vector<8x64xf32>
    %142 = tpu.matmul %135, %138, %cst_71 {dimension_numbers = #tpu.dot_dimension_numbers<[1], [1], [0], [0], [0, 0, 1, 0], [], []>} : vector<8x32xf32>, vector<64x32xf32>, vector<8x64xf32> -> vector<8x64xf32>
    %cst_72 = arith.constant 0.353553385 : f32
    %143 = vector.broadcast %cst_72 : f32 to vector<8x64xf32>
    %144 = arith.mulf %142, %143 : vector<8x64xf32>
    %c0_73 = arith.constant 0 : index
    %c0_74 = arith.constant 0 : index
    %c0_75 = arith.constant 0 : index
    %145 = vector.load %arg4[%c0_73, %c0_74, %c0_75] : memref<2x8x64xf32, #tpu.memory_space<vmem>>, vector<1x8x64xf32>
    %146 = vector.shape_cast %145 : vector<1x8x64xf32> to vector<8x64xf32>
    %147 = arith.addf %144, %146 : vector<8x64xf32>
    %cst_76 = arith.constant dense<0xFF800000> : vector<8xf32>
    %148 = vector.multi_reduction <maximumf>, %147, %cst_76 [1] : vector<8x64xf32> to vector<8xf32>
    %149 = vector.shape_cast %148 : vector<8xf32> to vector<8x1xf32>
    %150 = vector.broadcast %149 : vector<8x1xf32> to vector<8x64xf32>
    %151 = arith.subf %147, %150 : vector<8x64xf32>
    %152 = math.exp %151 : vector<8x64xf32>
    %cst_77 = arith.constant dense<0.000000e+00> : vector<8x64xf32>
    %153 = tpu.matmul %152, %134, %cst_77 {dimension_numbers = #tpu.dot_dimension_numbers<[1], [0], [0], [1], [0, 0, 1, 1], [], []>} : vector<8x64xf32>, vector<64x64xf32>, vector<8x64xf32> -> vector<8x64xf32>
    %154 = tpu.reciprocal %153 : vector<8x64xf32> -> vector<8x64xf32>
    %155 = arith.mulf %152, %154 : vector<8x64xf32>
    %c0_78 = arith.constant 0 : index
    %c0_79 = arith.constant 0 : index
    %c0_80 = arith.constant 0 : index
    %156 = vector.load %arg26[%c0_78, %c0_79, %c0_80] : memref<2x8x64xf32, #tpu.memory_space<vmem>>, vector<1x8x64xf32>
    %157 = vector.shape_cast %156 : vector<1x8x64xf32> to vector<8x64xf32>
    %158 = vector.shape_cast %155 : vector<8x64xf32> to vector<1x8x64xf32>
    tpu.vector_store %arg26[%c0_78, %c0_79, %c0_80], %158 {strides = array<i32>} : memref<2x8x64xf32, #tpu.memory_space<vmem>>, vector<1x8x64xf32>,
    %cst_81 = arith.constant dense<0.000000e+00> : vector<8x32xf32>
    %159 = tpu.matmul %155, %141, %cst_81 {dimension_numbers = #tpu.dot_dimension_numbers<[1], [0], [0], [1], [0, 0, 1, 1], [], []>} : vector<8x64xf32>, vector<64x32xf32>, vector<8x32xf32> -> vector<8x32xf32>
    %160 = vector.extract_strided_slice %125 {offsets = [8, 0], sizes = [8, 32], strides = [1, 1]} : vector<16x32xf32> to vector<8x32xf32>
    %161 = vector.extract_strided_slice %131 {offsets = [16, 0], sizes = [16, 32], strides = [1, 1]} : vector<32x32xf32> to vector<16x32xf32>
    %162 = tpu.concatenate %161, %161, %161, %161 in 0 : vector<16x32xf32>, vector<16x32xf32>, vector<16x32xf32>, vector<16x32xf32> -> vector<64x32xf32>
    %163 = arith.mulf %162, %133 : vector<64x32xf32>
    %164 = vector.extract_strided_slice %132 {offsets = [16, 0], sizes = [16, 32], strides = [1, 1]} : vector<32x32xf32> to vector<16x32xf32>
    %165 = tpu.concatenate %164, %164, %164, %164 in 0 : vector<16x32xf32>, vector<16x32xf32>, vector<16x32xf32>, vector<16x32xf32> -> vector<64x32xf32>
    %166 = arith.mulf %165, %133 : vector<64x32xf32>
    %cst_82 = arith.constant dense<0.000000e+00> : vector<8x64xf32>
    %167 = tpu.matmul %160, %163, %cst_82 {dimension_numbers = #tpu.dot_dimension_numbers<[1], [1], [0], [0], [0, 0, 1, 0], [], []>} : vector<8x32xf32>, vector<64x32xf32>, vector<8x64xf32> -> vector<8x64xf32>
    %cst_83 = arith.constant 0.353553385 : f32
    %168 = vector.broadcast %cst_83 : f32 to vector<8x64xf32>
    %169 = arith.mulf %167, %168 : vector<8x64xf32>
    %c1_84 = arith.constant 1 : index
    %c0_85 = arith.constant 0 : index
    %c0_86 = arith.constant 0 : index
    %170 = vector.load %arg4[%c1_84, %c0_85, %c0_86] : memref<2x8x64xf32, #tpu.memory_space<vmem>>, vector<1x8x64xf32>
    %171 = vector.shape_cast %170 : vector<1x8x64xf32> to vector<8x64xf32>
    %172 = arith.addf %169, %171 : vector<8x64xf32>
    %cst_87 = arith.constant dense<0xFF800000> : vector<8xf32>
    %173 = vector.multi_reduction <maximumf>, %172, %cst_87 [1] : vector<8x64xf32> to vector<8xf32>
    %174 = vector.shape_cast %173 : vector<8xf32> to vector<8x1xf32>
    %175 = vector.broadcast %174 : vector<8x1xf32> to vector<8x64xf32>
    %176 = arith.subf %172, %175 : vector<8x64xf32>
    %177 = math.exp %176 : vector<8x64xf32>
    %cst_88 = arith.constant dense<0.000000e+00> : vector<8x64xf32>
    %178 = tpu.matmul %177, %134, %cst_88 {dimension_numbers = #tpu.dot_dimension_numbers<[1], [0], [0], [1], [0, 0, 1, 1], [], []>} : vector<8x64xf32>, vector<64x64xf32>, vector<8x64xf32> -> vector<8x64xf32>
    %179 = tpu.reciprocal %178 : vector<8x64xf32> -> vector<8x64xf32>
    %180 = arith.mulf %177, %179 : vector<8x64xf32>
    %c1_89 = arith.constant 1 : index
    %c0_90 = arith.constant 0 : index
    %c0_91 = arith.constant 0 : index
    %181 = vector.load %arg26[%c1_89, %c0_90, %c0_91] : memref<2x8x64xf32, #tpu.memory_space<vmem>>, vector<1x8x64xf32>
    %182 = vector.shape_cast %181 : vector<1x8x64xf32> to vector<8x64xf32>
    %183 = vector.shape_cast %180 : vector<8x64xf32> to vector<1x8x64xf32>
    tpu.vector_store %arg26[%c1_89, %c0_90, %c0_91], %183 {strides = array<i32>} : memref<2x8x64xf32, #tpu.memory_space<vmem>>, vector<1x8x64xf32>,
    %cst_92 = arith.constant dense<0.000000e+00> : vector<8x32xf32>
    %184 = tpu.matmul %180, %166, %cst_92 {dimension_numbers = #tpu.dot_dimension_numbers<[1], [0], [0], [1], [0, 0, 1, 1], [], []>} : vector<8x64xf32>, vector<64x32xf32>, vector<8x32xf32> -> vector<8x32xf32>
    %185 = tpu.concatenate %159, %184 in 0 : vector<8x32xf32>, vector<8x32xf32> -> vector<16x32xf32>
    %c0_93 = arith.constant 0 : index
    %c0_94 = arith.constant 0 : index
    %186 = vector.load %arg13[%c0_93, %c0_94] : memref<32x32xf32, #tpu.memory_space<vmem>>, vector<32x32xf32>
    %cst_95 = arith.constant dense<0.000000e+00> : vector<16x32xf32>
    %187 = tpu.matmul %185, %186, %cst_95 {dimension_numbers = #tpu.dot_dimension_numbers<[1], [0], [0], [1], [0, 0, 1, 1], [], []>} : vector<16x32xf32>, vector<32x32xf32>, vector<16x32xf32> -> vector<16x32xf32>
    %c0_96 = arith.constant 0 : index
    %c0_97 = arith.constant 0 : index
    %188 = vector.load %arg14[%c0_96, %c0_97] : memref<1x32xf32, #tpu.memory_space<vmem>>, vector<1x32xf32>
    %189 = vector.broadcast %188 : vector<1x32xf32> to vector<16x32xf32>
    %190 = arith.addf %187, %189 : vector<16x32xf32>
    %191 = arith.addf %94, %190 : vector<16x32xf32>
    %c4 = arith.constant 4 : index
    %c0_98 = arith.constant 0 : index
    %c0_99 = arith.constant 0 : index
    %192 = vector.load %arg19[%c4, %c0_98, %c0_99] : memref<6x1x32xf32, #tpu.memory_space<vmem>>, vector<1x1x32xf32>
    %193 = vector.shape_cast %192 : vector<1x1x32xf32> to vector<1x32xf32>
    %c5 = arith.constant 5 : index
    %c0_100 = arith.constant 0 : index
    %c0_101 = arith.constant 0 : index
    %194 = vector.load %arg19[%c5, %c0_100, %c0_101] : memref<6x1x32xf32, #tpu.memory_space<vmem>>, vector<1x1x32xf32>
    %195 = vector.shape_cast %194 : vector<1x1x32xf32> to vector<1x32xf32>
    %cst_102 = arith.constant dense<0.000000e+00> : vector<16xf32>
    %196 = vector.multi_reduction <add>, %191, %cst_102 [1] : vector<16x32xf32> to vector<16xf32>
    %197 = vector.shape_cast %196 : vector<16xf32> to vector<16x1xf32>
    %cst_103 = arith.constant 3.200000e+01 : f32
    %198 = vector.broadcast %cst_103 : f32 to vector<16x1xf32>
    %199 = arith.divf %197, %198 : vector<16x1xf32>
    %200 = vector.broadcast %199 : vector<16x1xf32> to vector<16x32xf32>
    %201 = arith.subf %191, %200 : vector<16x32xf32>
    %202 = arith.mulf %201, %201 : vector<16x32xf32>
    %cst_104 = arith.constant dense<0.000000e+00> : vector<16xf32>
    %203 = vector.multi_reduction <add>, %202, %cst_104 [1] : vector<16x32xf32> to vector<16xf32>
    %204 = vector.shape_cast %203 : vector<16xf32> to vector<16x1xf32>
    %cst_105 = arith.constant 3.200000e+01 : f32
    %205 = vector.broadcast %cst_105 : f32 to vector<16x1xf32>
    %206 = arith.divf %204, %205 : vector<16x1xf32>
    %207 = vector.broadcast %199 : vector<16x1xf32> to vector<16x32xf32>
    %208 = arith.subf %191, %207 : vector<16x32xf32>
    %cst_106 = arith.constant 9.99999997E-7 : f32
    %209 = vector.broadcast %cst_106 : f32 to vector<16x1xf32>
    %210 = arith.addf %206, %209 : vector<16x1xf32>
    %211 = math.rsqrt %210 : vector<16x1xf32>
    %212 = vector.broadcast %211 : vector<16x1xf32> to vector<16x32xf32>
    %213 = arith.mulf %208, %212 : vector<16x32xf32>
    %214 = vector.broadcast %193 : vector<1x32xf32> to vector<16x32xf32>
    %215 = arith.mulf %213, %214 : vector<16x32xf32>
    %216 = vector.broadcast %195 : vector<1x32xf32> to vector<16x32xf32>
    %217 = arith.addf %215, %216 : vector<16x32xf32>
    %c0_107 = arith.constant 0 : index
    %c0_108 = arith.constant 0 : index
    %218 = vector.load %arg15[%c0_107, %c0_108] : memref<32x64xf32, #tpu.memory_space<vmem>>, vector<32x64xf32>
    %cst_109 = arith.constant dense<0.000000e+00> : vector<16x64xf32>
    %219 = tpu.matmul %217, %218, %cst_109 {dimension_numbers = #tpu.dot_dimension_numbers<[1], [0], [0], [1], [0, 0, 1, 1], [], []>} : vector<16x32xf32>, vector<32x64xf32>, vector<16x64xf32> -> vector<16x64xf32>
    %c0_110 = arith.constant 0 : index
    %c0_111 = arith.constant 0 : index
    %220 = vector.load %arg16[%c0_110, %c0_111] : memref<1x64xf32, #tpu.memory_space<vmem>>, vector<1x64xf32>
    %221 = vector.broadcast %220 : vector<1x64xf32> to vector<16x64xf32>
    %222 = arith.addf %219, %221 : vector<16x64xf32>
    %cst_112 = arith.constant 0.000000e+00 : f32
    %223 = vector.broadcast %cst_112 : f32 to vector<16x64xf32>
    %224 = arith.maximumf %222, %223 : vector<16x64xf32>
    %c0_113 = arith.constant 0 : index
    %c0_114 = arith.constant 0 : index
    %225 = vector.load %arg17[%c0_113, %c0_114] : memref<64x32xf32, #tpu.memory_space<vmem>>, vector<64x32xf32>
    %cst_115 = arith.constant dense<0.000000e+00> : vector<16x32xf32>
    %226 = tpu.matmul %224, %225, %cst_115 {dimension_numbers = #tpu.dot_dimension_numbers<[1], [0], [0], [1], [0, 0, 1, 1], [], []>} : vector<16x64xf32>, vector<64x32xf32>, vector<16x32xf32> -> vector<16x32xf32>
    %c0_116 = arith.constant 0 : index
    %c0_117 = arith.constant 0 : index
    %227 = vector.load %arg18[%c0_116, %c0_117] : memref<1x32xf32, #tpu.memory_space<vmem>>, vector<1x32xf32>
    %228 = vector.broadcast %227 : vector<1x32xf32> to vector<16x32xf32>
    %229 = arith.addf %226, %228 : vector<16x32xf32>
    %230 = arith.addf %191, %229 : vector<16x32xf32>
    %c0_118 = arith.constant 0 : index
    %c0_119 = arith.constant 0 : index
    %231 = vector.load %arg24[%c0_118, %c0_119] : memref<16x32xf32, #tpu.memory_space<vmem>>, vector<16x32xf32>
    tpu.vector_store %arg24[%c0_118, %c0_119], %230 {strides = array<i32>} : memref<16x32xf32, #tpu.memory_space<vmem>>, vector<16x32xf32>,
    return
  }
  func.func @transform_0(%arg0: i32) -> (i32, i32) {
    %c0_i32 = arith.constant 0 : i32
    %c0_i32_0 = arith.constant 0 : i32
    return %arg0, %c0_i32 : i32, i32
  }
  func.func @transform_1(%arg0: i32) -> (i32, i32) {
    %c0_i32 = arith.constant 0 : i32
    %c0_i32_0 = arith.constant 0 : i32
    return %arg0, %c0_i32 : i32, i32
  }
  func.func @transform_2(%arg0: i32) -> (i32, i32, i32) {
    %c0_i32 = arith.constant 0 : i32
    %c0_i32_0 = arith.constant 0 : i32
    %c0_i32_1 = arith.constant 0 : i32
    return %arg0, %c0_i32, %c0_i32_0 : i32, i32, i32
  }
  func.func @transform_3(%arg0: i32) -> (i32, i32, i32) {
    %c0_i32 = arith.constant 0 : i32
    %c0_i32_0 = arith.constant 0 : i32
    %c0_i32_1 = arith.constant 0 : i32
    return %arg0, %c0_i32, %c0_i32_0 : i32, i32, i32
  }
  func.func @transform_4(%arg0: i32) -> (i32, i32) {
    %c0_i32 = arith.constant 0 : i32
    %c0_i32_0 = arith.constant 0 : i32
    %c0_i32_1 = arith.constant 0 : i32
    return %c0_i32, %c0_i32_0 : i32, i32
  }
  func.func @transform_5(%arg0: i32) -> (i32, i32) {
    %c0_i32 = arith.constant 0 : i32
    %c0_i32_0 = arith.constant 0 : i32
    %c0_i32_1 = arith.constant 0 : i32
    return %c0_i32, %c0_i32_0 : i32, i32
  }
  func.func @transform_6(%arg0: i32) -> (i32, i32) {
    %c0_i32 = arith.constant 0 : i32
    %c0_i32_0 = arith.constant 0 : i32
    %c0_i32_1 = arith.constant 0 : i32
    return %c0_i32, %c0_i32_0 : i32, i32
  }
  func.func @transform_7(%arg0: i32) -> (i32, i32) {
    %c0_i32 = arith.constant 0 : i32
    %c0_i32_0 = arith.constant 0 : i32
    %c0_i32_1 = arith.constant 0 : i32
    return %c0_i32, %c0_i32_0 : i32, i32
  }
  func.func @transform_8(%arg0: i32) -> (i32, i32) {
    %c0_i32 = arith.constant 0 : i32
    %c0_i32_0 = arith.constant 0 : i32
    %c0_i32_1 = arith.constant 0 : i32
    return %c0_i32, %c0_i32_0 : i32, i32
  }
  func.func @transform_9(%arg0: i32) -> (i32, i32) {
    %c0_i32 = arith.constant 0 : i32
    %c0_i32_0 = arith.constant 0 : i32
    %c0_i32_1 = arith.constant 0 : i32
    return %c0_i32, %c0_i32_0 : i32, i32
  }
  func.func @transform_10(%arg0: i32) -> (i32, i32) {
    %c0_i32 = arith.constant 0 : i32
    %c0_i32_0 = arith.constant 0 : i32
    %c0_i32_1 = arith.constant 0 : i32
    return %c0_i32, %c0_i32_0 : i32, i32
  }
  func.func @transform_11(%arg0: i32) -> (i32, i32) {
    %c0_i32 = arith.constant 0 : i32
    %c0_i32_0 = arith.constant 0 : i32
    %c0_i32_1 = arith.constant 0 : i32
    return %c0_i32, %c0_i32_0 : i32, i32
  }
  func.func @transform_12(%arg0: i32) -> (i32, i32) {
    %c0_i32 = arith.constant 0 : i32
    %c0_i32_0 = arith.constant 0 : i32
    %c0_i32_1 = arith.constant 0 : i32
    return %c0_i32, %c0_i32_0 : i32, i32
  }
  func.func @transform_13(%arg0: i32) -> (i32, i32) {
    %c0_i32 = arith.constant 0 : i32
    %c0_i32_0 = arith.constant 0 : i32
    %c0_i32_1 = arith.constant 0 : i32
    return %c0_i32, %c0_i32_0 : i32, i32
  }
  func.func @transform_14(%arg0: i32) -> (i32, i32) {
    %c0_i32 = arith.constant 0 : i32
    %c0_i32_0 = arith.constant 0 : i32
    %c0_i32_1 = arith.constant 0 : i32
    return %c0_i32, %c0_i32_0 : i32, i32
  }
  func.func @transform_15(%arg0: i32) -> (i32, i32) {
    %c0_i32 = arith.constant 0 : i32
    %c0_i32_0 = arith.constant 0 : i32
    %c0_i32_1 = arith.constant 0 : i32
    return %c0_i32, %c0_i32_0 : i32, i32
  }
  func.func @transform_16(%arg0: i32) -> (i32, i32) {
    %c0_i32 = arith.constant 0 : i32
    %c0_i32_0 = arith.constant 0 : i32
    %c0_i32_1 = arith.constant 0 : i32
    return %c0_i32, %c0_i32_0 : i32, i32
  }
  func.func @transform_17(%arg0: i32) -> (i32, i32) {
    %c0_i32 = arith.constant 0 : i32
    %c0_i32_0 = arith.constant 0 : i32
    %c0_i32_1 = arith.constant 0 : i32
    return %c0_i32, %c0_i32_0 : i32, i32
  }
  func.func @transform_18(%arg0: i32) -> (i32, i32, i32) {
    %c0_i32 = arith.constant 0 : i32
    %c0_i32_0 = arith.constant 0 : i32
    %c0_i32_1 = arith.constant 0 : i32
    %c0_i32_2 = arith.constant 0 : i32
    return %c0_i32, %c0_i32_0, %c0_i32_1 : i32, i32, i32
  }
  func.func @transform_19(%arg0: i32) -> (i32, i32) {
    %c0_i32 = arith.constant 0 : i32
    %c0_i32_0 = arith.constant 0 : i32
    %c0_i32_1 = arith.constant 0 : i32
    return %c0_i32, %c0_i32_0 : i32, i32
  }
  func.func @transform_20(%arg0: i32) -> (i32, i32) {
    %c0_i32 = arith.constant 0 : i32
    %c0_i32_0 = arith.constant 0 : i32
    %c0_i32_1 = arith.constant 0 : i32
    return %c0_i32, %c0_i32_0 : i32, i32
  }
  func.func @transform_21(%arg0: i32) -> (i32, i32) {
    %c0_i32 = arith.constant 0 : i32
    %c0_i32_0 = arith.constant 0 : i32
    %c0_i32_1 = arith.constant 0 : i32
    return %c0_i32, %c0_i32_0 : i32, i32
  }
  func.func @transform_22(%arg0: i32) -> (i32, i32) {
    %c0_i32 = arith.constant 0 : i32
    %c0_i32_0 = arith.constant 0 : i32
    %c0_i32_1 = arith.constant 0 : i32
    return %c0_i32, %c0_i32_0 : i32, i32
  }
  func.func @transform_23(%arg0: i32) -> (i32, i32) {
    %c0_i32 = arith.constant 0 : i32
    %c0_i32_0 = arith.constant 0 : i32
    return %arg0, %c0_i32 : i32, i32
  }
  func.func @transform_24(%arg0: i32) -> (i32, i32, i32) {
    %c0_i32 = arith.constant 0 : i32
    %c0_i32_0 = arith.constant 0 : i32
    %c0_i32_1 = arith.constant 0 : i32
    return %arg0, %c0_i32, %c0_i32_0 : i32, i32, i32
  }
  func.func @transform_25(%arg0: i32) -> (i32, i32, i32) {
    %c0_i32 = arith.constant 0 : i32
    %c0_i32_0 = arith.constant 0 : i32
    %c0_i32_1 = arith.constant 0 : i32
    return %arg0, %c0_i32, %c0_i32_0 : i32, i32, i32
  }
}

</mosaic_0001>

<llo_original>
// kernel: tpu_custom_call.1
$region0: #{tpu_custom_call.1}
  #allocation0 [shape = 'u32[]', space=smem, size = 0x4, offset = 0x4, fixed_abs, tag = 'smem constant byte address 0x4 - core index']
  #allocation1 [shape = 'u32[144,128]{1,0:T(1,128)}', space=vmem, size = 0x12000, scoped, tag = 'internal scratch']
  %s0 = inlined_call_operand.hbm [shape: f32[16,32], index: 0, kind: input, shape index: {}]
  %s1 = inlined_call_operand.vmem [shape: f32[32,32], index: 1, kind: input, shape index: {}]
  %s2 = inlined_call_operand.hbm [shape: f32[2,8,32], index: 2, kind: input, shape index: {}]
  %s3 = inlined_call_operand.hbm [shape: f32[2,8,64], index: 3, kind: input, shape index: {}]
  %s4 = inlined_call_operand.vmem [shape: f32[32,96], index: 4, kind: input, shape index: {}]
  %s5 = inlined_call_operand.hbm [shape: f32[1,96], index: 5, kind: input, shape index: {}]
  %s6 = inlined_call_operand.vmem [shape: f32[32,32], index: 6, kind: input, shape index: {}]
  %s7 = inlined_call_operand.hbm [shape: f32[1,32], index: 7, kind: input, shape index: {}]
  %s8 = inlined_call_operand.hbm [shape: f32[32,32], index: 8, kind: input, shape index: {}]
  %s9 = inlined_call_operand.hbm [shape: f32[1,32], index: 9, kind: input, shape index: {}]
  %s10 = inlined_call_operand.hbm [shape: f32[32,64], index: 10, kind: input, shape index: {}]
  %s11 = inlined_call_operand.hbm [shape: f32[1,64], index: 11, kind: input, shape index: {}]
  %s12 = inlined_call_operand.hbm [shape: f32[32,32], index: 12, kind: input, shape index: {}]
  %s13 = inlined_call_operand.hbm [shape: f32[1,32], index: 13, kind: input, shape index: {}]
  %s14 = inlined_call_operand.hbm [shape: f32[32,64], index: 14, kind: input, shape index: {}]
  %s15 = inlined_call_operand.hbm [shape: f32[1,64], index: 15, kind: input, shape index: {}]
  %s16 = inlined_call_operand.vmem [shape: f32[64,32], index: 16, kind: input, shape index: {}]
  %s17 = inlined_call_operand.hbm [shape: f32[1,32], index: 17, kind: input, shape index: {}]
  %s18 = inlined_call_operand.hbm [shape: f32[6,1,32], index: 18, kind: input, shape index: {}]
  %s19 = inlined_call_operand.vmem [shape: f32[32,32], index: 19, kind: input, shape index: {}]
  %s20 = inlined_call_operand.hbm [shape: f32[32,32], index: 20, kind: input, shape index: {}]
  %s21 = inlined_call_operand.vmem [shape: f32[64,32], index: 21, kind: input, shape index: {}]
  %s22 = inlined_call_operand.vmem [shape: f32[64,64], index: 22, kind: input, shape index: {}]
  %s23 = inlined_call_operand.hbm [shape: f32[16,32], index: 23, kind: output, shape index: {0}]
  %s24 = inlined_call_operand.hbm [shape: f32[2,8,32], index: 24, kind: output, shape index: {1}]
  %s25 = inlined_call_operand.hbm [shape: f32[2,8,64], index: 25, kind: output, shape index: {2}]
  %26 = xla_tuple %s23, %s24, %s25
  %s27 = sld [smem:[#allocation0]]
  $region182: #{tpu_custom_call.1} parent=0
    _
  %s29 = ssub.s32 1, %s27
  %s30 = scalar_select 0, %s29, %s27
  $region1: #{tpu_custom_call.1} parent=0
    #allocation2 [shape = 'u8[8192]{0}', space=vmem, size = 0x2000, scoped, tag = 'input window, operand 0, single buffered']
    #allocation3 [shape = 's32[1]{0}', space=sflag, size = 0x4, scoped, tag = 'scoped memory for tpu_custom_call.1']
    #allocation4 [shape = 's32[1]{0}', space=sflag, size = 0x4, scoped, tag = 'scoped memory for tpu_custom_call.1']
    #allocation5 [shape = 'u8[8192]{0}', space=vmem, size = 0x2000, scoped, tag = 'input window, operand 2, single buffered']
    #allocation6 [shape = 's32[1]{0}', space=sflag, size = 0x4, scoped, tag = 'scoped memory for tpu_custom_call.1']
    #allocation7 [shape = 'u8[8192]{0}', space=vmem, size = 0x2000, scoped, tag = 'input window, operand 3, single buffered']
    #allocation8 [shape = 'u8[512]{0}', space=vmem, size = 0x400, scoped, tag = 'input window, operand 5, single buffered']
    #allocation9 [shape = 's32[1]{0}', space=sflag, size = 0x4, scoped, tag = 'scoped memory for tpu_custom_call.1']
    #allocation10 [shape = 'u8[512]{0}', space=vmem, size = 0x400, scoped, tag = 'input window, operand 7, single buffered']
    #allocation11 [shape = 'u8[16384]{0}', space=vmem, size = 0x4000, scoped, tag = 'input window, operand 8, single buffered']
    #allocation12 [shape = 's32[1]{0}', space=sflag, size = 0x4, scoped, tag = 'scoped memory for tpu_custom_call.1']
    #allocation13 [shape = 'u8[512]{0}', space=vmem, size = 0x400, scoped, tag = 'input window, operand 9, single buffered']
    #allocation14 [shape = 'u8[16384]{0}', space=vmem, size = 0x4000, scoped, tag = 'input window, operand 10, single buffered']
    #allocation15 [shape = 's32[1]{0}', space=sflag, size = 0x4, scoped, tag = 'scoped memory for tpu_custom_call.1']
    #allocation16 [shape = 'u8[512]{0}', space=vmem, size = 0x400, scoped, tag = 'input window, operand 11, single buffered']
    #allocation17 [shape = 'u8[16384]{0}', space=vmem, size = 0x4000, scoped, tag = 'input window, operand 12, single buffered']
    #allocation18 [shape = 's32[1]{0}', space=sflag, size = 0x4, scoped, tag = 'scoped memory for tpu_custom_call.1']
    #allocation19 [shape = 'u8[512]{0}', space=vmem, size = 0x400, scoped, tag = 'input window, operand 13, single buffered']
    #allocation20 [shape = 'u8[16384]{0}', space=vmem, size = 0x4000, scoped, tag = 'input window, operand 14, single buffered']
    #allocation21 [shape = 's32[1]{0}', space=sflag, size = 0x4, scoped, tag = 'scoped memory for tpu_custom_call.1']
    #allocation22 [shape = 'u8[512]{0}', space=vmem, size = 0x400, scoped, tag = 'input window, operand 15, single buffered']
    #allocation23 [shape = 'u8[512]{0}', space=vmem, size = 0x400, scoped, tag = 'input window, operand 17, single buffered']
    #allocation24 [shape = 's32[1]{0}', space=sflag, size = 0x4, scoped, tag = 'scoped memory for tpu_custom_call.1']
    #allocation25 [shape = 'u8[3072]{0}', space=vmem, size = 0xc00, scoped, tag = 'input window, operand 18, single buffered']
    #allocation26 [shape = 'u8[16384]{0}', space=vmem, size = 0x4000, scoped, tag = 'input window, operand 20, single buffered']
    #allocation27 [shape = 's32[1]{0}', space=sflag, size = 0x4, scoped, tag = 'scoped memory for tpu_custom_call.1']
    #allocation28 [shape = 'u8[8192]{0}', space=vmem, size = 0x2000, scoped, tag = 'output window, operand 0, single buffered']
    #allocation29 [shape = 'u8[8192]{0}', space=vmem, size = 0x2000, scoped, tag = 'output window, operand 1, single buffered']
    #allocation30 [shape = 's32[1]{0}', space=sflag, size = 0x4, scoped, tag = 'scoped memory for tpu_custom_call.1']
    #allocation31 [shape = 'u8[8192]{0}', space=vmem, size = 0x2000, scoped, tag = 'output window, operand 2, single buffered']
    %31 = vsyncpa [#allocation3], 0
    %32 = vsyncpa [#allocation6], 0
    %33 = vsyncpa [#allocation9], 0
    %34 = vsyncpa [#allocation12], 0
    %35 = vsyncpa [#allocation15], 0
    %36 = vsyncpa [#allocation18], 0
    %37 = vsyncpa [#allocation21], 0
    %38 = vsyncpa [#allocation24], 0
    %39 = vsyncpa [#allocation27], 0
    %40 = vsyncpa [#allocation4], 0
    %41 = vsyncpa [#allocation30], 0
    // Predicated region
    $region2: #{tpu_custom_call.1} parent=1 // pred_check
      _
    $region3: #{tpu_custom_call.1} parent=1 // pred_check_branch
      %43 = sbr.rel (0) target = $region5
    $region4: #{tpu_custom_call.1} parent=1 // pred_region
      %s45 = ssub.s32 256, 256
      %46 = vsyncadd [#allocation3], %s45
      %s47 = sshll.u32 [#allocation2], 4
      %s48 = int_to_ptr.vmem [resolvable:$true] %s47
      %53 = dma.hbm_to_vmem [thread:$0]  %s0, 256, %s48, [#allocation3], 128, 128, 8
    $region5: #{tpu_custom_call.1} parent=1 // pred_fallthru
      _
    // Predicated region
    $region6: #{tpu_custom_call.1} parent=1 // pred_check
      _
    $region7: #{tpu_custom_call.1} parent=1 // pred_check_branch
      %55 = sbr.rel (0) target = $region9
    $region8: #{tpu_custom_call.1} parent=1 // pred_region
      _
    $region9: #{tpu_custom_call.1} parent=1 // pred_fallthru
      _
    // Predicated region
    $region10: #{tpu_custom_call.1} parent=1 // pred_check
      _
    $region11: #{tpu_custom_call.1} parent=1 // pred_check_branch
      %57 = sbr.rel (0) target = $region13
    $region12: #{tpu_custom_call.1} parent=1 // pred_region
      %s59 = ssub.s32 256, 256
      %60 = vsyncadd [#allocation6], %s59
      %s61 = sshll.u32 [#allocation5], 4
      %s62 = int_to_ptr.vmem [resolvable:$true] %s61
      %67 = dma.hbm_to_vmem [thread:$0]  %s2, 256, %s62, [#allocation6], 128, 128, 8
    $region13: #{tpu_custom_call.1} parent=1 // pred_fallthru
      _
    // Predicated region
    $region14: #{tpu_custom_call.1} parent=1 // pred_check
      _
    $region15: #{tpu_custom_call.1} parent=1 // pred_check_branch
      %69 = sbr.rel (0) target = $region17
    $region16: #{tpu_custom_call.1} parent=1 // pred_region
      %s71 = ssub.s32 256, 256
      %72 = vsyncadd [#allocation6], %s71
      %s73 = sshll.u32 [#allocation7], 4
      %s74 = int_to_ptr.vmem [resolvable:$true] %s73
      %79 = dma.hbm_to_vmem [thread:$0]  %s3, 256, %s74, [#allocation6], 128, 128, 8
    $region17: #{tpu_custom_call.1} parent=1 // pred_fallthru
      _
    // Predicated region
    $region18: #{tpu_custom_call.1} parent=1 // pred_check
      _
    $region19: #{tpu_custom_call.1} parent=1 // pred_check_branch
      %81 = sbr.rel (0) target = $region21
    $region20: #{tpu_custom_call.1} parent=1 // pred_region
      _
    $region21: #{tpu_custom_call.1} parent=1 // pred_fallthru
      _
    // Predicated region
    $region22: #{tpu_custom_call.1} parent=1 // pred_check
      _
    $region23: #{tpu_custom_call.1} parent=1 // pred_check_branch
      %83 = sbr.rel (0) target = $region25
    $region24: #{tpu_custom_call.1} parent=1 // pred_region
      %s85 = ssub.s32 16, 16
      %86 = vsyncadd [#allocation9], %s85
      %s88 = sshll.u32 [#allocation8], 4
      %s89 = int_to_ptr.vmem [resolvable:$true] %s88
      %91 = dma.hbm_to_vmem [thread:$0]  %s5, 16, %s89, [#allocation9]
    $region25: #{tpu_custom_call.1} parent=1 // pred_fallthru
      _
    // Predicated region
    $region26: #{tpu_custom_call.1} parent=1 // pred_check
      _
    $region27: #{tpu_custom_call.1} parent=1 // pred_check_branch
      %93 = sbr.rel (0) target = $region29
    $region28: #{tpu_custom_call.1} parent=1 // pred_region
      _
    $region29: #{tpu_custom_call.1} parent=1 // pred_fallthru
      _
    // Predicated region
    $region30: #{tpu_custom_call.1} parent=1 // pred_check
      _
    $region31: #{tpu_custom_call.1} parent=1 // pred_check_branch
      %95 = sbr.rel (0) target = $region33
    $region32: #{tpu_custom_call.1} parent=1 // pred_region
      %s97 = ssub.s32 16, 16
      %98 = vsyncadd [#allocation9], %s97
      %s100 = sshll.u32 [#allocation10], 4
      %s101 = int_to_ptr.vmem [resolvable:$true] %s100
      %103 = dma.hbm_to_vmem [thread:$0]  %s7, 16, %s101, [#allocation9]
    $region33: #{tpu_custom_call.1} parent=1 // pred_fallthru
      _
    // Predicated region
    $region34: #{tpu_custom_call.1} parent=1 // pred_check
      _
    $region35: #{tpu_custom_call.1} parent=1 // pred_check_branch
      %105 = sbr.rel (0) target = $region37
    $region36: #{tpu_custom_call.1} parent=1 // pred_region
      %s107 = ssub.s32 512, 512
      %108 = vsyncadd [#allocation12], %s107
      %s109 = sshll.u32 [#allocation11], 4
      %s110 = int_to_ptr.vmem [resolvable:$true] %s109
      %115 = dma.hbm_to_vmem [thread:$0]  %s8, 512, %s110, [#allocation12], 128, 128, 8
    $region37: #{tpu_custom_call.1} parent=1 // pred_fallthru
      _
    // Predicated region
    $region38: #{tpu_custom_call.1} parent=1 // pred_check
      _
    $region39: #{tpu_custom_call.1} parent=1 // pred_check_branch
      %117 = sbr.rel (0) target = $region41
    $region40: #{tpu_custom_call.1} parent=1 // pred_region
      %s119 = ssub.s32 16, 16
      %120 = vsyncadd [#allocation12], %s119
      %s122 = sshll.u32 [#allocation13], 4
      %s123 = int_to_ptr.vmem [resolvable:$true] %s122
      %125 = dma.hbm_to_vmem [thread:$0]  %s9, 16, %s123, [#allocation12]
    $region41: #{tpu_custom_call.1} parent=1 // pred_fallthru
      _
    // Predicated region
    $region42: #{tpu_custom_call.1} parent=1 // pred_check
      _
    $region43: #{tpu_custom_call.1} parent=1 // pred_check_branch
      %127 = sbr.rel (0) target = $region45
    $region44: #{tpu_custom_call.1} parent=1 // pred_region
      %s129 = ssub.s32 512, 512
      %130 = vsyncadd [#allocation15], %s129
      %s131 = sshll.u32 [#allocation14], 4
      %s132 = int_to_ptr.vmem [resolvable:$true] %s131
      %137 = dma.hbm_to_vmem [thread:$0]  %s10, 512, %s132, [#allocation15], 128, 128, 8
    $region45: #{tpu_custom_call.1} parent=1 // pred_fallthru
      _
    // Predicated region
    $region46: #{tpu_custom_call.1} parent=1 // pred_check
      _
    $region47: #{tpu_custom_call.1} parent=1 // pred_check_branch
      %139 = sbr.rel (0) target = $region49
    $region48: #{tpu_custom_call.1} parent=1 // pred_region
      %s141 = ssub.s32 16, 16
      %142 = vsyncadd [#allocation15], %s141
      %s144 = sshll.u32 [#allocation16], 4
      %s145 = int_to_ptr.vmem [resolvable:$true] %s144
      %147 = dma.hbm_to_vmem [thread:$0]  %s11, 16, %s145, [#allocation15]
    $region49: #{tpu_custom_call.1} parent=1 // pred_fallthru
      _
    // Predicated region
    $region50: #{tpu_custom_call.1} parent=1 // pred_check
      _
    $region51: #{tpu_custom_call.1} parent=1 // pred_check_branch
      %149 = sbr.rel (0) target = $region53
    $region52: #{tpu_custom_call.1} parent=1 // pred_region
      %s151 = ssub.s32 512, 512
      %152 = vsyncadd [#allocation18], %s151
      %s153 = sshll.u32 [#allocation17], 4
      %s154 = int_to_ptr.vmem [resolvable:$true] %s153
      %159 = dma.hbm_to_vmem [thread:$0]  %s12, 512, %s154, [#allocation18], 128, 128, 8
    $region53: #{tpu_custom_call.1} parent=1 // pred_fallthru
      _
    // Predicated region
    $region54: #{tpu_custom_call.1} parent=1 // pred_check
      _
    $region55: #{tpu_custom_call.1} parent=1 // pred_check_branch
      %161 = sbr.rel (0) target = $region57
    $region56: #{tpu_custom_call.1} parent=1 // pred_region
      %s163 = ssub.s32 16, 16
      %164 = vsyncadd [#allocation18], %s163
      %s166 = sshll.u32 [#allocation19], 4
      %s167 = int_to_ptr.vmem [resolvable:$true] %s166
      %169 = dma.hbm_to_vmem [thread:$0]  %s13, 16, %s167, [#allocation18]
    $region57: #{tpu_custom_call.1} parent=1 // pred_fallthru
      _
    // Predicated region
    $region58: #{tpu_custom_call.1} parent=1 // pred_check
      _
    $region59: #{tpu_custom_call.1} parent=1 // pred_check_branch
      %171 = sbr.rel (0) target = $region61
    $region60: #{tpu_custom_call.1} parent=1 // pred_region
      %s173 = ssub.s32 512, 512
      %174 = vsyncadd [#allocation21], %s173
      %s175 = sshll.u32 [#allocation20], 4
      %s176 = int_to_ptr.vmem [resolvable:$true] %s175
      %181 = dma.hbm_to_vmem [thread:$0]  %s14, 512, %s176, [#allocation21], 128, 128, 8
    $region61: #{tpu_custom_call.1} parent=1 // pred_fallthru
      _
    // Predicated region
    $region62: #{tpu_custom_call.1} parent=1 // pred_check
      _
    $region63: #{tpu_custom_call.1} parent=1 // pred_check_branch
      %183 = sbr.rel (0) target = $region65
    $region64: #{tpu_custom_call.1} parent=1 // pred_region
      %s185 = ssub.s32 16, 16
      %186 = vsyncadd [#allocation21], %s185
      %s188 = sshll.u32 [#allocation22], 4
      %s189 = int_to_ptr.vmem [resolvable:$true] %s188
      %191 = dma.hbm_to_vmem [thread:$0]  %s15, 16, %s189, [#allocation21]
    $region65: #{tpu_custom_call.1} parent=1 // pred_fallthru
      _
    // Predicated region
    $region66: #{tpu_custom_call.1} parent=1 // pred_check
      _
    $region67: #{tpu_custom_call.1} parent=1 // pred_check_branch
      %193 = sbr.rel (0) target = $region69
    $region68: #{tpu_custom_call.1} parent=1 // pred_region
      _
    $region69: #{tpu_custom_call.1} parent=1 // pred_fallthru
      _
    // Predicated region
    $region70: #{tpu_custom_call.1} parent=1 // pred_check
      _
    $region71: #{tpu_custom_call.1} parent=1 // pred_check_branch
      %195 = sbr.rel (0) target = $region73
    $region72: #{tpu_custom_call.1} parent=1 // pred_region
      %s197 = ssub.s32 16, 16
      %198 = vsyncadd [#allocation24], %s197
      %s200 = sshll.u32 [#allocation23], 4
      %s201 = int_to_ptr.vmem [resolvable:$true] %s200
      %203 = dma.hbm_to_vmem [thread:$0]  %s17, 16, %s201, [#allocation24]
    $region73: #{tpu_custom_call.1} parent=1 // pred_fallthru
      _
    // Predicated region
    $region74: #{tpu_custom_call.1} parent=1 // pred_check
      _
    $region75: #{tpu_custom_call.1} parent=1 // pred_check_branch
      %205 = sbr.rel (0) target = $region77
    $region76: #{tpu_custom_call.1} parent=1 // pred_region
      %s207 = ssub.s32 96, 96
      %208 = vsyncadd [#allocation24], %s207
      %s209 = sshll.u32 [#allocation25], 4
      %s210 = int_to_ptr.vmem [resolvable:$true] %s209
      %215 = dma.hbm_to_vmem [thread:$0]  %s18, 96, %s210, [#allocation24], 16, 16, 1
    $region77: #{tpu_custom_call.1} parent=1 // pred_fallthru
      _
    // Predicated region
    $region78: #{tpu_custom_call.1} parent=1 // pred_check
      _
    $region79: #{tpu_custom_call.1} parent=1 // pred_check_branch
      %217 = sbr.rel (0) target = $region81
    $region80: #{tpu_custom_call.1} parent=1 // pred_region
      _
    $region81: #{tpu_custom_call.1} parent=1 // pred_fallthru
      _
    // Predicated region
    $region82: #{tpu_custom_call.1} parent=1 // pred_check
      _
    $region83: #{tpu_custom_call.1} parent=1 // pred_check_branch
      %219 = sbr.rel (0) target = $region85
    $region84: #{tpu_custom_call.1} parent=1 // pred_region
      %s221 = ssub.s32 512, 512
      %222 = vsyncadd [#allocation27], %s221
      %s223 = sshll.u32 [#allocation26], 4
      %s224 = int_to_ptr.vmem [resolvable:$true] %s223
      %229 = dma.hbm_to_vmem [thread:$0]  %s20, 512, %s224, [#allocation27], 128, 128, 8
    $region85: #{tpu_custom_call.1} parent=1 // pred_fallthru
      _
    // Predicated region
    $region86: #{tpu_custom_call.1} parent=1 // pred_check
      _
    $region87: #{tpu_custom_call.1} parent=1 // pred_check_branch
      %231 = sbr.rel (0) target = $region89
    $region88: #{tpu_custom_call.1} parent=1 // pred_region
      _
    $region89: #{tpu_custom_call.1} parent=1 // pred_fallthru
      _
    // Predicated region
    $region90: #{tpu_custom_call.1} parent=1 // pred_check
      _
    $region91: #{tpu_custom_call.1} parent=1 // pred_check_branch
      %233 = sbr.rel (0) target = $region93
    $region92: #{tpu_custom_call.1} parent=1 // pred_region
      _
    $region93: #{tpu_custom_call.1} parent=1 // pred_fallthru
      _
    // Predicated region
    $region94: #{tpu_custom_call.1} parent=1 // pred_check
      _
    $region95: #{tpu_custom_call.1} parent=1 // pred_check_branch
      %235 = sbr.rel (0) target = $region97
    $region96: #{tpu_custom_call.1} parent=1 // pred_region
      %236 = dma.done [#allocation3], 256
    $region97: #{tpu_custom_call.1} parent=1 // pred_fallthru
      _
    // Predicated region
    $region98: #{tpu_custom_call.1} parent=1 // pred_check
      _
    $region99: #{tpu_custom_call.1} parent=1 // pred_check_branch
      %238 = sbr.rel (0) target = $region101
    $region100: #{tpu_custom_call.1} parent=1 // pred_region
      %239 = dma.done [#allocation6], 256
    $region101: #{tpu_custom_call.1} parent=1 // pred_fallthru
      _
    // Predicated region
    $region102: #{tpu_custom_call.1} parent=1 // pred_check
      _
    $region103: #{tpu_custom_call.1} parent=1 // pred_check_branch
      %241 = sbr.rel (0) target = $region105
    $region104: #{tpu_custom_call.1} parent=1 // pred_region
      %242 = dma.done [#allocation6], 256
    $region105: #{tpu_custom_call.1} parent=1 // pred_fallthru
      _
    // Predicated region
    $region106: #{tpu_custom_call.1} parent=1 // pred_check
      _
    $region107: #{tpu_custom_call.1} parent=1 // pred_check_branch
      %244 = sbr.rel (0) target = $region109
    $region108: #{tpu_custom_call.1} parent=1 // pred_region
      %245 = dma.done [#allocation9], 16
    $region109: #{tpu_custom_call.1} parent=1 // pred_fallthru
      _
    // Predicated region
    $region110: #{tpu_custom_call.1} parent=1 // pred_check
      _
    $region111: #{tpu_custom_call.1} parent=1 // pred_check_branch
      %247 = sbr.rel (0) target = $region113
    $region112: #{tpu_custom_call.1} parent=1 // pred_region
      %248 = dma.done [#allocation9], 16
    $region113: #{tpu_custom_call.1} parent=1 // pred_fallthru
      _
    // Predicated region
    $region114: #{tpu_custom_call.1} parent=1 // pred_check
      _
    $region115: #{tpu_custom_call.1} parent=1 // pred_check_branch
      %250 = sbr.rel (0) target = $region117
    $region116: #{tpu_custom_call.1} parent=1 // pred_region
      %251 = dma.done [#allocation12], 512
    $region117: #{tpu_custom_call.1} parent=1 // pred_fallthru
      _
    // Predicated region
    $region118: #{tpu_custom_call.1} parent=1 // pred_check
      _
    $region119: #{tpu_custom_call.1} parent=1 // pred_check_branch
      %253 = sbr.rel (0) target = $region121
    $region120: #{tpu_custom_call.1} parent=1 // pred_region
      %254 = dma.done [#allocation12], 16
    $region121: #{tpu_custom_call.1} parent=1 // pred_fallthru
      _
    // Predicated region
    $region122: #{tpu_custom_call.1} parent=1 // pred_check
      _
    $region123: #{tpu_custom_call.1} parent=1 // pred_check_branch
      %256 = sbr.rel (0) target = $region125
    $region124: #{tpu_custom_call.1} parent=1 // pred_region
      %257 = dma.done [#allocation15], 512
    $region125: #{tpu_custom_call.1} parent=1 // pred_fallthru
      _
    // Predicated region
    $region126: #{tpu_custom_call.1} parent=1 // pred_check
      _
    $region127: #{tpu_custom_call.1} parent=1 // pred_check_branch
      %259 = sbr.rel (0) target = $region129
    $region128: #{tpu_custom_call.1} parent=1 // pred_region
      %260 = dma.done [#allocation15], 16
    $region129: #{tpu_custom_call.1} parent=1 // pred_fallthru
      _
    // Predicated region
    $region130: #{tpu_custom_call.1} parent=1 // pred_check
      _
    $region131: #{tpu_custom_call.1} parent=1 // pred_check_branch
      %262 = sbr.rel (0) target = $region133
    $region132: #{tpu_custom_call.1} parent=1 // pred_region
      %263 = dma.done [#allocation18], 512
    $region133: #{tpu_custom_call.1} parent=1 // pred_fallthru
      _
    // Predicated region
    $region134: #{tpu_custom_call.1} parent=1 // pred_check
      _
    $region135: #{tpu_custom_call.1} parent=1 // pred_check_branch
      %265 = sbr.rel (0) target = $region137
    $region136: #{tpu_custom_call.1} parent=1 // pred_region
      %266 = dma.done [#allocation18], 16
    $region137: #{tpu_custom_call.1} parent=1 // pred_fallthru
      _
    // Predicated region
    $region138: #{tpu_custom_call.1} parent=1 // pred_check
      _
    $region139: #{tpu_custom_call.1} parent=1 // pred_check_branch
      %268 = sbr.rel (0) target = $region141
    $region140: #{tpu_custom_call.1} parent=1 // pred_region
      %269 = dma.done [#allocation21], 512
    $region141: #{tpu_custom_call.1} parent=1 // pred_fallthru
      _
    // Predicated region
    $region142: #{tpu_custom_call.1} parent=1 // pred_check
      _
    $region143: #{tpu_custom_call.1} parent=1 // pred_check_branch
      %271 = sbr.rel (0) target = $region145
    $region144: #{tpu_custom_call.1} parent=1 // pred_region
      %272 = dma.done [#allocation21], 16
    $region145: #{tpu_custom_call.1} parent=1 // pred_fallthru
      _
    // Predicated region
    $region146: #{tpu_custom_call.1} parent=1 // pred_check
      _
    $region147: #{tpu_custom_call.1} parent=1 // pred_check_branch
      %274 = sbr.rel (0) target = $region149
    $region148: #{tpu_custom_call.1} parent=1 // pred_region
      %275 = dma.done [#allocation24], 16
    $region149: #{tpu_custom_call.1} parent=1 // pred_fallthru
      _
    // Predicated region
    $region150: #{tpu_custom_call.1} parent=1 // pred_check
      _
    $region151: #{tpu_custom_call.1} parent=1 // pred_check_branch
      %277 = sbr.rel (0) target = $region153
    $region152: #{tpu_custom_call.1} parent=1 // pred_region
      %278 = dma.done [#allocation24], 96
    $region153: #{tpu_custom_call.1} parent=1 // pred_fallthru
      _
    // Predicated region
    $region154: #{tpu_custom_call.1} parent=1 // pred_check
      _
    $region155: #{tpu_custom_call.1} parent=1 // pred_check_branch
      %280 = sbr.rel (0) target = $region157
    $region156: #{tpu_custom_call.1} parent=1 // pred_region
      %281 = dma.done [#allocation27], 512
    $region157: #{tpu_custom_call.1} parent=1 // pred_fallthru
      _
    %v282 = vld [vmem:[#allocation2] sm:$0xff]
    %v283 = vld [vmem:[#allocation2 + $0x8] sm:$0xff]
    %v284 = vld [vmem:[%s1] sm:$0xff]
    %v285 = vld [vmem:[%s1 + $0x8] sm:$0xff]
    %v286 = vld [vmem:[%s1 + $0x10] sm:$0xff]
    %v287 = vld [vmem:[%s1 + $0x18] sm:$0xff]
    %v288 = vld [vmem:[#allocation25] sm:$0x1]
    %s289 = scalar_lea.vmem [#allocation25], 1
    %v290 = vld [vmem:[%s289] sm:$0x1]
    %vm291 = vcmask 261120
    %v292 = vsel %vm291, %v282, 0.0
    %293 = vadd.xlane.f32.xlu0 %v292
    %v294 = vpop.xlane.xlu0 %293
    %v295 = vsel %vm291, %v283, 0.0
    %296 = vadd.xlane.f32.xlu0 %v295
    %v297 = vpop.xlane.xlu0 %296
    %v298 = vrcp.pop 32.0
    %v299 = vmul.f32 %v294, %v298
    %v300 = vmul.f32 %v297, %v298
    %v301 = vsub.f32 %v282, %v299
    %v302 = vsub.f32 %v283, %v300
    %v303 = vmul.f32 %v301, %v301
    %v304 = vmul.f32 %v302, %v302
    %v305 = vsel %vm291, %v303, 0.0
    %306 = vadd.xlane.f32.xlu0 %v305
    %v307 = vpop.xlane.xlu0 %306
    %v308 = vsel %vm291, %v304, 0.0
    %309 = vadd.xlane.f32.xlu0 %v308
    %v310 = vpop.xlane.xlu0 %309
    %v311 = vmul.f32 %v307, %v298
    %v312 = vmul.f32 %v310, %v298
    %v313 = vadd.f32 %v311, 1e-06
    %v314 = vadd.f32 %v312, 1e-06
    %v315 = vrsqrt.pop %v313
    %v316 = vrsqrt.pop %v314
    %v317 = vmul.f32 %v301, %v315
    %v318 = vmul.f32 %v302, %v316
    %v320 = vlaneseq
    %v321 = vshrl.u32 %v320, 7
    %v322 = vsub.s32 0, %v321
    %v323 = vrot.slane %v288, %v322
    %v325 = vmul.f32 %v317, %v323
    %v326 = vmul.f32 %v318, %v323
    %v328 = vlaneseq
    %v329 = vshrl.u32 %v328, 7
    %v330 = vsub.s32 0, %v329
    %v331 = vrot.slane %v290, %v330
    %v333 = vadd.f32 %v325, %v331
    %v334 = vadd.f32 %v326, %v331
    %v335 = vld [vmem:[%s4] sm:$0xff]
    %v336 = vld [vmem:[%s4 + $0x8] sm:$0xff]
    %v337 = vld [vmem:[%s4 + $0x10] sm:$0xff]
    %v338 = vld [vmem:[%s4 + $0x18] sm:$0xff]
    %v339 = vld [vmem:[#allocation8] sm:$0x1]
    %v341 = vlaneseq
    %v342 = vshrl.u32 %v341, 7
    %v343 = vsub.s32 0, %v342
    %v344 = vrot.slane %v339, %v343
    %v347 = vsel %vm291, %v333, 0
    %v350 = vsel %vm291, %v334, 0
    %352 = vmatprep.subr.mxu0 0.0
    %353 = vmatpush1.msra.mxu0 0.0
    %354 = vmatprep.subr.mxu0 0.0
    %355 = vmatpush1.msra.mxu0 0.0
    %356 = vmatprep.subr.mxu0 0.0
    %357 = vmatpush1.msra.mxu0 0.0
    %358 = vmatprep.subr.mxu0 0.0
    %359 = vmatpush1.msra.mxu0 0.0
    %360 = vmatprep.subr.mxu0 0.0
    %361 = vmatpush1.msra.mxu0 0.0
    %362 = vmatprep.subr.mxu0 0.0
    %363 = vmatpush1.msra.mxu0 0.0
    %364 = vmatprep.subr.mxu0 0.0
    %365 = vmatpush1.msra.mxu0 0.0
    %366 = vmatprep.subr.mxu0 0.0
    %367 = vmatpush1.msra.mxu0 0.0
    %368 = vmatprep.subr.mxu0 0.0
    %369 = vmatpush1.msra.mxu0 0.0
    %370 = vmatprep.subr.mxu0 0.0
    %371 = vmatpush1.msra.mxu0 0.0
    %372 = vmatprep.subr.mxu0 0.0
    %373 = vmatpush1.msra.mxu0 0.0
    %374 = vmatprep.subr.mxu0 0.0
    %375 = vmatpush1.msra.mxu0 0.0
    %376 = vmatprep.subr.mxu0 0.0
    %377 = vmatpush1.msra.mxu0 %v338
    %378 = vmatprep.subr.mxu0 0.0
    %379 = vmatpush1.msra.mxu0 %v337
    %380 = vmatprep.subr.mxu0 0.0
    %381 = vmatpush1.msra.mxu0 %v336
    %382 = vmatprep.subr.mxu0 0.0
    %383 = vmatpush1.msra.mxu0 %v335
    %384 = vmatprep.subr.mxu0 0.0
    %385 = vmatpush2.msra.mxu0 0.0
    %386 = vmatprep.subr.mxu0 0.0
    %387 = vmatpush2.msra.mxu0 0.0
    %388 = vmatprep.subr.mxu0 0.0
    %389 = vmatpush2.msra.mxu0 0.0
    %390 = vmatprep.subr.mxu0 0.0
    %391 = vmatpush2.msra.mxu0 0.0
    %392 = vmatprep.subr.mxu0 0.0
    %393 = vmatpush2.msra.mxu0 0.0
    %394 = vmatprep.subr.mxu0 0.0
    %395 = vmatpush2.msra.mxu0 0.0
    %396 = vmatprep.subr.mxu0 0.0
    %397 = vmatpush2.msra.mxu0 0.0
    %398 = vmatprep.subr.mxu0 0.0
    %399 = vmatpush2.msra.mxu0 0.0
    %400 = vmatprep.subr.mxu0 0.0
    %401 = vmatpush2.msra.mxu0 0.0
    %402 = vmatprep.subr.mxu0 0.0
    %403 = vmatpush2.msra.mxu0 0.0
    %404 = vmatprep.subr.mxu0 0.0
    %405 = vmatpush2.msra.mxu0 0.0
    %406 = vmatprep.subr.mxu0 0.0
    %407 = vmatpush2.msra.mxu0 0.0
    %408 = vmatprep.subr.mxu0 0.0
    %409 = vmatpush2.msra.mxu0 0.0
    %410 = vmatprep.subr.mxu0 0.0
    %411 = vmatpush2.msra.mxu0 0.0
    %412 = vmatprep.subr.mxu0 0.0
    %413 = vmatpush2.msra.mxu0 0.0
    %414 = vmatprep.subr.mxu0 0.0
    %415 = vmatpush2.msra.mxu0 0.0
    %416 = vmatprep.mubr.f32.mxu0 0.0
    %417 = vmatmul.mubr.f32.gmra.mxu0 %v347
    %v418 = vpop.f32.mrf.mxu0
    %v419 = vadd.f32 %v344, %v418
    %v420 = vpop.f32.mrf.mxu0
    %421 = vmatprep.mubr.f32.mxu0 0.0
    %422 = vmatmul.mubr.f32.gmra.mxu0 %v350
    %v423 = vpop.f32.mrf.mxu0
    %v424 = vadd.f32 %v344, %v423
    %v425 = vpop.f32.mrf.mxu0
    %426 = vdwg.mxu0
    %v427 = vld [vmem:[%s19] sm:$0xff]
    %v428 = vld [vmem:[%s19 + $0x8] sm:$0xff]
    %v429 = vld [vmem:[%s19 + $0x10] sm:$0xff]
    %v430 = vld [vmem:[%s19 + $0x18] sm:$0xff]
    %v431 = vld [vmem:[#allocation26] sm:$0xff]
    %v432 = vld [vmem:[#allocation26 + $0x8] sm:$0xff]
    %v433 = vld [vmem:[#allocation26 + $0x10] sm:$0xff]
    %v434 = vld [vmem:[#allocation26 + $0x18] sm:$0xff]
    %439 = vrot.lane.b32.xlu0 %v427, 32
    %v440 = vpop.permute.xlu0 %439
    %441 = vrot.lane.b32.xlu0 %v428, 32
    %v442 = vpop.permute.xlu0 %441
    %443 = vrot.lane.b32.xlu0 %v429, 32
    %v444 = vpop.permute.xlu0 %443
    %445 = vrot.lane.b32.xlu0 %v430, 32
    %v446 = vpop.permute.xlu0 %445
    %v451 = vmul.f32 %v419, %v440
    %v452 = vmul.f32 %v419, %v442
    %v453 = vmul.f32 %v419, %v444
    %v454 = vmul.f32 %v419, %v446
    %455 = vrot.lane.b32.xlu0 %v427, 64
    %v456 = vpop.permute.xlu0 %455
    %457 = vrot.lane.b32.xlu0 %v428, 64
    %v458 = vpop.permute.xlu0 %457
    %459 = vrot.lane.b32.xlu0 %v429, 64
    %v460 = vpop.permute.xlu0 %459
    %461 = vrot.lane.b32.xlu0 %v430, 64
    %v462 = vpop.permute.xlu0 %461
    %v467 = vmul.f32 %v419, %v456
    %v468 = vmul.f32 %v419, %v458
    %v469 = vmul.f32 %v419, %v460
    %v470 = vmul.f32 %v419, %v462
    %475 = vrot.lane.b32.xlu0 %v451, 96
    %v476 = vpop.permute.xlu0 %475
    %477 = vrot.lane.b32.xlu0 %v452, 96
    %v478 = vpop.permute.xlu0 %477
    %479 = vrot.lane.b32.xlu0 %v453, 96
    %v480 = vpop.permute.xlu0 %479
    %481 = vrot.lane.b32.xlu0 %v454, 96
    %v482 = vpop.permute.xlu0 %481
    %v484 = vsel %vm291, %v419, 0
    %v486 = vsel %vm291, %v476, 0
    %v488 = vsel %vm291, %v478, 0
    %v490 = vsel %vm291, %v480, 0
    %v492 = vsel %vm291, %v482, 0
    %494 = vmatprep.subr.mxu0 0.0
    %495 = vmatpush1.xpose.msra.mxu0 0.0
    %496 = vmatprep.subr.mxu0 0.0
    %497 = vmatpush1.xpose.msra.mxu0 0.0
    %498 = vmatprep.subr.mxu0 0.0
    %499 = vmatpush1.xpose.msra.mxu0 0.0
    %500 = vmatprep.subr.mxu0 0.0
    %501 = vmatpush1.xpose.msra.mxu0 0.0
    %502 = vmatprep.subr.mxu0 0.0
    %503 = vmatpush1.xpose.msra.mxu0 0.0
    %504 = vmatprep.subr.mxu0 0.0
    %505 = vmatpush1.xpose.msra.mxu0 0.0
    %506 = vmatprep.subr.mxu0 0.0
    %507 = vmatpush1.xpose.msra.mxu0 0.0
    %508 = vmatprep.subr.mxu0 0.0
    %509 = vmatpush1.xpose.msra.mxu0 0.0
    %510 = vmatprep.subr.mxu0 0.0
    %511 = vmatpush1.xpose.msra.mxu0 0.0
    %512 = vmatprep.subr.mxu0 0.0
    %513 = vmatpush1.xpose.msra.mxu0 0.0
    %514 = vmatprep.subr.mxu0 0.0
    %515 = vmatpush1.xpose.msra.mxu0 0.0
    %516 = vmatprep.subr.mxu0 0.0
    %517 = vmatpush1.xpose.msra.mxu0 0.0
    %518 = vmatprep.subr.mxu0 0.0
    %519 = vmatpush1.xpose.msra.mxu0 %v492
    %520 = vmatprep.subr.mxu0 0.0
    %521 = vmatpush1.xpose.msra.mxu0 %v490
    %522 = vmatprep.subr.mxu0 0.0
    %523 = vmatpush1.xpose.msra.mxu0 %v488
    %524 = vmatprep.subr.mxu0 0.0
    %525 = vmatpush1.xpose.msra.mxu0 %v486
    %526 = vmatprep.subr.mxu0 0.0
    %527 = vmatpush2.xpose.msra.mxu0 0.0
    %528 = vmatprep.subr.mxu0 0.0
    %529 = vmatpush2.xpose.msra.mxu0 0.0
    %530 = vmatprep.subr.mxu0 0.0
    %531 = vmatpush2.xpose.msra.mxu0 0.0
    %532 = vmatprep.subr.mxu0 0.0
    %533 = vmatpush2.xpose.msra.mxu0 0.0
    %534 = vmatprep.subr.mxu0 0.0
    %535 = vmatpush2.xpose.msra.mxu0 0.0
    %536 = vmatprep.subr.mxu0 0.0
    %537 = vmatpush2.xpose.msra.mxu0 0.0
    %538 = vmatprep.subr.mxu0 0.0
    %539 = vmatpush2.xpose.msra.mxu0 0.0
    %540 = vmatprep.subr.mxu0 0.0
    %541 = vmatpush2.xpose.msra.mxu0 0.0
    %542 = vmatprep.subr.mxu0 0.0
    %543 = vmatpush2.xpose.msra.mxu0 0.0
    %544 = vmatprep.subr.mxu0 0.0
    %545 = vmatpush2.xpose.msra.mxu0 0.0
    %546 = vmatprep.subr.mxu0 0.0
    %547 = vmatpush2.xpose.msra.mxu0 0.0
    %548 = vmatprep.subr.mxu0 0.0
    %549 = vmatpush2.xpose.msra.mxu0 0.0
    %550 = vmatprep.subr.mxu0 0.0
    %551 = vmatpush2.xpose.msra.mxu0 0.0
    %552 = vmatprep.subr.mxu0 0.0
    %553 = vmatpush2.xpose.msra.mxu0 0.0
    %554 = vmatprep.subr.mxu0 0.0
    %555 = vmatpush2.xpose.msra.mxu0 0.0
    %556 = vmatprep.subr.mxu0 0.0
    %557 = vmatpush2.xpose.msra.mxu0 0.0
    %558 = vmatprep.mubr.f32.mxu0 0.0
    %559 = vmatmul.mubr.f32.gmra.mxu0 %v484
    %v560 = vpop.f32.mrf.mxu0
    %v561 = vadd.f32 0.0, %v560
    %v562 = vpop.f32.mrf.mxu0
    %563 = vdwg.mxu0
    %v564 = vmul.f32 %v561, 0.35355338
    %v565 = vld [vmem:[#allocation5] sm:$0xff]
    %v566 = vadd.f32 %v564, %v565
    %v567 = vsel %vm291, %v566, -inf
    %568 = vmax.xlane.f32.xlu0 %v567
    %v569 = vpop.xlane.xlu0 %568
    %v570 = vsub.f32 %v566, %v569
    %v571 = vmul.f32 %v570, 1.442695
    %v572 = vpow.pop %v571
    %v574 = vsel %vm291, %v572, 0
    %576 = vmatprep.subr.mxu0 0.0
    %577 = vmatpush1.msra.mxu0 0.0
    %578 = vmatprep.subr.mxu0 0.0
    %579 = vmatpush1.msra.mxu0 0.0
    %580 = vmatprep.subr.mxu0 0.0
    %581 = vmatpush1.msra.mxu0 0.0
    %582 = vmatprep.subr.mxu0 0.0
    %583 = vmatpush1.msra.mxu0 0.0
    %584 = vmatprep.subr.mxu0 0.0
    %585 = vmatpush1.msra.mxu0 0.0
    %586 = vmatprep.subr.mxu0 0.0
    %587 = vmatpush1.msra.mxu0 0.0
    %588 = vmatprep.subr.mxu0 0.0
    %589 = vmatpush1.msra.mxu0 0.0
    %590 = vmatprep.subr.mxu0 0.0
    %591 = vmatpush1.msra.mxu0 0.0
    %592 = vmatprep.subr.mxu0 0.0
    %593 = vmatpush1.msra.mxu0 0.0
    %594 = vmatprep.subr.mxu0 0.0
    %595 = vmatpush1.msra.mxu0 0.0
    %596 = vmatprep.subr.mxu0 0.0
    %597 = vmatpush1.msra.mxu0 0.0
    %598 = vmatprep.subr.mxu0 0.0
    %599 = vmatpush1.msra.mxu0 0.0
    %600 = vmatprep.subr.mxu0 0.0
    %601 = vmatpush1.msra.mxu0 %v434
    %602 = vmatprep.subr.mxu0 0.0
    %603 = vmatpush1.msra.mxu0 %v433
    %604 = vmatprep.subr.mxu0 0.0
    %605 = vmatpush1.msra.mxu0 %v432
    %606 = vmatprep.subr.mxu0 0.0
    %607 = vmatpush1.msra.mxu0 %v431
    %608 = vmatprep.subr.mxu0 0.0
    %609 = vmatpush2.msra.mxu0 0.0
    %610 = vmatprep.subr.mxu0 0.0
    %611 = vmatpush2.msra.mxu0 0.0
    %612 = vmatprep.subr.mxu0 0.0
    %613 = vmatpush2.msra.mxu0 0.0
    %614 = vmatprep.subr.mxu0 0.0
    %615 = vmatpush2.msra.mxu0 0.0
    %616 = vmatprep.subr.mxu0 0.0
    %617 = vmatpush2.msra.mxu0 0.0
    %618 = vmatprep.subr.mxu0 0.0
    %619 = vmatpush2.msra.mxu0 0.0
    %620 = vmatprep.subr.mxu0 0.0
    %621 = vmatpush2.msra.mxu0 0.0
    %622 = vmatprep.subr.mxu0 0.0
    %623 = vmatpush2.msra.mxu0 0.0
    %624 = vmatprep.subr.mxu0 0.0
    %625 = vmatpush2.msra.mxu0 0.0
    %626 = vmatprep.subr.mxu0 0.0
    %627 = vmatpush2.msra.mxu0 0.0
    %628 = vmatprep.subr.mxu0 0.0
    %629 = vmatpush2.msra.mxu0 0.0
    %630 = vmatprep.subr.mxu0 0.0
    %631 = vmatpush2.msra.mxu0 0.0
    %632 = vmatprep.subr.mxu0 0.0
    %633 = vmatpush2.msra.mxu0 0.0
    %634 = vmatprep.subr.mxu0 0.0
    %635 = vmatpush2.msra.mxu0 0.0
    %636 = vmatprep.subr.mxu0 0.0
    %637 = vmatpush2.msra.mxu0 0.0
    %638 = vmatprep.subr.mxu0 0.0
    %639 = vmatpush2.msra.mxu0 0.0
    %640 = vmatprep.mubr.f32.mxu0 0.0
    %641 = vmatmul.mubr.f32.gmra.mxu0 %v574
    %v642 = vpop.f32.mrf.mxu0
    %v643 = vadd.f32 0.0, %v642
    %v644 = vpop.f32.mrf.mxu0
    %645 = vdwg.mxu0
    %v646 = vrcp.pop %v643
    %v647 = vmul.f32 %v572, %v646
    %648 = vst.msk [vmem:[#allocation29] sm:$0xff] %vm291, %v647
    %653 = vrot.lane.b32.xlu0 %v467, 64
    %v654 = vpop.permute.xlu0 %653
    %655 = vrot.lane.b32.xlu0 %v468, 64
    %v656 = vpop.permute.xlu0 %655
    %657 = vrot.lane.b32.xlu0 %v469, 64
    %v658 = vpop.permute.xlu0 %657
    %659 = vrot.lane.b32.xlu0 %v470, 64
    %v660 = vpop.permute.xlu0 %659
    %v666 = vsel %vm291, %v647, 0
    %668 = vmatprep.subr.mxu0 0.0
    %669 = vmatpush1.msra.mxu0 0.0
    %670 = vmatprep.subr.mxu0 0.0
    %671 = vmatpush1.msra.mxu0 0.0
    %672 = vmatprep.subr.mxu0 0.0
    %673 = vmatpush1.msra.mxu0 0.0
    %674 = vmatprep.subr.mxu0 0.0
    %675 = vmatpush1.msra.mxu0 0.0
    %676 = vmatprep.subr.mxu0 0.0
    %677 = vmatpush1.msra.mxu0 0.0
    %678 = vmatprep.subr.mxu0 0.0
    %679 = vmatpush1.msra.mxu0 0.0
    %680 = vmatprep.subr.mxu0 0.0
    %681 = vmatpush1.msra.mxu0 0.0
    %682 = vmatprep.subr.mxu0 0.0
    %683 = vmatpush1.msra.mxu0 0.0
    %684 = vmatprep.subr.mxu0 0.0
    %685 = vmatpush1.msra.mxu0 0.0
    %686 = vmatprep.subr.mxu0 0.0
    %687 = vmatpush1.msra.mxu0 0.0
    %688 = vmatprep.subr.mxu0 0.0
    %689 = vmatpush1.msra.mxu0 0.0
    %690 = vmatprep.subr.mxu0 0.0
    %691 = vmatpush1.msra.mxu0 0.0
    %692 = vmatprep.subr.mxu0 0.0
    %693 = vmatpush1.msra.mxu0 %v660
    %694 = vmatprep.subr.mxu0 0.0
    %695 = vmatpush1.msra.mxu0 %v658
    %696 = vmatprep.subr.mxu0 0.0
    %697 = vmatpush1.msra.mxu0 %v656
    %698 = vmatprep.subr.mxu0 0.0
    %699 = vmatpush1.msra.mxu0 %v654
    %700 = vmatprep.subr.mxu0 0.0
    %701 = vmatpush2.msra.mxu0 0.0
    %702 = vmatprep.subr.mxu0 0.0
    %703 = vmatpush2.msra.mxu0 0.0
    %704 = vmatprep.subr.mxu0 0.0
    %705 = vmatpush2.msra.mxu0 0.0
    %706 = vmatprep.subr.mxu0 0.0
    %707 = vmatpush2.msra.mxu0 0.0
    %708 = vmatprep.subr.mxu0 0.0
    %709 = vmatpush2.msra.mxu0 0.0
    %710 = vmatprep.subr.mxu0 0.0
    %711 = vmatpush2.msra.mxu0 0.0
    %712 = vmatprep.subr.mxu0 0.0
    %713 = vmatpush2.msra.mxu0 0.0
    %714 = vmatprep.subr.mxu0 0.0
    %715 = vmatpush2.msra.mxu0 0.0
    %716 = vmatprep.subr.mxu0 0.0
    %717 = vmatpush2.msra.mxu0 0.0
    %718 = vmatprep.subr.mxu0 0.0
    %719 = vmatpush2.msra.mxu0 0.0
    %720 = vmatprep.subr.mxu0 0.0
    %721 = vmatpush2.msra.mxu0 0.0
    %722 = vmatprep.subr.mxu0 0.0
    %723 = vmatpush2.msra.mxu0 0.0
    %724 = vmatprep.subr.mxu0 0.0
    %725 = vmatpush2.msra.mxu0 0.0
    %726 = vmatprep.subr.mxu0 0.0
    %727 = vmatpush2.msra.mxu0 0.0
    %728 = vmatprep.subr.mxu0 0.0
    %729 = vmatpush2.msra.mxu0 0.0
    %730 = vmatprep.subr.mxu0 0.0
    %731 = vmatpush2.msra.mxu0 0.0
    %732 = vmatprep.mubr.f32.mxu0 0.0
    %733 = vmatmul.mubr.f32.gmra.mxu0 %v666
    %v734 = vpop.f32.mrf.mxu0
    %v735 = vadd.f32 0.0, %v734
    %v736 = vpop.f32.mrf.mxu0
    %737 = vdwg.mxu0
    %v738 = vmul.f32 %v424, %v440
    %v739 = vmul.f32 %v424, %v442
    %v740 = vmul.f32 %v424, %v444
    %v741 = vmul.f32 %v424, %v446
    %v742 = vmul.f32 %v424, %v456
    %v743 = vmul.f32 %v424, %v458
    %v744 = vmul.f32 %v424, %v460
    %v745 = vmul.f32 %v424, %v462
    %750 = vrot.lane.b32.xlu0 %v738, 96
    %v751 = vpop.permute.xlu0 %750
    %752 = vrot.lane.b32.xlu0 %v739, 96
    %v753 = vpop.permute.xlu0 %752
    %754 = vrot.lane.b32.xlu0 %v740, 96
    %v755 = vpop.permute.xlu0 %754
    %756 = vrot.lane.b32.xlu0 %v741, 96
    %v757 = vpop.permute.xlu0 %756
    %v759 = vsel %vm291, %v424, 0
    %v761 = vsel %vm291, %v751, 0
    %v763 = vsel %vm291, %v753, 0
    %v765 = vsel %vm291, %v755, 0
    %v767 = vsel %vm291, %v757, 0
    %769 = vmatprep.subr.mxu0 0.0
    %770 = vmatpush1.xpose.msra.mxu0 0.0
    %771 = vmatprep.subr.mxu0 0.0
    %772 = vmatpush1.xpose.msra.mxu0 0.0
    %773 = vmatprep.subr.mxu0 0.0
    %774 = vmatpush1.xpose.msra.mxu0 0.0
    %775 = vmatprep.subr.mxu0 0.0
    %776 = vmatpush1.xpose.msra.mxu0 0.0
    %777 = vmatprep.subr.mxu0 0.0
    %778 = vmatpush1.xpose.msra.mxu0 0.0
    %779 = vmatprep.subr.mxu0 0.0
    %780 = vmatpush1.xpose.msra.mxu0 0.0
    %781 = vmatprep.subr.mxu0 0.0
    %782 = vmatpush1.xpose.msra.mxu0 0.0
    %783 = vmatprep.subr.mxu0 0.0
    %784 = vmatpush1.xpose.msra.mxu0 0.0
    %785 = vmatprep.subr.mxu0 0.0
    %786 = vmatpush1.xpose.msra.mxu0 0.0
    %787 = vmatprep.subr.mxu0 0.0
    %788 = vmatpush1.xpose.msra.mxu0 0.0
    %789 = vmatprep.subr.mxu0 0.0
    %790 = vmatpush1.xpose.msra.mxu0 0.0
    %791 = vmatprep.subr.mxu0 0.0
    %792 = vmatpush1.xpose.msra.mxu0 0.0
    %793 = vmatprep.subr.mxu0 0.0
    %794 = vmatpush1.xpose.msra.mxu0 %v767
    %795 = vmatprep.subr.mxu0 0.0
    %796 = vmatpush1.xpose.msra.mxu0 %v765
    %797 = vmatprep.subr.mxu0 0.0
    %798 = vmatpush1.xpose.msra.mxu0 %v763
    %799 = vmatprep.subr.mxu0 0.0
    %800 = vmatpush1.xpose.msra.mxu0 %v761
    %801 = vmatprep.subr.mxu0 0.0
    %802 = vmatpush2.xpose.msra.mxu0 0.0
    %803 = vmatprep.subr.mxu0 0.0
    %804 = vmatpush2.xpose.msra.mxu0 0.0
    %805 = vmatprep.subr.mxu0 0.0
    %806 = vmatpush2.xpose.msra.mxu0 0.0
    %807 = vmatprep.subr.mxu0 0.0
    %808 = vmatpush2.xpose.msra.mxu0 0.0
    %809 = vmatprep.subr.mxu0 0.0
    %810 = vmatpush2.xpose.msra.mxu0 0.0
    %811 = vmatprep.subr.mxu0 0.0
    %812 = vmatpush2.xpose.msra.mxu0 0.0
    %813 = vmatprep.subr.mxu0 0.0
    %814 = vmatpush2.xpose.msra.mxu0 0.0
    %815 = vmatprep.subr.mxu0 0.0
    %816 = vmatpush2.xpose.msra.mxu0 0.0
    %817 = vmatprep.subr.mxu0 0.0
    %818 = vmatpush2.xpose.msra.mxu0 0.0
    %819 = vmatprep.subr.mxu0 0.0
    %820 = vmatpush2.xpose.msra.mxu0 0.0
    %821 = vmatprep.subr.mxu0 0.0
    %822 = vmatpush2.xpose.msra.mxu0 0.0
    %823 = vmatprep.subr.mxu0 0.0
    %824 = vmatpush2.xpose.msra.mxu0 0.0
    %825 = vmatprep.subr.mxu0 0.0
    %826 = vmatpush2.xpose.msra.mxu0 0.0
    %827 = vmatprep.subr.mxu0 0.0
    %828 = vmatpush2.xpose.msra.mxu0 0.0
    %829 = vmatprep.subr.mxu0 0.0
    %830 = vmatpush2.xpose.msra.mxu0 0.0
    %831 = vmatprep.subr.mxu0 0.0
    %832 = vmatpush2.xpose.msra.mxu0 0.0
    %833 = vmatprep.mubr.f32.mxu0 0.0
    %834 = vmatmul.mubr.f32.gmra.mxu0 %v759
    %v835 = vpop.f32.mrf.mxu0
    %v836 = vadd.f32 0.0, %v835
    %v837 = vpop.f32.mrf.mxu0
    %838 = vdwg.mxu0
    %v839 = vmul.f32 %v836, 0.35355338
    %s840 = scalar_lea.vmem [#allocation5], 8
    %v841 = vld [vmem:[%s840] sm:$0xff]
    %v842 = vadd.f32 %v839, %v841
    %v843 = vsel %vm291, %v842, -inf
    %844 = vmax.xlane.f32.xlu0 %v843
    %v845 = vpop.xlane.xlu0 %844
    %v846 = vsub.f32 %v842, %v845
    %v847 = vmul.f32 %v846, 1.442695
    %v848 = vpow.pop %v847
    %v850 = vsel %vm291, %v848, 0
    %852 = vmatprep.subr.mxu0 0.0
    %853 = vmatpush1.msra.mxu0 0.0
    %854 = vmatprep.subr.mxu0 0.0
    %855 = vmatpush1.msra.mxu0 0.0
    %856 = vmatprep.subr.mxu0 0.0
    %857 = vmatpush1.msra.mxu0 0.0
    %858 = vmatprep.subr.mxu0 0.0
    %859 = vmatpush1.msra.mxu0 0.0
    %860 = vmatprep.subr.mxu0 0.0
    %861 = vmatpush1.msra.mxu0 0.0
    %862 = vmatprep.subr.mxu0 0.0
    %863 = vmatpush1.msra.mxu0 0.0
    %864 = vmatprep.subr.mxu0 0.0
    %865 = vmatpush1.msra.mxu0 0.0
    %866 = vmatprep.subr.mxu0 0.0
    %867 = vmatpush1.msra.mxu0 0.0
    %868 = vmatprep.subr.mxu0 0.0
    %869 = vmatpush1.msra.mxu0 0.0
    %870 = vmatprep.subr.mxu0 0.0
    %871 = vmatpush1.msra.mxu0 0.0
    %872 = vmatprep.subr.mxu0 0.0
    %873 = vmatpush1.msra.mxu0 0.0
    %874 = vmatprep.subr.mxu0 0.0
    %875 = vmatpush1.msra.mxu0 0.0
    %876 = vmatprep.subr.mxu0 0.0
    %877 = vmatpush1.msra.mxu0 %v434
    %878 = vmatprep.subr.mxu0 0.0
    %879 = vmatpush1.msra.mxu0 %v433
    %880 = vmatprep.subr.mxu0 0.0
    %881 = vmatpush1.msra.mxu0 %v432
    %882 = vmatprep.subr.mxu0 0.0
    %883 = vmatpush1.msra.mxu0 %v431
    %884 = vmatprep.subr.mxu0 0.0
    %885 = vmatpush2.msra.mxu0 0.0
    %886 = vmatprep.subr.mxu0 0.0
    %887 = vmatpush2.msra.mxu0 0.0
    %888 = vmatprep.subr.mxu0 0.0
    %889 = vmatpush2.msra.mxu0 0.0
    %890 = vmatprep.subr.mxu0 0.0
    %891 = vmatpush2.msra.mxu0 0.0
    %892 = vmatprep.subr.mxu0 0.0
    %893 = vmatpush2.msra.mxu0 0.0
    %894 = vmatprep.subr.mxu0 0.0
    %895 = vmatpush2.msra.mxu0 0.0
    %896 = vmatprep.subr.mxu0 0.0
    %897 = vmatpush2.msra.mxu0 0.0
    %898 = vmatprep.subr.mxu0 0.0
    %899 = vmatpush2.msra.mxu0 0.0
    %900 = vmatprep.subr.mxu0 0.0
    %901 = vmatpush2.msra.mxu0 0.0
    %902 = vmatprep.subr.mxu0 0.0
    %903 = vmatpush2.msra.mxu0 0.0
    %904 = vmatprep.subr.mxu0 0.0
    %905 = vmatpush2.msra.mxu0 0.0
    %906 = vmatprep.subr.mxu0 0.0
    %907 = vmatpush2.msra.mxu0 0.0
    %908 = vmatprep.subr.mxu0 0.0
    %909 = vmatpush2.msra.mxu0 0.0
    %910 = vmatprep.subr.mxu0 0.0
    %911 = vmatpush2.msra.mxu0 0.0
    %912 = vmatprep.subr.mxu0 0.0
    %913 = vmatpush2.msra.mxu0 0.0
    %914 = vmatprep.subr.mxu0 0.0
    %915 = vmatpush2.msra.mxu0 0.0
    %916 = vmatprep.mubr.f32.mxu0 0.0
    %917 = vmatmul.mubr.f32.gmra.mxu0 %v850
    %v918 = vpop.f32.mrf.mxu0
    %v919 = vadd.f32 0.0, %v918
    %v920 = vpop.f32.mrf.mxu0
    %921 = vdwg.mxu0
    %v922 = vrcp.pop %v919
    %v923 = vmul.f32 %v848, %v922
    %s924 = scalar_lea.vmem [#allocation29], 8
    %925 = vst.msk [vmem:[%s924] sm:$0xff] %vm291, %v923
    %930 = vrot.lane.b32.xlu0 %v742, 64
    %v931 = vpop.permute.xlu0 %930
    %932 = vrot.lane.b32.xlu0 %v743, 64
    %v933 = vpop.permute.xlu0 %932
    %934 = vrot.lane.b32.xlu0 %v744, 64
    %v935 = vpop.permute.xlu0 %934
    %936 = vrot.lane.b32.xlu0 %v745, 64
    %v937 = vpop.permute.xlu0 %936
    %v943 = vsel %vm291, %v923, 0
    %945 = vmatprep.subr.mxu0 0.0
    %946 = vmatpush1.msra.mxu0 0.0
    %947 = vmatprep.subr.mxu0 0.0
    %948 = vmatpush1.msra.mxu0 0.0
    %949 = vmatprep.subr.mxu0 0.0
    %950 = vmatpush1.msra.mxu0 0.0
    %951 = vmatprep.subr.mxu0 0.0
    %952 = vmatpush1.msra.mxu0 0.0
    %953 = vmatprep.subr.mxu0 0.0
    %954 = vmatpush1.msra.mxu0 0.0
    %955 = vmatprep.subr.mxu0 0.0
    %956 = vmatpush1.msra.mxu0 0.0
    %957 = vmatprep.subr.mxu0 0.0
    %958 = vmatpush1.msra.mxu0 0.0
    %959 = vmatprep.subr.mxu0 0.0
    %960 = vmatpush1.msra.mxu0 0.0
    %961 = vmatprep.subr.mxu0 0.0
    %962 = vmatpush1.msra.mxu0 0.0
    %963 = vmatprep.subr.mxu0 0.0
    %964 = vmatpush1.msra.mxu0 0.0
    %965 = vmatprep.subr.mxu0 0.0
    %966 = vmatpush1.msra.mxu0 0.0
    %967 = vmatprep.subr.mxu0 0.0
    %968 = vmatpush1.msra.mxu0 0.0
    %969 = vmatprep.subr.mxu0 0.0
    %970 = vmatpush1.msra.mxu0 %v937
    %971 = vmatprep.subr.mxu0 0.0
    %972 = vmatpush1.msra.mxu0 %v935
    %973 = vmatprep.subr.mxu0 0.0
    %974 = vmatpush1.msra.mxu0 %v933
    %975 = vmatprep.subr.mxu0 0.0
    %976 = vmatpush1.msra.mxu0 %v931
    %977 = vmatprep.subr.mxu0 0.0
    %978 = vmatpush2.msra.mxu0 0.0
    %979 = vmatprep.subr.mxu0 0.0
    %980 = vmatpush2.msra.mxu0 0.0
    %981 = vmatprep.subr.mxu0 0.0
    %982 = vmatpush2.msra.mxu0 0.0
    %983 = vmatprep.subr.mxu0 0.0
    %984 = vmatpush2.msra.mxu0 0.0
    %985 = vmatprep.subr.mxu0 0.0
    %986 = vmatpush2.msra.mxu0 0.0
    %987 = vmatprep.subr.mxu0 0.0
    %988 = vmatpush2.msra.mxu0 0.0
    %989 = vmatprep.subr.mxu0 0.0
    %990 = vmatpush2.msra.mxu0 0.0
    %991 = vmatprep.subr.mxu0 0.0
    %992 = vmatpush2.msra.mxu0 0.0
    %993 = vmatprep.subr.mxu0 0.0
    %994 = vmatpush2.msra.mxu0 0.0
    %995 = vmatprep.subr.mxu0 0.0
    %996 = vmatpush2.msra.mxu0 0.0
    %997 = vmatprep.subr.mxu0 0.0
    %998 = vmatpush2.msra.mxu0 0.0
    %999 = vmatprep.subr.mxu0 0.0
    %1000 = vmatpush2.msra.mxu0 0.0
    %1001 = vmatprep.subr.mxu0 0.0
    %1002 = vmatpush2.msra.mxu0 0.0
    %1003 = vmatprep.subr.mxu0 0.0
    %1004 = vmatpush2.msra.mxu0 0.0
    %1005 = vmatprep.subr.mxu0 0.0
    %1006 = vmatpush2.msra.mxu0 0.0
    %1007 = vmatprep.subr.mxu0 0.0
    %1008 = vmatpush2.msra.mxu0 0.0
    %1009 = vmatprep.mubr.f32.mxu0 0.0
    %1010 = vmatmul.mubr.f32.gmra.mxu0 %v943
    %v1011 = vpop.f32.mrf.mxu0
    %v1012 = vadd.f32 0.0, %v1011
    %v1013 = vpop.f32.mrf.mxu0
    %1014 = vdwg.mxu0
    %v1015 = vld [vmem:[%s6] sm:$0xff]
    %v1016 = vld [vmem:[%s6 + $0x8] sm:$0xff]
    %v1017 = vld [vmem:[%s6 + $0x10] sm:$0xff]
    %v1018 = vld [vmem:[%s6 + $0x18] sm:$0xff]
    %v1019 = vld [vmem:[#allocation10] sm:$0x1]
    %v1021 = vlaneseq
    %v1022 = vshrl.u32 %v1021, 7
    %v1023 = vsub.s32 0, %v1022
    %v1024 = vrot.slane %v1019, %v1023
    %v1027 = vsel %vm291, %v735, 0
    %v1030 = vsel %vm291, %v1012, 0
    %1032 = vmatprep.subr.mxu0 0.0
    %1033 = vmatpush1.msra.mxu0 0.0
    %1034 = vmatprep.subr.mxu0 0.0
    %1035 = vmatpush1.msra.mxu0 0.0
    %1036 = vmatprep.subr.mxu0 0.0
    %1037 = vmatpush1.msra.mxu0 0.0
    %1038 = vmatprep.subr.mxu0 0.0
    %1039 = vmatpush1.msra.mxu0 0.0
    %1040 = vmatprep.subr.mxu0 0.0
    %1041 = vmatpush1.msra.mxu0 0.0
    %1042 = vmatprep.subr.mxu0 0.0
    %1043 = vmatpush1.msra.mxu0 0.0
    %1044 = vmatprep.subr.mxu0 0.0
    %1045 = vmatpush1.msra.mxu0 0.0
    %1046 = vmatprep.subr.mxu0 0.0
    %1047 = vmatpush1.msra.mxu0 0.0
    %1048 = vmatprep.subr.mxu0 0.0
    %1049 = vmatpush1.msra.mxu0 0.0
    %1050 = vmatprep.subr.mxu0 0.0
    %1051 = vmatpush1.msra.mxu0 0.0
    %1052 = vmatprep.subr.mxu0 0.0
    %1053 = vmatpush1.msra.mxu0 0.0
    %1054 = vmatprep.subr.mxu0 0.0
    %1055 = vmatpush1.msra.mxu0 0.0
    %1056 = vmatprep.subr.mxu0 0.0
    %1057 = vmatpush1.msra.mxu0 %v1018
    %1058 = vmatprep.subr.mxu0 0.0
    %1059 = vmatpush1.msra.mxu0 %v1017
    %1060 = vmatprep.subr.mxu0 0.0
    %1061 = vmatpush1.msra.mxu0 %v1016
    %1062 = vmatprep.subr.mxu0 0.0
    %1063 = vmatpush1.msra.mxu0 %v1015
    %1064 = vmatprep.subr.mxu0 0.0
    %1065 = vmatpush2.msra.mxu0 0.0
    %1066 = vmatprep.subr.mxu0 0.0
    %1067 = vmatpush2.msra.mxu0 0.0
    %1068 = vmatprep.subr.mxu0 0.0
    %1069 = vmatpush2.msra.mxu0 0.0
    %1070 = vmatprep.subr.mxu0 0.0
    %1071 = vmatpush2.msra.mxu0 0.0
    %1072 = vmatprep.subr.mxu0 0.0
    %1073 = vmatpush2.msra.mxu0 0.0
    %1074 = vmatprep.subr.mxu0 0.0
    %1075 = vmatpush2.msra.mxu0 0.0
    %1076 = vmatprep.subr.mxu0 0.0
    %1077 = vmatpush2.msra.mxu0 0.0
    %1078 = vmatprep.subr.mxu0 0.0
    %1079 = vmatpush2.msra.mxu0 0.0
    %1080 = vmatprep.subr.mxu0 0.0
    %1081 = vmatpush2.msra.mxu0 0.0
    %1082 = vmatprep.subr.mxu0 0.0
    %1083 = vmatpush2.msra.mxu0 0.0
    %1084 = vmatprep.subr.mxu0 0.0
    %1085 = vmatpush2.msra.mxu0 0.0
    %1086 = vmatprep.subr.mxu0 0.0
    %1087 = vmatpush2.msra.mxu0 0.0
    %1088 = vmatprep.subr.mxu0 0.0
    %1089 = vmatpush2.msra.mxu0 0.0
    %1090 = vmatprep.subr.mxu0 0.0
    %1091 = vmatpush2.msra.mxu0 0.0
    %1092 = vmatprep.subr.mxu0 0.0
    %1093 = vmatpush2.msra.mxu0 0.0
    %1094 = vmatprep.subr.mxu0 0.0
    %1095 = vmatpush2.msra.mxu0 0.0
    %1096 = vmatprep.mubr.f32.mxu0 0.0
    %1097 = vmatmul.mubr.f32.gmra.mxu0 %v1027
    %v1098 = vpop.f32.mrf.mxu0
    %v1099 = vadd.f32 %v1024, %v1098
    %v1100 = vpop.f32.mrf.mxu0
    %1101 = vmatprep.mubr.f32.mxu0 0.0
    %1102 = vmatmul.mubr.f32.gmra.mxu0 %v1030
    %v1103 = vpop.f32.mrf.mxu0
    %v1104 = vadd.f32 %v1024, %v1103
    %v1105 = vpop.f32.mrf.mxu0
    %1106 = vdwg.mxu0
    %v1107 = vadd.f32 %v282, %v1099
    %v1108 = vadd.f32 %v283, %v1104
    %s1109 = scalar_lea.vmem [#allocation25], 2
    %v1110 = vld [vmem:[%s1109] sm:$0x1]
    %s1111 = scalar_lea.vmem [#allocation25], 3
    %v1112 = vld [vmem:[%s1111] sm:$0x1]
    %v1113 = vsel %vm291, %v1107, 0.0
    %1114 = vadd.xlane.f32.xlu0 %v1113
    %v1115 = vpop.xlane.xlu0 %1114
    %v1116 = vsel %vm291, %v1108, 0.0
    %1117 = vadd.xlane.f32.xlu0 %v1116
    %v1118 = vpop.xlane.xlu0 %1117
    %v1119 = vmul.f32 %v1115, %v298
    %v1120 = vmul.f32 %v1118, %v298
    %v1121 = vsub.f32 %v1107, %v1119
    %v1122 = vsub.f32 %v1108, %v1120
    %v1123 = vmul.f32 %v1121, %v1121
    %v1124 = vmul.f32 %v1122, %v1122
    %v1125 = vsel %vm291, %v1123, 0.0
    %1126 = vadd.xlane.f32.xlu0 %v1125
    %v1127 = vpop.xlane.xlu0 %1126
    %v1128 = vsel %vm291, %v1124, 0.0
    %1129 = vadd.xlane.f32.xlu0 %v1128
    %v1130 = vpop.xlane.xlu0 %1129
    %v1131 = vmul.f32 %v1127, %v298
    %v1132 = vmul.f32 %v1130, %v298
    %v1133 = vadd.f32 %v1131, 1e-06
    %v1134 = vadd.f32 %v1132, 1e-06
    %v1135 = vrsqrt.pop %v1133
    %v1136 = vrsqrt.pop %v1134
    %v1137 = vmul.f32 %v1121, %v1135
    %v1138 = vmul.f32 %v1122, %v1136
    %v1140 = vlaneseq
    %v1141 = vshrl.u32 %v1140, 7
    %v1142 = vsub.s32 0, %v1141
    %v1143 = vrot.slane %v1110, %v1142
    %v1145 = vmul.f32 %v1137, %v1143
    %v1146 = vmul.f32 %v1138, %v1143
    %v1148 = vlaneseq
    %v1149 = vshrl.u32 %v1148, 7
    %v1150 = vsub.s32 0, %v1149
    %v1151 = vrot.slane %v1112, %v1150
    %v1153 = vadd.f32 %v1145, %v1151
    %v1154 = vadd.f32 %v1146, %v1151
    %v1155 = vld [vmem:[#allocation11] sm:$0xff]
    %v1156 = vld [vmem:[#allocation11 + $0x8] sm:$0xff]
    %v1157 = vld [vmem:[#allocation11 + $0x10] sm:$0xff]
    %v1158 = vld [vmem:[#allocation11 + $0x18] sm:$0xff]
    %v1159 = vld [vmem:[#allocation13] sm:$0x1]
    %v1161 = vlaneseq
    %v1162 = vshrl.u32 %v1161, 7
    %v1163 = vsub.s32 0, %v1162
    %v1164 = vrot.slane %v1159, %v1163
    %v1167 = vsel %vm291, %v1153, 0
    %v1170 = vsel %vm291, %v1154, 0
    %1172 = vmatprep.subr.mxu0 0.0
    %1173 = vmatpush1.msra.mxu0 0.0
    %1174 = vmatprep.subr.mxu0 0.0
    %1175 = vmatpush1.msra.mxu0 0.0
    %1176 = vmatprep.subr.mxu0 0.0
    %1177 = vmatpush1.msra.mxu0 0.0
    %1178 = vmatprep.subr.mxu0 0.0
    %1179 = vmatpush1.msra.mxu0 0.0
    %1180 = vmatprep.subr.mxu0 0.0
    %1181 = vmatpush1.msra.mxu0 0.0
    %1182 = vmatprep.subr.mxu0 0.0
    %1183 = vmatpush1.msra.mxu0 0.0
    %1184 = vmatprep.subr.mxu0 0.0
    %1185 = vmatpush1.msra.mxu0 0.0
    %1186 = vmatprep.subr.mxu0 0.0
    %1187 = vmatpush1.msra.mxu0 0.0
    %1188 = vmatprep.subr.mxu0 0.0
    %1189 = vmatpush1.msra.mxu0 0.0
    %1190 = vmatprep.subr.mxu0 0.0
    %1191 = vmatpush1.msra.mxu0 0.0
    %1192 = vmatprep.subr.mxu0 0.0
    %1193 = vmatpush1.msra.mxu0 0.0
    %1194 = vmatprep.subr.mxu0 0.0
    %1195 = vmatpush1.msra.mxu0 0.0
    %1196 = vmatprep.subr.mxu0 0.0
    %1197 = vmatpush1.msra.mxu0 %v1158
    %1198 = vmatprep.subr.mxu0 0.0
    %1199 = vmatpush1.msra.mxu0 %v1157
    %1200 = vmatprep.subr.mxu0 0.0
    %1201 = vmatpush1.msra.mxu0 %v1156
    %1202 = vmatprep.subr.mxu0 0.0
    %1203 = vmatpush1.msra.mxu0 %v1155
    %1204 = vmatprep.subr.mxu0 0.0
    %1205 = vmatpush2.msra.mxu0 0.0
    %1206 = vmatprep.subr.mxu0 0.0
    %1207 = vmatpush2.msra.mxu0 0.0
    %1208 = vmatprep.subr.mxu0 0.0
    %1209 = vmatpush2.msra.mxu0 0.0
    %1210 = vmatprep.subr.mxu0 0.0
    %1211 = vmatpush2.msra.mxu0 0.0
    %1212 = vmatprep.subr.mxu0 0.0
    %1213 = vmatpush2.msra.mxu0 0.0
    %1214 = vmatprep.subr.mxu0 0.0
    %1215 = vmatpush2.msra.mxu0 0.0
    %1216 = vmatprep.subr.mxu0 0.0
    %1217 = vmatpush2.msra.mxu0 0.0
    %1218 = vmatprep.subr.mxu0 0.0
    %1219 = vmatpush2.msra.mxu0 0.0
    %1220 = vmatprep.subr.mxu0 0.0
    %1221 = vmatpush2.msra.mxu0 0.0
    %1222 = vmatprep.subr.mxu0 0.0
    %1223 = vmatpush2.msra.mxu0 0.0
    %1224 = vmatprep.subr.mxu0 0.0
    %1225 = vmatpush2.msra.mxu0 0.0
    %1226 = vmatprep.subr.mxu0 0.0
    %1227 = vmatpush2.msra.mxu0 0.0
    %1228 = vmatprep.subr.mxu0 0.0
    %1229 = vmatpush2.msra.mxu0 0.0
    %1230 = vmatprep.subr.mxu0 0.0
    %1231 = vmatpush2.msra.mxu0 0.0
    %1232 = vmatprep.subr.mxu0 0.0
    %1233 = vmatpush2.msra.mxu0 0.0
    %1234 = vmatprep.subr.mxu0 0.0
    %1235 = vmatpush2.msra.mxu0 0.0
    %1236 = vmatprep.mubr.f32.mxu0 0.0
    %1237 = vmatmul.mubr.f32.gmra.mxu0 %v1167
    %v1238 = vpop.f32.mrf.mxu0
    %v1239 = vadd.f32 %v1164, %v1238
    %v1240 = vpop.f32.mrf.mxu0
    %1241 = vmatprep.mubr.f32.mxu0 0.0
    %1242 = vmatmul.mubr.f32.gmra.mxu0 %v1170
    %v1243 = vpop.f32.mrf.mxu0
    %v1244 = vadd.f32 %v1164, %v1243
    %v1245 = vpop.f32.mrf.mxu0
    %1246 = vdwg.mxu0
    %v1247 = vld [vmem:[#allocation14] sm:$0xff]
    %v1248 = vld [vmem:[#allocation14 + $0x8] sm:$0xff]
    %v1249 = vld [vmem:[#allocation14 + $0x10] sm:$0xff]
    %v1250 = vld [vmem:[#allocation14 + $0x18] sm:$0xff]
    %v1251 = vld [vmem:[#allocation16] sm:$0x1]
    %v1253 = vlaneseq
    %v1254 = vshrl.u32 %v1253, 7
    %v1255 = vsub.s32 0, %v1254
    %v1256 = vrot.slane %v1251, %v1255
    %v1259 = vsel %vm291, %v284, 0
    %v1262 = vsel %vm291, %v285, 0
    %v1265 = vsel %vm291, %v286, 0
    %v1268 = vsel %vm291, %v287, 0
    %1270 = vmatprep.subr.mxu0 0.0
    %1271 = vmatpush1.msra.mxu0 0.0
    %1272 = vmatprep.subr.mxu0 0.0
    %1273 = vmatpush1.msra.mxu0 0.0
    %1274 = vmatprep.subr.mxu0 0.0
    %1275 = vmatpush1.msra.mxu0 0.0
    %1276 = vmatprep.subr.mxu0 0.0
    %1277 = vmatpush1.msra.mxu0 0.0
    %1278 = vmatprep.subr.mxu0 0.0
    %1279 = vmatpush1.msra.mxu0 0.0
    %1280 = vmatprep.subr.mxu0 0.0
    %1281 = vmatpush1.msra.mxu0 0.0
    %1282 = vmatprep.subr.mxu0 0.0
    %1283 = vmatpush1.msra.mxu0 0.0
    %1284 = vmatprep.subr.mxu0 0.0
    %1285 = vmatpush1.msra.mxu0 0.0
    %1286 = vmatprep.subr.mxu0 0.0
    %1287 = vmatpush1.msra.mxu0 0.0
    %1288 = vmatprep.subr.mxu0 0.0
    %1289 = vmatpush1.msra.mxu0 0.0
    %1290 = vmatprep.subr.mxu0 0.0
    %1291 = vmatpush1.msra.mxu0 0.0
    %1292 = vmatprep.subr.mxu0 0.0
    %1293 = vmatpush1.msra.mxu0 0.0
    %1294 = vmatprep.subr.mxu0 0.0
    %1295 = vmatpush1.msra.mxu0 %v1250
    %1296 = vmatprep.subr.mxu0 0.0
    %1297 = vmatpush1.msra.mxu0 %v1249
    %1298 = vmatprep.subr.mxu0 0.0
    %1299 = vmatpush1.msra.mxu0 %v1248
    %1300 = vmatprep.subr.mxu0 0.0
    %1301 = vmatpush1.msra.mxu0 %v1247
    %1302 = vmatprep.subr.mxu0 0.0
    %1303 = vmatpush2.msra.mxu0 0.0
    %1304 = vmatprep.subr.mxu0 0.0
    %1305 = vmatpush2.msra.mxu0 0.0
    %1306 = vmatprep.subr.mxu0 0.0
    %1307 = vmatpush2.msra.mxu0 0.0
    %1308 = vmatprep.subr.mxu0 0.0
    %1309 = vmatpush2.msra.mxu0 0.0
    %1310 = vmatprep.subr.mxu0 0.0
    %1311 = vmatpush2.msra.mxu0 0.0
    %1312 = vmatprep.subr.mxu0 0.0
    %1313 = vmatpush2.msra.mxu0 0.0
    %1314 = vmatprep.subr.mxu0 0.0
    %1315 = vmatpush2.msra.mxu0 0.0
    %1316 = vmatprep.subr.mxu0 0.0
    %1317 = vmatpush2.msra.mxu0 0.0
    %1318 = vmatprep.subr.mxu0 0.0
    %1319 = vmatpush2.msra.mxu0 0.0
    %1320 = vmatprep.subr.mxu0 0.0
    %1321 = vmatpush2.msra.mxu0 0.0
    %1322 = vmatprep.subr.mxu0 0.0
    %1323 = vmatpush2.msra.mxu0 0.0
    %1324 = vmatprep.subr.mxu0 0.0
    %1325 = vmatpush2.msra.mxu0 0.0
    %1326 = vmatprep.subr.mxu0 0.0
    %1327 = vmatpush2.msra.mxu0 0.0
    %1328 = vmatprep.subr.mxu0 0.0
    %1329 = vmatpush2.msra.mxu0 0.0
    %1330 = vmatprep.subr.mxu0 0.0
    %1331 = vmatpush2.msra.mxu0 0.0
    %1332 = vmatprep.subr.mxu0 0.0
    %1333 = vmatpush2.msra.mxu0 0.0
    %1334 = vmatprep.mubr.f32.mxu0 0.0
    %1335 = vmatmul.mubr.f32.gmra.mxu0 %v1259
    %v1336 = vpop.f32.mrf.mxu0
    %v1337 = vadd.f32 %v1256, %v1336
    %v1338 = vpop.f32.mrf.mxu0
    %1339 = vmatprep.mubr.f32.mxu0 0.0
    %1340 = vmatmul.mubr.f32.gmra.mxu0 %v1262
    %v1341 = vpop.f32.mrf.mxu0
    %v1342 = vadd.f32 %v1256, %v1341
    %v1343 = vpop.f32.mrf.mxu0
    %1344 = vmatprep.mubr.f32.mxu0 0.0
    %1345 = vmatmul.mubr.f32.gmra.mxu0 %v1265
    %v1346 = vpop.f32.mrf.mxu0
    %v1347 = vadd.f32 %v1256, %v1346
    %v1348 = vpop.f32.mrf.mxu0
    %1349 = vmatprep.mubr.f32.mxu0 0.0
    %1350 = vmatmul.mubr.f32.gmra.mxu0 %v1268
    %v1351 = vpop.f32.mrf.mxu0
    %v1352 = vadd.f32 %v1256, %v1351
    %v1353 = vpop.f32.mrf.mxu0
    %1354 = vdwg.mxu0
    %v1355 = vld [vmem:[%s21] sm:$0xff]
    %v1356 = vld [vmem:[%s21 + $0x8] sm:$0xff]
    %v1357 = vld [vmem:[%s21 + $0x10] sm:$0xff]
    %v1358 = vld [vmem:[%s21 + $0x18] sm:$0xff]
    %v1359 = vld [vmem:[%s21 + $0x20] sm:$0xff]
    %v1360 = vld [vmem:[%s21 + $0x28] sm:$0xff]
    %v1361 = vld [vmem:[%s21 + $0x30] sm:$0xff]
    %v1362 = vld [vmem:[%s21 + $0x38] sm:$0xff]
    %v1363 = vld [vmem:[%s22] sm:$0xff]
    %v1364 = vld [vmem:[%s22 + $0x8] sm:$0xff]
    %v1365 = vld [vmem:[%s22 + $0x10] sm:$0xff]
    %v1366 = vld [vmem:[%s22 + $0x18] sm:$0xff]
    %v1367 = vld [vmem:[%s22 + $0x20] sm:$0xff]
    %v1368 = vld [vmem:[%s22 + $0x28] sm:$0xff]
    %v1369 = vld [vmem:[%s22 + $0x30] sm:$0xff]
    %v1370 = vld [vmem:[%s22 + $0x38] sm:$0xff]
    %v1371 = vmul.f32 %v1337, %v1355
    %v1372 = vmul.f32 %v1342, %v1356
    %v1373 = vmul.f32 %v1337, %v1357
    %v1374 = vmul.f32 %v1342, %v1358
    %v1375 = vmul.f32 %v1337, %v1359
    %v1376 = vmul.f32 %v1342, %v1360
    %v1377 = vmul.f32 %v1337, %v1361
    %v1378 = vmul.f32 %v1342, %v1362
    %1387 = vrot.lane.b32.xlu0 %v1355, 32
    %v1388 = vpop.permute.xlu0 %1387
    %1389 = vrot.lane.b32.xlu0 %v1356, 32
    %v1390 = vpop.permute.xlu0 %1389
    %1391 = vrot.lane.b32.xlu0 %v1357, 32
    %v1392 = vpop.permute.xlu0 %1391
    %1393 = vrot.lane.b32.xlu0 %v1358, 32
    %v1394 = vpop.permute.xlu0 %1393
    %1395 = vrot.lane.b32.xlu0 %v1359, 32
    %v1396 = vpop.permute.xlu0 %1395
    %1397 = vrot.lane.b32.xlu0 %v1360, 32
    %v1398 = vpop.permute.xlu0 %1397
    %1399 = vrot.lane.b32.xlu0 %v1361, 32
    %v1400 = vpop.permute.xlu0 %1399
    %1401 = vrot.lane.b32.xlu0 %v1362, 32
    %v1402 = vpop.permute.xlu0 %1401
    %v1411 = vmul.f32 %v1337, %v1388
    %v1412 = vmul.f32 %v1342, %v1390
    %v1413 = vmul.f32 %v1337, %v1392
    %v1414 = vmul.f32 %v1342, %v1394
    %v1415 = vmul.f32 %v1337, %v1396
    %v1416 = vmul.f32 %v1342, %v1398
    %v1417 = vmul.f32 %v1337, %v1400
    %v1418 = vmul.f32 %v1342, %v1402
    %v1420 = vsel %vm291, %v1239, 0
    %v1423 = vsel %vm291, %v1371, 0
    %v1426 = vsel %vm291, %v1372, 0
    %v1429 = vsel %vm291, %v1373, 0
    %v1432 = vsel %vm291, %v1374, 0
    %v1435 = vsel %vm291, %v1375, 0
    %v1438 = vsel %vm291, %v1376, 0
    %v1441 = vsel %vm291, %v1377, 0
    %v1444 = vsel %vm291, %v1378, 0
    %1446 = vmatprep.subr.mxu0 0.0
    %1447 = vmatpush1.xpose.msra.mxu0 0.0
    %1448 = vmatprep.subr.mxu0 0.0
    %1449 = vmatpush1.xpose.msra.mxu0 0.0
    %1450 = vmatprep.subr.mxu0 0.0
    %1451 = vmatpush1.xpose.msra.mxu0 0.0
    %1452 = vmatprep.subr.mxu0 0.0
    %1453 = vmatpush1.xpose.msra.mxu0 0.0
    %1454 = vmatprep.subr.mxu0 0.0
    %1455 = vmatpush1.xpose.msra.mxu0 0.0
    %1456 = vmatprep.subr.mxu0 0.0
    %1457 = vmatpush1.xpose.msra.mxu0 0.0
    %1458 = vmatprep.subr.mxu0 0.0
    %1459 = vmatpush1.xpose.msra.mxu0 0.0
    %1460 = vmatprep.subr.mxu0 0.0
    %1461 = vmatpush1.xpose.msra.mxu0 0.0
    %1462 = vmatprep.subr.mxu0 0.0
    %1463 = vmatpush1.xpose.msra.mxu0 %v1444
    %1464 = vmatprep.subr.mxu0 0.0
    %1465 = vmatpush1.xpose.msra.mxu0 %v1441
    %1466 = vmatprep.subr.mxu0 0.0
    %1467 = vmatpush1.xpose.msra.mxu0 %v1438
    %1468 = vmatprep.subr.mxu0 0.0
    %1469 = vmatpush1.xpose.msra.mxu0 %v1435
    %1470 = vmatprep.subr.mxu0 0.0
    %1471 = vmatpush1.xpose.msra.mxu0 %v1432
    %1472 = vmatprep.subr.mxu0 0.0
    %1473 = vmatpush1.xpose.msra.mxu0 %v1429
    %1474 = vmatprep.subr.mxu0 0.0
    %1475 = vmatpush1.xpose.msra.mxu0 %v1426
    %1476 = vmatprep.subr.mxu0 0.0
    %1477 = vmatpush1.xpose.msra.mxu0 %v1423
    %1478 = vmatprep.subr.mxu0 0.0
    %1479 = vmatpush2.xpose.msra.mxu0 0.0
    %1480 = vmatprep.subr.mxu0 0.0
    %1481 = vmatpush2.xpose.msra.mxu0 0.0
    %1482 = vmatprep.subr.mxu0 0.0
    %1483 = vmatpush2.xpose.msra.mxu0 0.0
    %1484 = vmatprep.subr.mxu0 0.0
    %1485 = vmatpush2.xpose.msra.mxu0 0.0
    %1486 = vmatprep.subr.mxu0 0.0
    %1487 = vmatpush2.xpose.msra.mxu0 0.0
    %1488 = vmatprep.subr.mxu0 0.0
    %1489 = vmatpush2.xpose.msra.mxu0 0.0
    %1490 = vmatprep.subr.mxu0 0.0
    %1491 = vmatpush2.xpose.msra.mxu0 0.0
    %1492 = vmatprep.subr.mxu0 0.0
    %1493 = vmatpush2.xpose.msra.mxu0 0.0
    %1494 = vmatprep.subr.mxu0 0.0
    %1495 = vmatpush2.xpose.msra.mxu0 0.0
    %1496 = vmatprep.subr.mxu0 0.0
    %1497 = vmatpush2.xpose.msra.mxu0 0.0
    %1498 = vmatprep.subr.mxu0 0.0
    %1499 = vmatpush2.xpose.msra.mxu0 0.0
    %1500 = vmatprep.subr.mxu0 0.0
    %1501 = vmatpush2.xpose.msra.mxu0 0.0
    %1502 = vmatprep.subr.mxu0 0.0
    %1503 = vmatpush2.xpose.msra.mxu0 0.0
    %1504 = vmatprep.subr.mxu0 0.0
    %1505 = vmatpush2.xpose.msra.mxu0 0.0
    %1506 = vmatprep.subr.mxu0 0.0
    %1507 = vmatpush2.xpose.msra.mxu0 0.0
    %1508 = vmatprep.subr.mxu0 0.0
    %1509 = vmatpush2.xpose.msra.mxu0 0.0
    %1510 = vmatprep.mubr.f32.mxu0 0.0
    %1511 = vmatmul.mubr.f32.gmra.mxu0 %v1420
    %v1512 = vpop.f32.mrf.mxu0
    %v1513 = vadd.f32 0.0, %v1512
    %v1514 = vpop.f32.mrf.mxu0
    %1515 = vdwg.mxu0
    %v1516 = vmul.f32 %v1513, 0.35355338
    %v1517 = vld [vmem:[#allocation7] sm:$0xff]
    %v1518 = vadd.f32 %v1516, %v1517
    %vm1519 = vcmask 523264
    %v1520 = vsel %vm1519, %v1518, -inf
    %1521 = vmax.xlane.f32.xlu0 %v1520
    %v1522 = vpop.xlane.xlu0 %1521
    %v1523 = vsub.f32 %v1518, %v1522
    %v1524 = vmul.f32 %v1523, 1.442695
    %v1525 = vpow.pop %v1524
    %v1527 = vsel %vm1519, %v1525, 0
    %1529 = vmatprep.subr.mxu0 0.0
    %1530 = vmatpush1.msra.mxu0 0.0
    %1531 = vmatprep.subr.mxu0 0.0
    %1532 = vmatpush1.msra.mxu0 0.0
    %1533 = vmatprep.subr.mxu0 0.0
    %1534 = vmatpush1.msra.mxu0 0.0
    %1535 = vmatprep.subr.mxu0 0.0
    %1536 = vmatpush1.msra.mxu0 0.0
    %1537 = vmatprep.subr.mxu0 0.0
    %1538 = vmatpush1.msra.mxu0 0.0
    %1539 = vmatprep.subr.mxu0 0.0
    %1540 = vmatpush1.msra.mxu0 0.0
    %1541 = vmatprep.subr.mxu0 0.0
    %1542 = vmatpush1.msra.mxu0 0.0
    %1543 = vmatprep.subr.mxu0 0.0
    %1544 = vmatpush1.msra.mxu0 0.0
    %1545 = vmatprep.subr.mxu0 0.0
    %1546 = vmatpush1.msra.mxu0 %v1370
    %1547 = vmatprep.subr.mxu0 0.0
    %1548 = vmatpush1.msra.mxu0 %v1369
    %1549 = vmatprep.subr.mxu0 0.0
    %1550 = vmatpush1.msra.mxu0 %v1368
    %1551 = vmatprep.subr.mxu0 0.0
    %1552 = vmatpush1.msra.mxu0 %v1367
    %1553 = vmatprep.subr.mxu0 0.0
    %1554 = vmatpush1.msra.mxu0 %v1366
    %1555 = vmatprep.subr.mxu0 0.0
    %1556 = vmatpush1.msra.mxu0 %v1365
    %1557 = vmatprep.subr.mxu0 0.0
    %1558 = vmatpush1.msra.mxu0 %v1364
    %1559 = vmatprep.subr.mxu0 0.0
    %1560 = vmatpush1.msra.mxu0 %v1363
    %1561 = vmatprep.subr.mxu0 0.0
    %1562 = vmatpush2.msra.mxu0 0.0
    %1563 = vmatprep.subr.mxu0 0.0
    %1564 = vmatpush2.msra.mxu0 0.0
    %1565 = vmatprep.subr.mxu0 0.0
    %1566 = vmatpush2.msra.mxu0 0.0
    %1567 = vmatprep.subr.mxu0 0.0
    %1568 = vmatpush2.msra.mxu0 0.0
    %1569 = vmatprep.subr.mxu0 0.0
    %1570 = vmatpush2.msra.mxu0 0.0
    %1571 = vmatprep.subr.mxu0 0.0
    %1572 = vmatpush2.msra.mxu0 0.0
    %1573 = vmatprep.subr.mxu0 0.0
    %1574 = vmatpush2.msra.mxu0 0.0
    %1575 = vmatprep.subr.mxu0 0.0
    %1576 = vmatpush2.msra.mxu0 0.0
    %1577 = vmatprep.subr.mxu0 0.0
    %1578 = vmatpush2.msra.mxu0 0.0
    %1579 = vmatprep.subr.mxu0 0.0
    %1580 = vmatpush2.msra.mxu0 0.0
    %1581 = vmatprep.subr.mxu0 0.0
    %1582 = vmatpush2.msra.mxu0 0.0
    %1583 = vmatprep.subr.mxu0 0.0
    %1584 = vmatpush2.msra.mxu0 0.0
    %1585 = vmatprep.subr.mxu0 0.0
    %1586 = vmatpush2.msra.mxu0 0.0
    %1587 = vmatprep.subr.mxu0 0.0
    %1588 = vmatpush2.msra.mxu0 0.0
    %1589 = vmatprep.subr.mxu0 0.0
    %1590 = vmatpush2.msra.mxu0 0.0
    %1591 = vmatprep.subr.mxu0 0.0
    %1592 = vmatpush2.msra.mxu0 0.0
    %1593 = vmatprep.mubr.f32.mxu0 0.0
    %1594 = vmatmul.mubr.f32.gmra.mxu0 %v1527
    %v1595 = vpop.f32.mrf.mxu0
    %v1596 = vadd.f32 0.0, %v1595
    %v1597 = vpop.f32.mrf.mxu0
    %1598 = vdwg.mxu0
    %v1599 = vrcp.pop %v1596
    %v1600 = vmul.f32 %v1525, %v1599
    %1601 = vst.msk [vmem:[#allocation31] sm:$0xff] %vm1519, %v1600
    %1610 = vrot.lane.b32.xlu0 %v1411, 96
    %v1611 = vpop.permute.xlu0 %1610
    %1612 = vrot.lane.b32.xlu0 %v1412, 96
    %v1613 = vpop.permute.xlu0 %1612
    %1614 = vrot.lane.b32.xlu0 %v1413, 96
    %v1615 = vpop.permute.xlu0 %1614
    %1616 = vrot.lane.b32.xlu0 %v1414, 96
    %v1617 = vpop.permute.xlu0 %1616
    %1618 = vrot.lane.b32.xlu0 %v1415, 96
    %v1619 = vpop.permute.xlu0 %1618
    %1620 = vrot.lane.b32.xlu0 %v1416, 96
    %v1621 = vpop.permute.xlu0 %1620
    %1622 = vrot.lane.b32.xlu0 %v1417, 96
    %v1623 = vpop.permute.xlu0 %1622
    %1624 = vrot.lane.b32.xlu0 %v1418, 96
    %v1625 = vpop.permute.xlu0 %1624
    %v1635 = vsel %vm1519, %v1600, 0
    %1637 = vmatprep.subr.mxu0 0.0
    %1638 = vmatpush1.msra.mxu0 0.0
    %1639 = vmatprep.subr.mxu0 0.0
    %1640 = vmatpush1.msra.mxu0 0.0
    %1641 = vmatprep.subr.mxu0 0.0
    %1642 = vmatpush1.msra.mxu0 0.0
    %1643 = vmatprep.subr.mxu0 0.0
    %1644 = vmatpush1.msra.mxu0 0.0
    %1645 = vmatprep.subr.mxu0 0.0
    %1646 = vmatpush1.msra.mxu0 0.0
    %1647 = vmatprep.subr.mxu0 0.0
    %1648 = vmatpush1.msra.mxu0 0.0
    %1649 = vmatprep.subr.mxu0 0.0
    %1650 = vmatpush1.msra.mxu0 0.0
    %1651 = vmatprep.subr.mxu0 0.0
    %1652 = vmatpush1.msra.mxu0 0.0
    %1653 = vmatprep.subr.mxu0 0.0
    %1654 = vmatpush1.msra.mxu0 %v1625
    %1655 = vmatprep.subr.mxu0 0.0
    %1656 = vmatpush1.msra.mxu0 %v1623
    %1657 = vmatprep.subr.mxu0 0.0
    %1658 = vmatpush1.msra.mxu0 %v1621
    %1659 = vmatprep.subr.mxu0 0.0
    %1660 = vmatpush1.msra.mxu0 %v1619
    %1661 = vmatprep.subr.mxu0 0.0
    %1662 = vmatpush1.msra.mxu0 %v1617
    %1663 = vmatprep.subr.mxu0 0.0
    %1664 = vmatpush1.msra.mxu0 %v1615
    %1665 = vmatprep.subr.mxu0 0.0
    %1666 = vmatpush1.msra.mxu0 %v1613
    %1667 = vmatprep.subr.mxu0 0.0
    %1668 = vmatpush1.msra.mxu0 %v1611
    %1669 = vmatprep.subr.mxu0 0.0
    %1670 = vmatpush2.msra.mxu0 0.0
    %1671 = vmatprep.subr.mxu0 0.0
    %1672 = vmatpush2.msra.mxu0 0.0
    %1673 = vmatprep.subr.mxu0 0.0
    %1674 = vmatpush2.msra.mxu0 0.0
    %1675 = vmatprep.subr.mxu0 0.0
    %1676 = vmatpush2.msra.mxu0 0.0
    %1677 = vmatprep.subr.mxu0 0.0
    %1678 = vmatpush2.msra.mxu0 0.0
    %1679 = vmatprep.subr.mxu0 0.0
    %1680 = vmatpush2.msra.mxu0 0.0
    %1681 = vmatprep.subr.mxu0 0.0
    %1682 = vmatpush2.msra.mxu0 0.0
    %1683 = vmatprep.subr.mxu0 0.0
    %1684 = vmatpush2.msra.mxu0 0.0
    %1685 = vmatprep.subr.mxu0 0.0
    %1686 = vmatpush2.msra.mxu0 0.0
    %1687 = vmatprep.subr.mxu0 0.0
    %1688 = vmatpush2.msra.mxu0 0.0
    %1689 = vmatprep.subr.mxu0 0.0
    %1690 = vmatpush2.msra.mxu0 0.0
    %1691 = vmatprep.subr.mxu0 0.0
    %1692 = vmatpush2.msra.mxu0 0.0
    %1693 = vmatprep.subr.mxu0 0.0
    %1694 = vmatpush2.msra.mxu0 0.0
    %1695 = vmatprep.subr.mxu0 0.0
    %1696 = vmatpush2.msra.mxu0 0.0
    %1697 = vmatprep.subr.mxu0 0.0
    %1698 = vmatpush2.msra.mxu0 0.0
    %1699 = vmatprep.subr.mxu0 0.0
    %1700 = vmatpush2.msra.mxu0 0.0
    %1701 = vmatprep.mubr.f32.mxu0 0.0
    %1702 = vmatmul.mubr.f32.gmra.mxu0 %v1635
    %v1703 = vpop.f32.mrf.mxu0
    %v1704 = vadd.f32 0.0, %v1703
    %v1705 = vpop.f32.mrf.mxu0
    %1706 = vdwg.mxu0
    %v1707 = vmul.f32 %v1347, %v1355
    %v1708 = vmul.f32 %v1352, %v1356
    %v1709 = vmul.f32 %v1347, %v1357
    %v1710 = vmul.f32 %v1352, %v1358
    %v1711 = vmul.f32 %v1347, %v1359
    %v1712 = vmul.f32 %v1352, %v1360
    %v1713 = vmul.f32 %v1347, %v1361
    %v1714 = vmul.f32 %v1352, %v1362
    %v1715 = vmul.f32 %v1347, %v1388
    %v1716 = vmul.f32 %v1352, %v1390
    %v1717 = vmul.f32 %v1347, %v1392
    %v1718 = vmul.f32 %v1352, %v1394
    %v1719 = vmul.f32 %v1347, %v1396
    %v1720 = vmul.f32 %v1352, %v1398
    %v1721 = vmul.f32 %v1347, %v1400
    %v1722 = vmul.f32 %v1352, %v1402
    %v1724 = vsel %vm291, %v1244, 0
    %v1727 = vsel %vm291, %v1707, 0
    %v1730 = vsel %vm291, %v1708, 0
    %v1733 = vsel %vm291, %v1709, 0
    %v1736 = vsel %vm291, %v1710, 0
    %v1739 = vsel %vm291, %v1711, 0
    %v1742 = vsel %vm291, %v1712, 0
    %v1745 = vsel %vm291, %v1713, 0
    %v1748 = vsel %vm291, %v1714, 0
    %1750 = vmatprep.subr.mxu0 0.0
    %1751 = vmatpush1.xpose.msra.mxu0 0.0
    %1752 = vmatprep.subr.mxu0 0.0
    %1753 = vmatpush1.xpose.msra.mxu0 0.0
    %1754 = vmatprep.subr.mxu0 0.0
    %1755 = vmatpush1.xpose.msra.mxu0 0.0
    %1756 = vmatprep.subr.mxu0 0.0
    %1757 = vmatpush1.xpose.msra.mxu0 0.0
    %1758 = vmatprep.subr.mxu0 0.0
    %1759 = vmatpush1.xpose.msra.mxu0 0.0
    %1760 = vmatprep.subr.mxu0 0.0
    %1761 = vmatpush1.xpose.msra.mxu0 0.0
    %1762 = vmatprep.subr.mxu0 0.0
    %1763 = vmatpush1.xpose.msra.mxu0 0.0
    %1764 = vmatprep.subr.mxu0 0.0
    %1765 = vmatpush1.xpose.msra.mxu0 0.0
    %1766 = vmatprep.subr.mxu0 0.0
    %1767 = vmatpush1.xpose.msra.mxu0 %v1748
    %1768 = vmatprep.subr.mxu0 0.0
    %1769 = vmatpush1.xpose.msra.mxu0 %v1745
    %1770 = vmatprep.subr.mxu0 0.0
    %1771 = vmatpush1.xpose.msra.mxu0 %v1742
    %1772 = vmatprep.subr.mxu0 0.0
    %1773 = vmatpush1.xpose.msra.mxu0 %v1739
    %1774 = vmatprep.subr.mxu0 0.0
    %1775 = vmatpush1.xpose.msra.mxu0 %v1736
    %1776 = vmatprep.subr.mxu0 0.0
    %1777 = vmatpush1.xpose.msra.mxu0 %v1733
    %1778 = vmatprep.subr.mxu0 0.0
    %1779 = vmatpush1.xpose.msra.mxu0 %v1730
    %1780 = vmatprep.subr.mxu0 0.0
    %1781 = vmatpush1.xpose.msra.mxu0 %v1727
    %1782 = vmatprep.subr.mxu0 0.0
    %1783 = vmatpush2.xpose.msra.mxu0 0.0
    %1784 = vmatprep.subr.mxu0 0.0
    %1785 = vmatpush2.xpose.msra.mxu0 0.0
    %1786 = vmatprep.subr.mxu0 0.0
    %1787 = vmatpush2.xpose.msra.mxu0 0.0
    %1788 = vmatprep.subr.mxu0 0.0
    %1789 = vmatpush2.xpose.msra.mxu0 0.0
    %1790 = vmatprep.subr.mxu0 0.0
    %1791 = vmatpush2.xpose.msra.mxu0 0.0
    %1792 = vmatprep.subr.mxu0 0.0
    %1793 = vmatpush2.xpose.msra.mxu0 0.0
    %1794 = vmatprep.subr.mxu0 0.0
    %1795 = vmatpush2.xpose.msra.mxu0 0.0
    %1796 = vmatprep.subr.mxu0 0.0
    %1797 = vmatpush2.xpose.msra.mxu0 0.0
    %1798 = vmatprep.subr.mxu0 0.0
    %1799 = vmatpush2.xpose.msra.mxu0 0.0
    %1800 = vmatprep.subr.mxu0 0.0
    %1801 = vmatpush2.xpose.msra.mxu0 0.0
    %1802 = vmatprep.subr.mxu0 0.0
    %1803 = vmatpush2.xpose.msra.mxu0 0.0
    %1804 = vmatprep.subr.mxu0 0.0
    %1805 = vmatpush2.xpose.msra.mxu0 0.0
    %1806 = vmatprep.subr.mxu0 0.0
    %1807 = vmatpush2.xpose.msra.mxu0 0.0
    %1808 = vmatprep.subr.mxu0 0.0
    %1809 = vmatpush2.xpose.msra.mxu0 0.0
    %1810 = vmatprep.subr.mxu0 0.0
    %1811 = vmatpush2.xpose.msra.mxu0 0.0
    %1812 = vmatprep.subr.mxu0 0.0
    %1813 = vmatpush2.xpose.msra.mxu0 0.0
    %1814 = vmatprep.mubr.f32.mxu0 0.0
    %1815 = vmatmul.mubr.f32.gmra.mxu0 %v1724
    %v1816 = vpop.f32.mrf.mxu0
    %v1817 = vadd.f32 0.0, %v1816
    %v1818 = vpop.f32.mrf.mxu0
    %1819 = vdwg.mxu0
    %v1820 = vmul.f32 %v1817, 0.35355338
    %s1821 = scalar_lea.vmem [#allocation7], 8
    %v1822 = vld [vmem:[%s1821] sm:$0xff]
    %v1823 = vadd.f32 %v1820, %v1822
    %v1824 = vsel %vm1519, %v1823, -inf
    %1825 = vmax.xlane.f32.xlu0 %v1824
    %v1826 = vpop.xlane.xlu0 %1825
    %v1827 = vsub.f32 %v1823, %v1826
    %v1828 = vmul.f32 %v1827, 1.442695
    %v1829 = vpow.pop %v1828
    %v1831 = vsel %vm1519, %v1829, 0
    %1833 = vmatprep.subr.mxu0 0.0
    %1834 = vmatpush1.msra.mxu0 0.0
    %1835 = vmatprep.subr.mxu0 0.0
    %1836 = vmatpush1.msra.mxu0 0.0
    %1837 = vmatprep.subr.mxu0 0.0
    %1838 = vmatpush1.msra.mxu0 0.0
    %1839 = vmatprep.subr.mxu0 0.0
    %1840 = vmatpush1.msra.mxu0 0.0
    %1841 = vmatprep.subr.mxu0 0.0
    %1842 = vmatpush1.msra.mxu0 0.0
    %1843 = vmatprep.subr.mxu0 0.0
    %1844 = vmatpush1.msra.mxu0 0.0
    %1845 = vmatprep.subr.mxu0 0.0
    %1846 = vmatpush1.msra.mxu0 0.0
    %1847 = vmatprep.subr.mxu0 0.0
    %1848 = vmatpush1.msra.mxu0 0.0
    %1849 = vmatprep.subr.mxu0 0.0
    %1850 = vmatpush1.msra.mxu0 %v1370
    %1851 = vmatprep.subr.mxu0 0.0
    %1852 = vmatpush1.msra.mxu0 %v1369
    %1853 = vmatprep.subr.mxu0 0.0
    %1854 = vmatpush1.msra.mxu0 %v1368
    %1855 = vmatprep.subr.mxu0 0.0
    %1856 = vmatpush1.msra.mxu0 %v1367
    %1857 = vmatprep.subr.mxu0 0.0
    %1858 = vmatpush1.msra.mxu0 %v1366
    %1859 = vmatprep.subr.mxu0 0.0
    %1860 = vmatpush1.msra.mxu0 %v1365
    %1861 = vmatprep.subr.mxu0 0.0
    %1862 = vmatpush1.msra.mxu0 %v1364
    %1863 = vmatprep.subr.mxu0 0.0
    %1864 = vmatpush1.msra.mxu0 %v1363
    %1865 = vmatprep.subr.mxu0 0.0
    %1866 = vmatpush2.msra.mxu0 0.0
    %1867 = vmatprep.subr.mxu0 0.0
    %1868 = vmatpush2.msra.mxu0 0.0
    %1869 = vmatprep.subr.mxu0 0.0
    %1870 = vmatpush2.msra.mxu0 0.0
    %1871 = vmatprep.subr.mxu0 0.0
    %1872 = vmatpush2.msra.mxu0 0.0
    %1873 = vmatprep.subr.mxu0 0.0
    %1874 = vmatpush2.msra.mxu0 0.0
    %1875 = vmatprep.subr.mxu0 0.0
    %1876 = vmatpush2.msra.mxu0 0.0
    %1877 = vmatprep.subr.mxu0 0.0
    %1878 = vmatpush2.msra.mxu0 0.0
    %1879 = vmatprep.subr.mxu0 0.0
    %1880 = vmatpush2.msra.mxu0 0.0
    %1881 = vmatprep.subr.mxu0 0.0
    %1882 = vmatpush2.msra.mxu0 0.0
    %1883 = vmatprep.subr.mxu0 0.0
    %1884 = vmatpush2.msra.mxu0 0.0
    %1885 = vmatprep.subr.mxu0 0.0
    %1886 = vmatpush2.msra.mxu0 0.0
    %1887 = vmatprep.subr.mxu0 0.0
    %1888 = vmatpush2.msra.mxu0 0.0
    %1889 = vmatprep.subr.mxu0 0.0
    %1890 = vmatpush2.msra.mxu0 0.0
    %1891 = vmatprep.subr.mxu0 0.0
    %1892 = vmatpush2.msra.mxu0 0.0
    %1893 = vmatprep.subr.mxu0 0.0
    %1894 = vmatpush2.msra.mxu0 0.0
    %1895 = vmatprep.subr.mxu0 0.0
    %1896 = vmatpush2.msra.mxu0 0.0
    %1897 = vmatprep.mubr.f32.mxu0 0.0
    %1898 = vmatmul.mubr.f32.gmra.mxu0 %v1831
    %v1899 = vpop.f32.mrf.mxu0
    %v1900 = vadd.f32 0.0, %v1899
    %v1901 = vpop.f32.mrf.mxu0
    %1902 = vdwg.mxu0
    %v1903 = vrcp.pop %v1900
    %v1904 = vmul.f32 %v1829, %v1903
    %s1905 = scalar_lea.vmem [#allocation31], 8
    %1906 = vst.msk [vmem:[%s1905] sm:$0xff] %vm1519, %v1904
    %1915 = vrot.lane.b32.xlu0 %v1715, 96
    %v1916 = vpop.permute.xlu0 %1915
    %1917 = vrot.lane.b32.xlu0 %v1716, 96
    %v1918 = vpop.permute.xlu0 %1917
    %1919 = vrot.lane.b32.xlu0 %v1717, 96
    %v1920 = vpop.permute.xlu0 %1919
    %1921 = vrot.lane.b32.xlu0 %v1718, 96
    %v1922 = vpop.permute.xlu0 %1921
    %1923 = vrot.lane.b32.xlu0 %v1719, 96
    %v1924 = vpop.permute.xlu0 %1923
    %1925 = vrot.lane.b32.xlu0 %v1720, 96
    %v1926 = vpop.permute.xlu0 %1925
    %1927 = vrot.lane.b32.xlu0 %v1721, 96
    %v1928 = vpop.permute.xlu0 %1927
    %1929 = vrot.lane.b32.xlu0 %v1722, 96
    %v1930 = vpop.permute.xlu0 %1929
    %v1940 = vsel %vm1519, %v1904, 0
    %1942 = vmatprep.subr.mxu0 0.0
    %1943 = vmatpush1.msra.mxu0 0.0
    %1944 = vmatprep.subr.mxu0 0.0
    %1945 = vmatpush1.msra.mxu0 0.0
    %1946 = vmatprep.subr.mxu0 0.0
    %1947 = vmatpush1.msra.mxu0 0.0
    %1948 = vmatprep.subr.mxu0 0.0
    %1949 = vmatpush1.msra.mxu0 0.0
    %1950 = vmatprep.subr.mxu0 0.0
    %1951 = vmatpush1.msra.mxu0 0.0
    %1952 = vmatprep.subr.mxu0 0.0
    %1953 = vmatpush1.msra.mxu0 0.0
    %1954 = vmatprep.subr.mxu0 0.0
    %1955 = vmatpush1.msra.mxu0 0.0
    %1956 = vmatprep.subr.mxu0 0.0
    %1957 = vmatpush1.msra.mxu0 0.0
    %1958 = vmatprep.subr.mxu0 0.0
    %1959 = vmatpush1.msra.mxu0 %v1930
    %1960 = vmatprep.subr.mxu0 0.0
    %1961 = vmatpush1.msra.mxu0 %v1928
    %1962 = vmatprep.subr.mxu0 0.0
    %1963 = vmatpush1.msra.mxu0 %v1926
    %1964 = vmatprep.subr.mxu0 0.0
    %1965 = vmatpush1.msra.mxu0 %v1924
    %1966 = vmatprep.subr.mxu0 0.0
    %1967 = vmatpush1.msra.mxu0 %v1922
    %1968 = vmatprep.subr.mxu0 0.0
    %1969 = vmatpush1.msra.mxu0 %v1920
    %1970 = vmatprep.subr.mxu0 0.0
    %1971 = vmatpush1.msra.mxu0 %v1918
    %1972 = vmatprep.subr.mxu0 0.0
    %1973 = vmatpush1.msra.mxu0 %v1916
    %1974 = vmatprep.subr.mxu0 0.0
    %1975 = vmatpush2.msra.mxu0 0.0
    %1976 = vmatprep.subr.mxu0 0.0
    %1977 = vmatpush2.msra.mxu0 0.0
    %1978 = vmatprep.subr.mxu0 0.0
    %1979 = vmatpush2.msra.mxu0 0.0
    %1980 = vmatprep.subr.mxu0 0.0
    %1981 = vmatpush2.msra.mxu0 0.0
    %1982 = vmatprep.subr.mxu0 0.0
    %1983 = vmatpush2.msra.mxu0 0.0
    %1984 = vmatprep.subr.mxu0 0.0
    %1985 = vmatpush2.msra.mxu0 0.0
    %1986 = vmatprep.subr.mxu0 0.0
    %1987 = vmatpush2.msra.mxu0 0.0
    %1988 = vmatprep.subr.mxu0 0.0
    %1989 = vmatpush2.msra.mxu0 0.0
    %1990 = vmatprep.subr.mxu0 0.0
    %1991 = vmatpush2.msra.mxu0 0.0
    %1992 = vmatprep.subr.mxu0 0.0
    %1993 = vmatpush2.msra.mxu0 0.0
    %1994 = vmatprep.subr.mxu0 0.0
    %1995 = vmatpush2.msra.mxu0 0.0
    %1996 = vmatprep.subr.mxu0 0.0
    %1997 = vmatpush2.msra.mxu0 0.0
    %1998 = vmatprep.subr.mxu0 0.0
    %1999 = vmatpush2.msra.mxu0 0.0
    %2000 = vmatprep.subr.mxu0 0.0
    %2001 = vmatpush2.msra.mxu0 0.0
    %2002 = vmatprep.subr.mxu0 0.0
    %2003 = vmatpush2.msra.mxu0 0.0
    %2004 = vmatprep.subr.mxu0 0.0
    %2005 = vmatpush2.msra.mxu0 0.0
    %2006 = vmatprep.mubr.f32.mxu0 0.0
    %2007 = vmatmul.mubr.f32.gmra.mxu0 %v1940
    %v2008 = vpop.f32.mrf.mxu0
    %v2009 = vadd.f32 0.0, %v2008
    %v2010 = vpop.f32.mrf.mxu0
    %2011 = vdwg.mxu0
    %v2012 = vld [vmem:[#allocation17] sm:$0xff]
    %v2013 = vld [vmem:[#allocation17 + $0x8] sm:$0xff]
    %v2014 = vld [vmem:[#allocation17 + $0x10] sm:$0xff]
    %v2015 = vld [vmem:[#allocation17 + $0x18] sm:$0xff]
    %v2016 = vld [vmem:[#allocation19] sm:$0x1]
    %v2018 = vlaneseq
    %v2019 = vshrl.u32 %v2018, 7
    %v2020 = vsub.s32 0, %v2019
    %v2021 = vrot.slane %v2016, %v2020
    %v2024 = vsel %vm291, %v1704, 0
    %v2027 = vsel %vm291, %v2009, 0
    %2029 = vmatprep.subr.mxu0 0.0
    %2030 = vmatpush1.msra.mxu0 0.0
    %2031 = vmatprep.subr.mxu0 0.0
    %2032 = vmatpush1.msra.mxu0 0.0
    %2033 = vmatprep.subr.mxu0 0.0
    %2034 = vmatpush1.msra.mxu0 0.0
    %2035 = vmatprep.subr.mxu0 0.0
    %2036 = vmatpush1.msra.mxu0 0.0
    %2037 = vmatprep.subr.mxu0 0.0
    %2038 = vmatpush1.msra.mxu0 0.0
    %2039 = vmatprep.subr.mxu0 0.0
    %2040 = vmatpush1.msra.mxu0 0.0
    %2041 = vmatprep.subr.mxu0 0.0
    %2042 = vmatpush1.msra.mxu0 0.0
    %2043 = vmatprep.subr.mxu0 0.0
    %2044 = vmatpush1.msra.mxu0 0.0
    %2045 = vmatprep.subr.mxu0 0.0
    %2046 = vmatpush1.msra.mxu0 0.0
    %2047 = vmatprep.subr.mxu0 0.0
    %2048 = vmatpush1.msra.mxu0 0.0
    %2049 = vmatprep.subr.mxu0 0.0
    %2050 = vmatpush1.msra.mxu0 0.0
    %2051 = vmatprep.subr.mxu0 0.0
    %2052 = vmatpush1.msra.mxu0 0.0
    %2053 = vmatprep.subr.mxu0 0.0
    %2054 = vmatpush1.msra.mxu0 %v2015
    %2055 = vmatprep.subr.mxu0 0.0
    %2056 = vmatpush1.msra.mxu0 %v2014
    %2057 = vmatprep.subr.mxu0 0.0
    %2058 = vmatpush1.msra.mxu0 %v2013
    %2059 = vmatprep.subr.mxu0 0.0
    %2060 = vmatpush1.msra.mxu0 %v2012
    %2061 = vmatprep.subr.mxu0 0.0
    %2062 = vmatpush2.msra.mxu0 0.0
    %2063 = vmatprep.subr.mxu0 0.0
    %2064 = vmatpush2.msra.mxu0 0.0
    %2065 = vmatprep.subr.mxu0 0.0
    %2066 = vmatpush2.msra.mxu0 0.0
    %2067 = vmatprep.subr.mxu0 0.0
    %2068 = vmatpush2.msra.mxu0 0.0
    %2069 = vmatprep.subr.mxu0 0.0
    %2070 = vmatpush2.msra.mxu0 0.0
    %2071 = vmatprep.subr.mxu0 0.0
    %2072 = vmatpush2.msra.mxu0 0.0
    %2073 = vmatprep.subr.mxu0 0.0
    %2074 = vmatpush2.msra.mxu0 0.0
    %2075 = vmatprep.subr.mxu0 0.0
    %2076 = vmatpush2.msra.mxu0 0.0
    %2077 = vmatprep.subr.mxu0 0.0
    %2078 = vmatpush2.msra.mxu0 0.0
    %2079 = vmatprep.subr.mxu0 0.0
    %2080 = vmatpush2.msra.mxu0 0.0
    %2081 = vmatprep.subr.mxu0 0.0
    %2082 = vmatpush2.msra.mxu0 0.0
    %2083 = vmatprep.subr.mxu0 0.0
    %2084 = vmatpush2.msra.mxu0 0.0
    %2085 = vmatprep.subr.mxu0 0.0
    %2086 = vmatpush2.msra.mxu0 0.0
    %2087 = vmatprep.subr.mxu0 0.0
    %2088 = vmatpush2.msra.mxu0 0.0
    %2089 = vmatprep.subr.mxu0 0.0
    %2090 = vmatpush2.msra.mxu0 0.0
    %2091 = vmatprep.subr.mxu0 0.0
    %2092 = vmatpush2.msra.mxu0 0.0
    %2093 = vmatprep.mubr.f32.mxu0 0.0
    %2094 = vmatmul.mubr.f32.gmra.mxu0 %v2024
    %v2095 = vpop.f32.mrf.mxu0
    %v2096 = vadd.f32 %v2021, %v2095
    %v2097 = vpop.f32.mrf.mxu0
    %2098 = vmatprep.mubr.f32.mxu0 0.0
    %2099 = vmatmul.mubr.f32.gmra.mxu0 %v2027
    %v2100 = vpop.f32.mrf.mxu0
    %v2101 = vadd.f32 %v2021, %v2100
    %v2102 = vpop.f32.mrf.mxu0
    %2103 = vdwg.mxu0
    %v2104 = vadd.f32 %v1107, %v2096
    %v2105 = vadd.f32 %v1108, %v2101
    %s2106 = scalar_lea.vmem [#allocation25], 4
    %v2107 = vld [vmem:[%s2106] sm:$0x1]
    %s2108 = scalar_lea.vmem [#allocation25], 5
    %v2109 = vld [vmem:[%s2108] sm:$0x1]
    %v2110 = vsel %vm291, %v2104, 0.0
    %2111 = vadd.xlane.f32.xlu0 %v2110
    %v2112 = vpop.xlane.xlu0 %2111
    %v2113 = vsel %vm291, %v2105, 0.0
    %2114 = vadd.xlane.f32.xlu0 %v2113
    %v2115 = vpop.xlane.xlu0 %2114
    %v2116 = vmul.f32 %v2112, %v298
    %v2117 = vmul.f32 %v2115, %v298
    %v2118 = vsub.f32 %v2104, %v2116
    %v2119 = vsub.f32 %v2105, %v2117
    %v2120 = vmul.f32 %v2118, %v2118
    %v2121 = vmul.f32 %v2119, %v2119
    %v2122 = vsel %vm291, %v2120, 0.0
    %2123 = vadd.xlane.f32.xlu0 %v2122
    %v2124 = vpop.xlane.xlu0 %2123
    %v2125 = vsel %vm291, %v2121, 0.0
    %2126 = vadd.xlane.f32.xlu0 %v2125
    %v2127 = vpop.xlane.xlu0 %2126
    %v2128 = vmul.f32 %v2124, %v298
    %v2129 = vmul.f32 %v2127, %v298
    %v2130 = vadd.f32 %v2128, 1e-06
    %v2131 = vadd.f32 %v2129, 1e-06
    %v2132 = vrsqrt.pop %v2130
    %v2133 = vrsqrt.pop %v2131
    %v2134 = vmul.f32 %v2118, %v2132
    %v2135 = vmul.f32 %v2119, %v2133
    %v2137 = vlaneseq
    %v2138 = vshrl.u32 %v2137, 7
    %v2139 = vsub.s32 0, %v2138
    %v2140 = vrot.slane %v2107, %v2139
    %v2142 = vmul.f32 %v2134, %v2140
    %v2143 = vmul.f32 %v2135, %v2140
    %v2145 = vlaneseq
    %v2146 = vshrl.u32 %v2145, 7
    %v2147 = vsub.s32 0, %v2146
    %v2148 = vrot.slane %v2109, %v2147
    %v2150 = vadd.f32 %v2142, %v2148
    %v2151 = vadd.f32 %v2143, %v2148
    %v2152 = vld [vmem:[#allocation20] sm:$0xff]
    %v2153 = vld [vmem:[#allocation20 + $0x8] sm:$0xff]
    %v2154 = vld [vmem:[#allocation20 + $0x10] sm:$0xff]
    %v2155 = vld [vmem:[#allocation20 + $0x18] sm:$0xff]
    %v2156 = vld [vmem:[#allocation22] sm:$0x1]
    %v2158 = vlaneseq
    %v2159 = vshrl.u32 %v2158, 7
    %v2160 = vsub.s32 0, %v2159
    %v2161 = vrot.slane %v2156, %v2160
    %v2164 = vsel %vm291, %v2150, 0
    %v2167 = vsel %vm291, %v2151, 0
    %2169 = vmatprep.subr.mxu0 0.0
    %2170 = vmatpush1.msra.mxu0 0.0
    %2171 = vmatprep.subr.mxu0 0.0
    %2172 = vmatpush1.msra.mxu0 0.0
    %2173 = vmatprep.subr.mxu0 0.0
    %2174 = vmatpush1.msra.mxu0 0.0
    %2175 = vmatprep.subr.mxu0 0.0
    %2176 = vmatpush1.msra.mxu0 0.0
    %2177 = vmatprep.subr.mxu0 0.0
    %2178 = vmatpush1.msra.mxu0 0.0
    %2179 = vmatprep.subr.mxu0 0.0
    %2180 = vmatpush1.msra.mxu0 0.0
    %2181 = vmatprep.subr.mxu0 0.0
    %2182 = vmatpush1.msra.mxu0 0.0
    %2183 = vmatprep.subr.mxu0 0.0
    %2184 = vmatpush1.msra.mxu0 0.0
    %2185 = vmatprep.subr.mxu0 0.0
    %2186 = vmatpush1.msra.mxu0 0.0
    %2187 = vmatprep.subr.mxu0 0.0
    %2188 = vmatpush1.msra.mxu0 0.0
    %2189 = vmatprep.subr.mxu0 0.0
    %2190 = vmatpush1.msra.mxu0 0.0
    %2191 = vmatprep.subr.mxu0 0.0
    %2192 = vmatpush1.msra.mxu0 0.0
    %2193 = vmatprep.subr.mxu0 0.0
    %2194 = vmatpush1.msra.mxu0 %v2155
    %2195 = vmatprep.subr.mxu0 0.0
    %2196 = vmatpush1.msra.mxu0 %v2154
    %2197 = vmatprep.subr.mxu0 0.0
    %2198 = vmatpush1.msra.mxu0 %v2153
    %2199 = vmatprep.subr.mxu0 0.0
    %2200 = vmatpush1.msra.mxu0 %v2152
    %2201 = vmatprep.subr.mxu0 0.0
    %2202 = vmatpush2.msra.mxu0 0.0
    %2203 = vmatprep.subr.mxu0 0.0
    %2204 = vmatpush2.msra.mxu0 0.0
    %2205 = vmatprep.subr.mxu0 0.0
    %2206 = vmatpush2.msra.mxu0 0.0
    %2207 = vmatprep.subr.mxu0 0.0
    %2208 = vmatpush2.msra.mxu0 0.0
    %2209 = vmatprep.subr.mxu0 0.0
    %2210 = vmatpush2.msra.mxu0 0.0
    %2211 = vmatprep.subr.mxu0 0.0
    %2212 = vmatpush2.msra.mxu0 0.0
    %2213 = vmatprep.subr.mxu0 0.0
    %2214 = vmatpush2.msra.mxu0 0.0
    %2215 = vmatprep.subr.mxu0 0.0
    %2216 = vmatpush2.msra.mxu0 0.0
    %2217 = vmatprep.subr.mxu0 0.0
    %2218 = vmatpush2.msra.mxu0 0.0
    %2219 = vmatprep.subr.mxu0 0.0
    %2220 = vmatpush2.msra.mxu0 0.0
    %2221 = vmatprep.subr.mxu0 0.0
    %2222 = vmatpush2.msra.mxu0 0.0
    %2223 = vmatprep.subr.mxu0 0.0
    %2224 = vmatpush2.msra.mxu0 0.0
    %2225 = vmatprep.subr.mxu0 0.0
    %2226 = vmatpush2.msra.mxu0 0.0
    %2227 = vmatprep.subr.mxu0 0.0
    %2228 = vmatpush2.msra.mxu0 0.0
    %2229 = vmatprep.subr.mxu0 0.0
    %2230 = vmatpush2.msra.mxu0 0.0
    %2231 = vmatprep.subr.mxu0 0.0
    %2232 = vmatpush2.msra.mxu0 0.0
    %2233 = vmatprep.mubr.f32.mxu0 0.0
    %2234 = vmatmul.mubr.f32.gmra.mxu0 %v2164
    %v2235 = vpop.f32.mrf.mxu0
    %v2236 = vadd.f32 %v2161, %v2235
    %v2237 = vpop.f32.mrf.mxu0
    %2238 = vmatprep.mubr.f32.mxu0 0.0
    %2239 = vmatmul.mubr.f32.gmra.mxu0 %v2167
    %v2240 = vpop.f32.mrf.mxu0
    %v2241 = vadd.f32 %v2161, %v2240
    %v2242 = vpop.f32.mrf.mxu0
    %2243 = vdwg.mxu0
    %v2244 = vmax.f32 %v2236, 0.0
    %v2245 = vmax.f32 %v2241, 0.0
    %v2246 = vld [vmem:[%s16] sm:$0xff]
    %v2247 = vld [vmem:[%s16 + $0x8] sm:$0xff]
    %v2248 = vld [vmem:[%s16 + $0x10] sm:$0xff]
    %v2249 = vld [vmem:[%s16 + $0x18] sm:$0xff]
    %v2250 = vld [vmem:[%s16 + $0x20] sm:$0xff]
    %v2251 = vld [vmem:[%s16 + $0x28] sm:$0xff]
    %v2252 = vld [vmem:[%s16 + $0x30] sm:$0xff]
    %v2253 = vld [vmem:[%s16 + $0x38] sm:$0xff]
    %v2254 = vld [vmem:[#allocation23] sm:$0x1]
    %v2256 = vlaneseq
    %v2257 = vshrl.u32 %v2256, 7
    %v2258 = vsub.s32 0, %v2257
    %v2259 = vrot.slane %v2254, %v2258
    %v2262 = vsel %vm1519, %v2244, 0
    %v2265 = vsel %vm1519, %v2245, 0
    %2267 = vmatprep.subr.mxu0 0.0
    %2268 = vmatpush1.msra.mxu0 0.0
    %2269 = vmatprep.subr.mxu0 0.0
    %2270 = vmatpush1.msra.mxu0 0.0
    %2271 = vmatprep.subr.mxu0 0.0
    %2272 = vmatpush1.msra.mxu0 0.0
    %2273 = vmatprep.subr.mxu0 0.0
    %2274 = vmatpush1.msra.mxu0 0.0
    %2275 = vmatprep.subr.mxu0 0.0
    %2276 = vmatpush1.msra.mxu0 0.0
    %2277 = vmatprep.subr.mxu0 0.0
    %2278 = vmatpush1.msra.mxu0 0.0
    %2279 = vmatprep.subr.mxu0 0.0
    %2280 = vmatpush1.msra.mxu0 0.0
    %2281 = vmatprep.subr.mxu0 0.0
    %2282 = vmatpush1.msra.mxu0 0.0
    %2283 = vmatprep.subr.mxu0 0.0
    %2284 = vmatpush1.msra.mxu0 %v2253
    %2285 = vmatprep.subr.mxu0 0.0
    %2286 = vmatpush1.msra.mxu0 %v2252
    %2287 = vmatprep.subr.mxu0 0.0
    %2288 = vmatpush1.msra.mxu0 %v2251
    %2289 = vmatprep.subr.mxu0 0.0
    %2290 = vmatpush1.msra.mxu0 %v2250
    %2291 = vmatprep.subr.mxu0 0.0
    %2292 = vmatpush1.msra.mxu0 %v2249
    %2293 = vmatprep.subr.mxu0 0.0
    %2294 = vmatpush1.msra.mxu0 %v2248
    %2295 = vmatprep.subr.mxu0 0.0
    %2296 = vmatpush1.msra.mxu0 %v2247
    %2297 = vmatprep.subr.mxu0 0.0
    %2298 = vmatpush1.msra.mxu0 %v2246
    %2299 = vmatprep.subr.mxu0 0.0
    %2300 = vmatpush2.msra.mxu0 0.0
    %2301 = vmatprep.subr.mxu0 0.0
    %2302 = vmatpush2.msra.mxu0 0.0
    %2303 = vmatprep.subr.mxu0 0.0
    %2304 = vmatpush2.msra.mxu0 0.0
    %2305 = vmatprep.subr.mxu0 0.0
    %2306 = vmatpush2.msra.mxu0 0.0
    %2307 = vmatprep.subr.mxu0 0.0
    %2308 = vmatpush2.msra.mxu0 0.0
    %2309 = vmatprep.subr.mxu0 0.0
    %2310 = vmatpush2.msra.mxu0 0.0
    %2311 = vmatprep.subr.mxu0 0.0
    %2312 = vmatpush2.msra.mxu0 0.0
    %2313 = vmatprep.subr.mxu0 0.0
    %2314 = vmatpush2.msra.mxu0 0.0
    %2315 = vmatprep.subr.mxu0 0.0
    %2316 = vmatpush2.msra.mxu0 0.0
    %2317 = vmatprep.subr.mxu0 0.0
    %2318 = vmatpush2.msra.mxu0 0.0
    %2319 = vmatprep.subr.mxu0 0.0
    %2320 = vmatpush2.msra.mxu0 0.0
    %2321 = vmatprep.subr.mxu0 0.0
    %2322 = vmatpush2.msra.mxu0 0.0
    %2323 = vmatprep.subr.mxu0 0.0
    %2324 = vmatpush2.msra.mxu0 0.0
    %2325 = vmatprep.subr.mxu0 0.0
    %2326 = vmatpush2.msra.mxu0 0.0
    %2327 = vmatprep.subr.mxu0 0.0
    %2328 = vmatpush2.msra.mxu0 0.0
    %2329 = vmatprep.subr.mxu0 0.0
    %2330 = vmatpush2.msra.mxu0 0.0
    %2331 = vmatprep.mubr.f32.mxu0 0.0
    %2332 = vmatmul.mubr.f32.gmra.mxu0 %v2262
    %v2333 = vpop.f32.mrf.mxu0
    %v2334 = vadd.f32 %v2259, %v2333
    %v2335 = vpop.f32.mrf.mxu0
    %2336 = vmatprep.mubr.f32.mxu0 0.0
    %2337 = vmatmul.mubr.f32.gmra.mxu0 %v2265
    %v2338 = vpop.f32.mrf.mxu0
    %v2339 = vadd.f32 %v2259, %v2338
    %v2340 = vpop.f32.mrf.mxu0
    %2341 = vdwg.mxu0
    %v2342 = vadd.f32 %v2104, %v2334
    %v2343 = vadd.f32 %v2105, %v2339
    %2344 = vst.msk [vmem:[#allocation28] sm:$0xff] %vm291, %v2342
    %2345 = vst.msk [vmem:[#allocation28 + $0x8] sm:$0xff] %vm291, %v2343
    // Predicated region
    $region158: #{tpu_custom_call.1} parent=1 // pred_check
      _
    $region159: #{tpu_custom_call.1} parent=1 // pred_check_branch
      %2347 = sbr.rel (0) target = $region161
    $region160: #{tpu_custom_call.1} parent=1 // pred_region
      %s2349 = ssub.s32 256, 256
      %2350 = vsyncadd [#allocation4], %s2349
      %s2351 = sshll.u32 [#allocation28], 4
      %s2352 = int_to_ptr.vmem [resolvable:$true] %s2351
      %2357 = dma.vmem_to_hbm [thread:$0]  %s2352, 256, %s23, [#allocation4], 128, 128, 8
    $region161: #{tpu_custom_call.1} parent=1 // pred_fallthru
      _
    // Predicated region
    $region162: #{tpu_custom_call.1} parent=1 // pred_check
      _
    $region163: #{tpu_custom_call.1} parent=1 // pred_check_branch
      %2359 = sbr.rel (0) target = $region165
    $region164: #{tpu_custom_call.1} parent=1 // pred_region
      %s2361 = ssub.s32 256, 256
      %2362 = vsyncadd [#allocation30], %s2361
      %s2363 = sshll.u32 [#allocation29], 4
      %s2364 = int_to_ptr.vmem [resolvable:$true] %s2363
      %2369 = dma.vmem_to_hbm [thread:$0]  %s2364, 256, %s24, [#allocation30], 128, 128, 8
    $region165: #{tpu_custom_call.1} parent=1 // pred_fallthru
      _
    // Predicated region
    $region166: #{tpu_custom_call.1} parent=1 // pred_check
      _
    $region167: #{tpu_custom_call.1} parent=1 // pred_check_branch
      %2371 = sbr.rel (0) target = $region169
    $region168: #{tpu_custom_call.1} parent=1 // pred_region
      %s2373 = ssub.s32 256, 256
      %2374 = vsyncadd [#allocation30], %s2373
      %s2375 = sshll.u32 [#allocation31], 4
      %s2376 = int_to_ptr.vmem [resolvable:$true] %s2375
      %2381 = dma.vmem_to_hbm [thread:$0]  %s2376, 256, %s25, [#allocation30], 128, 128, 8
    $region169: #{tpu_custom_call.1} parent=1 // pred_fallthru
      _
    // Predicated region
    $region170: #{tpu_custom_call.1} parent=1 // pred_check
      _
    $region171: #{tpu_custom_call.1} parent=1 // pred_check_branch
      %2383 = sbr.rel (0) target = $region173
    $region172: #{tpu_custom_call.1} parent=1 // pred_region
      %2384 = dma.done [#allocation4], 256
    $region173: #{tpu_custom_call.1} parent=1 // pred_fallthru
      _
    // Predicated region
    $region174: #{tpu_custom_call.1} parent=1 // pred_check
      _
    $region175: #{tpu_custom_call.1} parent=1 // pred_check_branch
      %2386 = sbr.rel (0) target = $region177
    $region176: #{tpu_custom_call.1} parent=1 // pred_region
      %2387 = dma.done [#allocation30], 256
    $region177: #{tpu_custom_call.1} parent=1 // pred_fallthru
      _
    // Predicated region
    $region178: #{tpu_custom_call.1} parent=1 // pred_check
      _
    $region179: #{tpu_custom_call.1} parent=1 // pred_check_branch
      %2389 = sbr.rel (0) target = $region181
    $region180: #{tpu_custom_call.1} parent=1 // pred_region
      %2390 = dma.done [#allocation30], 256
    $region181: #{tpu_custom_call.1} parent=1 // pred_fallthru
      _
    %2391 = vsyncpa [#allocation3], 1
    %2392 = vsyncpa [#allocation6], 1
    %2393 = vsyncpa [#allocation9], 1
    %2394 = vsyncpa [#allocation12], 1
    %2395 = vsyncpa [#allocation15], 1
    %2396 = vsyncpa [#allocation18], 1
    %2397 = vsyncpa [#allocation21], 1
    %2398 = vsyncpa [#allocation24], 1
    %2399 = vsyncpa [#allocation27], 1
    %2400 = vsyncpa [#allocation4], 1
    %2401 = vsyncpa [#allocation30], 1

</llo_original>
